<compile_context>
chip_gen: v7x
topology: tpu7x:2x2x1
jax: 0.10.0
libtpu: 0.0.40
codegen_flags: <defaults>
</compile_context>

<pallas_src>
import jax
import jax.numpy as jnp
from jax.experimental import pallas as pl
from jax.experimental.pallas import tpu as pltpu

IN_DIM = 784
OUT_DIM = 10
OUT_PAD = 128          # lane-dense output width (multiple of 128)
TILE_B_MAX = 2048      # ~25 MB VMEM incl. double buffering -> safe on v7x too


def _round_up(n, m):
    return ((n + m - 1) // m) * m


def _vmem_limit_bytes():
    """Per-generation scoped-VMEM budget: v5e/v6e have 128 MiB physical,
    v7x has 64 MiB per TensorCore. Leave headroom for compiler scratch."""
    try:
        cap = getattr(pltpu.get_tpu_info(), "vmem_capacity_bytes",
                      64 * 1024 * 1024)
    except Exception:
        cap = 64 * 1024 * 1024
    if cap >= 100 * 1024 * 1024:      # v5e / v6e (128 MiB)
        return 96 * 1024 * 1024
    return 52 * 1024 * 1024           # v7x-sized VMEM (64 MiB)


def _choose_tile_b(batch, tile_b_max):
    """Sublane-aligned batch tile; ensure >= 2 grid steps when possible so
    both v7x TensorCores get work and the DMA pipeline has overlap."""
    b8 = _round_up(max(batch, 1), 8)
    if b8 <= 8:
        return 8
    tile = min(_round_up(tile_b_max, 8), _round_up(pl.cdiv(b8, 2), 8))
    return max(tile, 8)


def mlp_kernel(x_ref,
               w1_ref, b1_ref,
               w2_ref, b2_ref,
               w3_ref, b3_ref,
               w4_ref, b4_ref,
               w5_ref, b5_ref,
               o_ref):
    # fc1 + ReLU (bf16 operands straight from VMEM, f32 accumulate).
    # Dropout = identity (eval mode).
    h = jnp.dot(x_ref[...], w1_ref[...], preferred_element_type=jnp.float32)
    h = jnp.maximum(h + b1_ref[...], 0.0)
    # TODO(synk): training-mode dropout (p=0.5) would use pltpu.prng_seed + prng_random_bits.

    # fc2 + ReLU
    h = jnp.dot(h.astype(jnp.bfloat16), w2_ref[...],
                preferred_element_type=jnp.float32)
    h = jnp.maximum(h + b2_ref[...], 0.0)

    # fc3 + ReLU (kept on MXU; padding cost is a single pass per layer)
    h = jnp.dot(h.astype(jnp.bfloat16), w3_ref[...],
                preferred_element_type=jnp.float32)
    h = jnp.maximum(h + b3_ref[...], 0.0)

    # fc4 + ReLU
    h = jnp.dot(h.astype(jnp.bfloat16), w4_ref[...],
                preferred_element_type=jnp.float32)
    h = jnp.maximum(h + b4_ref[...], 0.0)

    # fc5 (no activation), output lanes padded to 128 (cols >= 10 are zeros)
    o = jnp.dot(h.astype(jnp.bfloat16), w5_ref[...],
                preferred_element_type=jnp.float32) + b5_ref[...]
    o_ref[...] = o.astype(o_ref.dtype)


def prepare_params(params):
    """One-time (hoisted) weight prep: bf16 weights, f32 biases, fc5 padded
    to a lane-dense 128-wide output. Call once at init, NOT per forward."""
    (w1, b1), (w2, b2), (w3, b3), (w4, b4), (w5, b5) = params
    w5p = jnp.zeros((w5.shape[0], OUT_PAD), w5.dtype).at[:, :OUT_DIM].set(w5)
    b5p = jnp.zeros((1, OUT_PAD), b5.dtype).at[:, :OUT_DIM].set(b5)
    weights = [w1, w2, w3, w4, w5p]
    biases = [b1, b2, b3, b4, b5p]
    return [(w.astype(jnp.bfloat16), b.astype(jnp.float32))
            for w, b in zip(weights, biases)]


def mlp_forward(x, prepared_params, tile_b_max=None, out_dtype=jnp.float32):
    """x: (B, 784). prepared_params: output of prepare_params()."""
    B, D = x.shape
    assert D == IN_DIM
    if tile_b_max is None:
        tile_b_max = TILE_B_MAX

    tile_b = _choose_tile_b(B, tile_b_max)
    b_pad = _round_up(B, tile_b)

    # x is the dominant HBM stream: feed the kernel bf16 (if x is already
    # produced upstream in bf16 this cast is a no-op).
    x = x.astype(jnp.bfloat16)
    if b_pad != B:
        x = jnp.pad(x, ((0, b_pad - B), (0, 0)))

    grid = (b_pad // tile_b,)

    flat_args = [x]
    in_specs = [pl.BlockSpec((tile_b, IN_DIM), lambda i: (i, 0))]
    for w, b in prepared_params:
        flat_args.append(w)                                   # bf16, resident
        in_specs.append(pl.BlockSpec(w.shape, lambda i: (0, 0)))
        flat_args.append(b)                                   # f32, resident
        in_specs.append(pl.BlockSpec(b.shape, lambda i: (0, 0)))

    out = pl.pallas_call(
        mlp_kernel,
        out_shape=jax.ShapeDtypeStruct((b_pad, OUT_PAD), out_dtype),
        grid=grid,
        in_specs=in_specs,
        out_specs=pl.BlockSpec((tile_b, OUT_PAD), lambda i: (i, 0)),
        compiler_params=pltpu.CompilerParams(
            dimension_semantics=("parallel",),   # megacore / v7x 2-TC sharding
            vmem_limit_bytes=_vmem_limit_bytes(),
        ),
    )(*flat_args)

    return out[:B, :OUT_DIM]


def init_params(key):
    """Deterministic init matching the PyTorch module:
       weights ~ N(0, 0.1); biases keep nn.Linear default U(-1/sqrt(fan_in), 1/sqrt(fan_in))."""
    dims = [(784, 1024), (1024, 20), (20, 20), (20, 20), (20, 10)]
    params = []
    for (fan_in, fan_out) in dims:
        key, kw, kb = jax.random.split(key, 3)
        w = 0.1 * jax.random.normal(kw, (fan_in, fan_out), dtype=jnp.float32)
        bound = 1.0 / jnp.sqrt(float(fan_in))
        b = jax.random.uniform(kb, (1, fan_out), dtype=jnp.float32,
                               minval=-bound, maxval=bound)
        params.append((w, b))
    return params


def reference_forward(x, params):
    """Pure-JAX reference with the same precision policy as the kernel
       (bf16 matmul operands, f32 accumulate, f32 bias/ReLU, eval dropout)."""
    h = x
    for i, (w, b) in enumerate(params):
        h = jnp.dot(h.astype(jnp.bfloat16), w.astype(jnp.bfloat16),
                    preferred_element_type=jnp.float32) + b
        if i < len(params) - 1:
            h = jnp.maximum(h, 0.0)
    return h


if __name__ == "__main__":
    key = jax.random.PRNGKey(0)
    key, kx1, kx2 = jax.random.split(key, 3)
    params = init_params(key)
    prepped = prepare_params(params)   # one-time weight prep, off the hot path

    # --- small batch (single tile) ---
    B1 = 8
    x1 = jax.random.normal(kx1, (B1, IN_DIM), dtype=jnp.float32)
    out1 = jax.block_until_ready(mlp_forward(x1, prepped))
    ref1 = reference_forward(x1, params)
    assert out1.shape == (B1, OUT_DIM), out1.shape
    assert jnp.allclose(out1, ref1, atol=1e-2, rtol=1e-2), "mismatch vs reference (B=8)"

    # --- ragged batch with multi-tile grid (exercises padding + pipelining) ---
    B2 = 40
    x2 = jax.random.normal(kx2, (B2, IN_DIM), dtype=jnp.float32)
    out2 = jax.block_until_ready(mlp_forward(x2, prepped, tile_b_max=16))
    ref2 = reference_forward(x2, params)
    assert out2.shape == (B2, OUT_DIM), out2.shape
    assert jnp.allclose(out2, ref2, atol=1e-2, rtol=1e-2), "mismatch vs reference (B=40)"

    print("KERNEL_OK")
</pallas_src>

<mosaic_0001>
module attributes {stable_mosaic.version = 11 : i64} {
  func.func @mlp_kernel(%arg0: i32, %arg1: memref<8x784xbf16, #tpu.memory_space<vmem>>, %arg2: memref<784x1024xbf16, #tpu.memory_space<vmem>>, %arg3: memref<1x1024xf32, #tpu.memory_space<vmem>>, %arg4: memref<1024x20xbf16, #tpu.memory_space<vmem>>, %arg5: memref<1x20xf32, #tpu.memory_space<vmem>>, %arg6: memref<20x20xbf16, #tpu.memory_space<vmem>>, %arg7: memref<1x20xf32, #tpu.memory_space<vmem>>, %arg8: memref<20x20xbf16, #tpu.memory_space<vmem>>, %arg9: memref<1x20xf32, #tpu.memory_space<vmem>>, %arg10: memref<20x128xbf16, #tpu.memory_space<vmem>>, %arg11: memref<1x128xf32, #tpu.memory_space<vmem>>, %arg12: memref<8x128xf32, #tpu.memory_space<vmem>>) attributes {dimension_semantics = [#tpu.dimension_semantics<parallel>], iteration_bounds = array<i64: 1>, scalar_prefetch = 0 : i64, scratch_operands = 0 : i64, tpu.core_type = #tpu.core_type<tc>, window_params = [{transform_indices = @transform_0, window_bounds = array<i64: 8, 784>}, {pipeline_mode = #tpu.pipeline_mode<synchronous>, transform_indices = @transform_1, window_bounds = array<i64: 784, 1024>}, {pipeline_mode = #tpu.pipeline_mode<synchronous>, transform_indices = @transform_2, window_bounds = array<i64: 1, 1024>}, {pipeline_mode = #tpu.pipeline_mode<synchronous>, transform_indices = @transform_3, window_bounds = array<i64: 1024, 20>}, {pipeline_mode = #tpu.pipeline_mode<synchronous>, transform_indices = @transform_4, window_bounds = array<i64: 1, 20>}, {pipeline_mode = #tpu.pipeline_mode<synchronous>, transform_indices = @transform_5, window_bounds = array<i64: 20, 20>}, {pipeline_mode = #tpu.pipeline_mode<synchronous>, transform_indices = @transform_6, window_bounds = array<i64: 1, 20>}, {pipeline_mode = #tpu.pipeline_mode<synchronous>, transform_indices = @transform_7, window_bounds = array<i64: 20, 20>}, {pipeline_mode = #tpu.pipeline_mode<synchronous>, transform_indices = @transform_8, window_bounds = array<i64: 1, 20>}, {pipeline_mode = #tpu.pipeline_mode<synchronous>, transform_indices = @transform_9, window_bounds = array<i64: 20, 128>}, {pipeline_mode = #tpu.pipeline_mode<synchronous>, transform_indices = @transform_10, window_bounds = array<i64: 1, 128>}, {transform_indices = @transform_11, window_bounds = array<i64: 8, 128>}]} {
    %c0 = arith.constant 0 : index
    %c0_0 = arith.constant 0 : index
    %0 = vector.load %arg1[%c0, %c0_0] : memref<8x784xbf16, #tpu.memory_space<vmem>>, vector<8x784xbf16>
    %c0_1 = arith.constant 0 : index
    %c0_2 = arith.constant 0 : index
    %1 = vector.load %arg2[%c0_1, %c0_2] : memref<784x1024xbf16, #tpu.memory_space<vmem>>, vector<784x1024xbf16>
    %cst = arith.constant dense<0.000000e+00> : vector<8x1024xf32>
    %2 = tpu.matmul %0, %1, %cst {dimension_numbers = #tpu.dot_dimension_numbers<[1], [0], [0], [1], [0, 0, 1, 1], [], []>} : vector<8x784xbf16>, vector<784x1024xbf16>, vector<8x1024xf32> -> vector<8x1024xf32>
    %c0_3 = arith.constant 0 : index
    %c0_4 = arith.constant 0 : index
    %3 = vector.load %arg3[%c0_3, %c0_4] : memref<1x1024xf32, #tpu.memory_space<vmem>>, vector<1x1024xf32>
    %4 = vector.broadcast %3 : vector<1x1024xf32> to vector<8x1024xf32>
    %5 = arith.addf %2, %4 : vector<8x1024xf32>
    %cst_5 = arith.constant 0.000000e+00 : f32
    %6 = vector.broadcast %cst_5 : f32 to vector<8x1024xf32>
    %7 = arith.maximumf %5, %6 : vector<8x1024xf32>
    %8 = arith.truncf %7 : vector<8x1024xf32> to vector<8x1024xbf16>
    %c0_6 = arith.constant 0 : index
    %c0_7 = arith.constant 0 : index
    %9 = vector.load %arg4[%c0_6, %c0_7] : memref<1024x20xbf16, #tpu.memory_space<vmem>>, vector<1024x20xbf16>
    %cst_8 = arith.constant dense<0.000000e+00> : vector<8x20xf32>
    %10 = tpu.matmul %8, %9, %cst_8 {dimension_numbers = #tpu.dot_dimension_numbers<[1], [0], [0], [1], [0, 0, 1, 1], [], []>} : vector<8x1024xbf16>, vector<1024x20xbf16>, vector<8x20xf32> -> vector<8x20xf32>
    %c0_9 = arith.constant 0 : index
    %c0_10 = arith.constant 0 : index
    %11 = vector.load %arg5[%c0_9, %c0_10] : memref<1x20xf32, #tpu.memory_space<vmem>>, vector<1x20xf32>
    %12 = vector.broadcast %11 : vector<1x20xf32> to vector<8x20xf32>
    %13 = arith.addf %10, %12 : vector<8x20xf32>
    %cst_11 = arith.constant 0.000000e+00 : f32
    %14 = vector.broadcast %cst_11 : f32 to vector<8x20xf32>
    %15 = arith.maximumf %13, %14 : vector<8x20xf32>
    %16 = arith.truncf %15 : vector<8x20xf32> to vector<8x20xbf16>
    %c0_12 = arith.constant 0 : index
    %c0_13 = arith.constant 0 : index
    %17 = vector.load %arg6[%c0_12, %c0_13] : memref<20x20xbf16, #tpu.memory_space<vmem>>, vector<20x20xbf16>
    %cst_14 = arith.constant dense<0.000000e+00> : vector<8x20xf32>
    %18 = tpu.matmul %16, %17, %cst_14 {dimension_numbers = #tpu.dot_dimension_numbers<[1], [0], [0], [1], [0, 0, 1, 1], [], []>} : vector<8x20xbf16>, vector<20x20xbf16>, vector<8x20xf32> -> vector<8x20xf32>
    %c0_15 = arith.constant 0 : index
    %c0_16 = arith.constant 0 : index
    %19 = vector.load %arg7[%c0_15, %c0_16] : memref<1x20xf32, #tpu.memory_space<vmem>>, vector<1x20xf32>
    %20 = vector.broadcast %19 : vector<1x20xf32> to vector<8x20xf32>
    %21 = arith.addf %18, %20 : vector<8x20xf32>
    %cst_17 = arith.constant 0.000000e+00 : f32
    %22 = vector.broadcast %cst_17 : f32 to vector<8x20xf32>
    %23 = arith.maximumf %21, %22 : vector<8x20xf32>
    %24 = arith.truncf %23 : vector<8x20xf32> to vector<8x20xbf16>
    %c0_18 = arith.constant 0 : index
    %c0_19 = arith.constant 0 : index
    %25 = vector.load %arg8[%c0_18, %c0_19] : memref<20x20xbf16, #tpu.memory_space<vmem>>, vector<20x20xbf16>
    %cst_20 = arith.constant dense<0.000000e+00> : vector<8x20xf32>
    %26 = tpu.matmul %24, %25, %cst_20 {dimension_numbers = #tpu.dot_dimension_numbers<[1], [0], [0], [1], [0, 0, 1, 1], [], []>} : vector<8x20xbf16>, vector<20x20xbf16>, vector<8x20xf32> -> vector<8x20xf32>
    %c0_21 = arith.constant 0 : index
    %c0_22 = arith.constant 0 : index
    %27 = vector.load %arg9[%c0_21, %c0_22] : memref<1x20xf32, #tpu.memory_space<vmem>>, vector<1x20xf32>
    %28 = vector.broadcast %27 : vector<1x20xf32> to vector<8x20xf32>
    %29 = arith.addf %26, %28 : vector<8x20xf32>
    %cst_23 = arith.constant 0.000000e+00 : f32
    %30 = vector.broadcast %cst_23 : f32 to vector<8x20xf32>
    %31 = arith.maximumf %29, %30 : vector<8x20xf32>
    %32 = arith.truncf %31 : vector<8x20xf32> to vector<8x20xbf16>
    %c0_24 = arith.constant 0 : index
    %c0_25 = arith.constant 0 : index
    %33 = vector.load %arg10[%c0_24, %c0_25] : memref<20x128xbf16, #tpu.memory_space<vmem>>, vector<20x128xbf16>
    %cst_26 = arith.constant dense<0.000000e+00> : vector<8x128xf32>
    %34 = tpu.matmul %32, %33, %cst_26 {dimension_numbers = #tpu.dot_dimension_numbers<[1], [0], [0], [1], [0, 0, 1, 1], [], []>} : vector<8x20xbf16>, vector<20x128xbf16>, vector<8x128xf32> -> vector<8x128xf32>
    %c0_27 = arith.constant 0 : index
    %c0_28 = arith.constant 0 : index
    %35 = vector.load %arg11[%c0_27, %c0_28] : memref<1x128xf32, #tpu.memory_space<vmem>>, vector<1x128xf32>
    %36 = vector.broadcast %35 : vector<1x128xf32> to vector<8x128xf32>
    %37 = arith.addf %34, %36 : vector<8x128xf32>
    %c0_29 = arith.constant 0 : index
    %c0_30 = arith.constant 0 : index
    %38 = vector.load %arg12[%c0_29, %c0_30] : memref<8x128xf32, #tpu.memory_space<vmem>>, vector<8x128xf32>
    tpu.vector_store %arg12[%c0_29, %c0_30], %37 {strides = array<i32>} : memref<8x128xf32, #tpu.memory_space<vmem>>, vector<8x128xf32>,
    return
  }
  func.func @transform_0(%arg0: i32) -> (i32, i32) {
    %c0_i32 = arith.constant 0 : i32
    %c0_i32_0 = arith.constant 0 : i32
    return %arg0, %c0_i32 : i32, i32
  }
  func.func @transform_1(%arg0: i32) -> (i32, i32) {
    %c0_i32 = arith.constant 0 : i32
    %c0_i32_0 = arith.constant 0 : i32
    %c0_i32_1 = arith.constant 0 : i32
    return %c0_i32, %c0_i32_0 : i32, i32
  }
  func.func @transform_2(%arg0: i32) -> (i32, i32) {
    %c0_i32 = arith.constant 0 : i32
    %c0_i32_0 = arith.constant 0 : i32
    %c0_i32_1 = arith.constant 0 : i32
    return %c0_i32, %c0_i32_0 : i32, i32
  }
  func.func @transform_3(%arg0: i32) -> (i32, i32) {
    %c0_i32 = arith.constant 0 : i32
    %c0_i32_0 = arith.constant 0 : i32
    %c0_i32_1 = arith.constant 0 : i32
    return %c0_i32, %c0_i32_0 : i32, i32
  }
  func.func @transform_4(%arg0: i32) -> (i32, i32) {
    %c0_i32 = arith.constant 0 : i32
    %c0_i32_0 = arith.constant 0 : i32
    %c0_i32_1 = arith.constant 0 : i32
    return %c0_i32, %c0_i32_0 : i32, i32
  }
  func.func @transform_5(%arg0: i32) -> (i32, i32) {
    %c0_i32 = arith.constant 0 : i32
    %c0_i32_0 = arith.constant 0 : i32
    %c0_i32_1 = arith.constant 0 : i32
    return %c0_i32, %c0_i32_0 : i32, i32
  }
  func.func @transform_6(%arg0: i32) -> (i32, i32) {
    %c0_i32 = arith.constant 0 : i32
    %c0_i32_0 = arith.constant 0 : i32
    %c0_i32_1 = arith.constant 0 : i32
    return %c0_i32, %c0_i32_0 : i32, i32
  }
  func.func @transform_7(%arg0: i32) -> (i32, i32) {
    %c0_i32 = arith.constant 0 : i32
    %c0_i32_0 = arith.constant 0 : i32
    %c0_i32_1 = arith.constant 0 : i32
    return %c0_i32, %c0_i32_0 : i32, i32
  }
  func.func @transform_8(%arg0: i32) -> (i32, i32) {
    %c0_i32 = arith.constant 0 : i32
    %c0_i32_0 = arith.constant 0 : i32
    %c0_i32_1 = arith.constant 0 : i32
    return %c0_i32, %c0_i32_0 : i32, i32
  }
  func.func @transform_9(%arg0: i32) -> (i32, i32) {
    %c0_i32 = arith.constant 0 : i32
    %c0_i32_0 = arith.constant 0 : i32
    %c0_i32_1 = arith.constant 0 : i32
    return %c0_i32, %c0_i32_0 : i32, i32
  }
  func.func @transform_10(%arg0: i32) -> (i32, i32) {
    %c0_i32 = arith.constant 0 : i32
    %c0_i32_0 = arith.constant 0 : i32
    %c0_i32_1 = arith.constant 0 : i32
    return %c0_i32, %c0_i32_0 : i32, i32
  }
  func.func @transform_11(%arg0: i32) -> (i32, i32) {
    %c0_i32 = arith.constant 0 : i32
    %c0_i32_0 = arith.constant 0 : i32
    return %arg0, %c0_i32 : i32, i32
  }
}

</mosaic_0001>

<llo_original>
// kernel: tpu_custom_call.1
$region0: #{tpu_custom_call.1}
  #allocation0 [shape = 'u32[]', space=smem, size = 0x4, offset = 0x4, fixed_abs, tag = 'smem constant byte address 0x4 - core index']
  #allocation1 [shape = 'u32[144,128]{1,0:T(1,128)}', space=vmem, size = 0x12000, scoped, tag = 'internal scratch']
  %s0 = inlined_call_operand.hbm [shape: bf16[8,784], index: 0, kind: input, shape index: {}]
  %s1 = inlined_call_operand.hbm [shape: bf16[784,1024], index: 1, kind: input, shape index: {}]
  %s2 = inlined_call_operand.hbm [shape: f32[1,1024], index: 2, kind: input, shape index: {}]
  %s3 = inlined_call_operand.vmem [shape: bf16[1024,20], index: 3, kind: input, shape index: {}]
  %s4 = inlined_call_operand.hbm [shape: f32[1,20], index: 4, kind: input, shape index: {}]
  %s5 = inlined_call_operand.hbm [shape: bf16[20,20], index: 5, kind: input, shape index: {}]
  %s6 = inlined_call_operand.hbm [shape: f32[1,20], index: 6, kind: input, shape index: {}]
  %s7 = inlined_call_operand.hbm [shape: bf16[20,20], index: 7, kind: input, shape index: {}]
  %s8 = inlined_call_operand.hbm [shape: f32[1,20], index: 8, kind: input, shape index: {}]
  %s9 = inlined_call_operand.hbm [shape: bf16[20,128], index: 9, kind: input, shape index: {}]
  %s10 = inlined_call_operand.hbm [shape: f32[1,128], index: 10, kind: input, shape index: {}]
  %s11 = inlined_call_operand.hbm [shape: f32[8,128], index: 11, kind: output, shape index: {}]
  %s12 = sld [smem:[#allocation0]]
  $region94: #{tpu_custom_call.1} parent=0
    _
  %s14 = ssub.s32 1, %s12
  %s15 = scalar_select 0, %s14, %s12
  $region1: #{tpu_custom_call.1} parent=0
    #allocation2 [shape = 'u8[14336]{0}', space=vmem, size = 0x3800, scoped, tag = 'input window, operand 0, single buffered']
    #allocation3 [shape = 's32[1]{0}', space=sflag, size = 0x4, scoped, tag = 'scoped memory for tpu_custom_call.1']
    #allocation4 [shape = 's32[1]{0}', space=sflag, size = 0x4, scoped, tag = 'scoped memory for tpu_custom_call.1']
    #allocation5 [shape = 'u8[1605632]{0}', space=vmem, size = 0x188000, scoped, tag = 'input window, operand 1, single buffered']
    #allocation6 [shape = 's32[1]{0}', space=sflag, size = 0x4, scoped, tag = 'scoped memory for tpu_custom_call.1']
    #allocation7 [shape = 'u8[4096]{0}', space=vmem, size = 0x1000, scoped, tag = 'input window, operand 2, single buffered']
    #allocation8 [shape = 'u8[512]{0}', space=vmem, size = 0x400, scoped, tag = 'input window, operand 4, single buffered']
    #allocation9 [shape = 's32[1]{0}', space=sflag, size = 0x4, scoped, tag = 'scoped memory for tpu_custom_call.1']
    #allocation10 [shape = 'u8[6144]{0}', space=vmem, size = 0x1800, scoped, tag = 'input window, operand 5, single buffered']
    #allocation11 [shape = 'u8[512]{0}', space=vmem, size = 0x400, scoped, tag = 'input window, operand 6, single buffered']
    #allocation12 [shape = 's32[1]{0}', space=sflag, size = 0x4, scoped, tag = 'scoped memory for tpu_custom_call.1']
    #allocation13 [shape = 'u8[6144]{0}', space=vmem, size = 0x1800, scoped, tag = 'input window, operand 7, single buffered']
    #allocation14 [shape = 'u8[512]{0}', space=vmem, size = 0x400, scoped, tag = 'input window, operand 8, single buffered']
    #allocation15 [shape = 's32[1]{0}', space=sflag, size = 0x4, scoped, tag = 'scoped memory for tpu_custom_call.1']
    #allocation16 [shape = 'u8[6144]{0}', space=vmem, size = 0x1800, scoped, tag = 'input window, operand 9, single buffered']
    #allocation17 [shape = 'u8[512]{0}', space=vmem, size = 0x400, scoped, tag = 'input window, operand 10, single buffered']
    #allocation18 [shape = 's32[1]{0}', space=sflag, size = 0x4, scoped, tag = 'scoped memory for tpu_custom_call.1']
    #allocation19 [shape = 'u8[4096]{0}', space=vmem, size = 0x1000, scoped, tag = 'output window, operand 0, single buffered']
    %16 = vsyncpa [#allocation3], 0
    %17 = vsyncpa [#allocation6], 0
    %18 = vsyncpa [#allocation9], 0
    %19 = vsyncpa [#allocation12], 0
    %20 = vsyncpa [#allocation15], 0
    %21 = vsyncpa [#allocation18], 0
    %22 = vsyncpa [#allocation4], 0
    // Predicated region
    $region2: #{tpu_custom_call.1} parent=1 // pred_check
      _
    $region3: #{tpu_custom_call.1} parent=1 // pred_check_branch
      %24 = sbr.rel (0) target = $region5
    $region4: #{tpu_custom_call.1} parent=1 // pred_region
      %s26 = ssub.s32 448, 448
      %27 = vsyncadd [#allocation3], %s26
      %s29 = sshll.u32 [#allocation2], 4
      %s30 = int_to_ptr.vmem [resolvable:$true] %s29
      %32 = dma.hbm_to_vmem [thread:$0]  %s0, 448, %s30, [#allocation3]
    $region5: #{tpu_custom_call.1} parent=1 // pred_fallthru
      _
    // Predicated region
    $region6: #{tpu_custom_call.1} parent=1 // pred_check
      _
    $region7: #{tpu_custom_call.1} parent=1 // pred_check_branch
      %34 = sbr.rel (0) target = $region9
    $region8: #{tpu_custom_call.1} parent=1 // pred_region
      %s36 = ssub.s32 50176, 50176
      %37 = vsyncadd [#allocation6], %s36
      %s38 = sshll.u32 [#allocation5], 4
      %s39 = int_to_ptr.vmem [resolvable:$true] %s38
      %44 = dma.hbm_to_vmem [thread:$0]  %s1, 50176, %s39, [#allocation6], 512, 512, 32
    $region9: #{tpu_custom_call.1} parent=1 // pred_fallthru
      _
    // Predicated region
    $region10: #{tpu_custom_call.1} parent=1 // pred_check
      _
    $region11: #{tpu_custom_call.1} parent=1 // pred_check_branch
      %46 = sbr.rel (0) target = $region13
    $region12: #{tpu_custom_call.1} parent=1 // pred_region
      %s48 = ssub.s32 128, 128
      %49 = vsyncadd [#allocation6], %s48
      %s51 = sshll.u32 [#allocation7], 4
      %s52 = int_to_ptr.vmem [resolvable:$true] %s51
      %54 = dma.hbm_to_vmem [thread:$0]  %s2, 128, %s52, [#allocation6]
    $region13: #{tpu_custom_call.1} parent=1 // pred_fallthru
      _
    // Predicated region
    $region14: #{tpu_custom_call.1} parent=1 // pred_check
      _
    $region15: #{tpu_custom_call.1} parent=1 // pred_check_branch
      %56 = sbr.rel (0) target = $region17
    $region16: #{tpu_custom_call.1} parent=1 // pred_region
      _
    $region17: #{tpu_custom_call.1} parent=1 // pred_fallthru
      _
    // Predicated region
    $region18: #{tpu_custom_call.1} parent=1 // pred_check
      _
    $region19: #{tpu_custom_call.1} parent=1 // pred_check_branch
      %58 = sbr.rel (0) target = $region21
    $region20: #{tpu_custom_call.1} parent=1 // pred_region
      %s60 = ssub.s32 16, 16
      %61 = vsyncadd [#allocation9], %s60
      %s63 = sshll.u32 [#allocation8], 4
      %s64 = int_to_ptr.vmem [resolvable:$true] %s63
      %66 = dma.hbm_to_vmem [thread:$0]  %s4, 16, %s64, [#allocation9]
    $region21: #{tpu_custom_call.1} parent=1 // pred_fallthru
      _
    // Predicated region
    $region22: #{tpu_custom_call.1} parent=1 // pred_check
      _
    $region23: #{tpu_custom_call.1} parent=1 // pred_check_branch
      %68 = sbr.rel (0) target = $region25
    $region24: #{tpu_custom_call.1} parent=1 // pred_region
      %s70 = ssub.s32 192, 192
      %71 = vsyncadd [#allocation9], %s70
      %s72 = sshll.u32 [#allocation10], 4
      %s73 = int_to_ptr.vmem [resolvable:$true] %s72
      %78 = dma.hbm_to_vmem [thread:$0]  %s5, 192, %s73, [#allocation9], 64, 64, 4
    $region25: #{tpu_custom_call.1} parent=1 // pred_fallthru
      _
    // Predicated region
    $region26: #{tpu_custom_call.1} parent=1 // pred_check
      _
    $region27: #{tpu_custom_call.1} parent=1 // pred_check_branch
      %80 = sbr.rel (0) target = $region29
    $region28: #{tpu_custom_call.1} parent=1 // pred_region
      %s82 = ssub.s32 16, 16
      %83 = vsyncadd [#allocation12], %s82
      %s85 = sshll.u32 [#allocation11], 4
      %s86 = int_to_ptr.vmem [resolvable:$true] %s85
      %88 = dma.hbm_to_vmem [thread:$0]  %s6, 16, %s86, [#allocation12]
    $region29: #{tpu_custom_call.1} parent=1 // pred_fallthru
      _
    // Predicated region
    $region30: #{tpu_custom_call.1} parent=1 // pred_check
      _
    $region31: #{tpu_custom_call.1} parent=1 // pred_check_branch
      %90 = sbr.rel (0) target = $region33
    $region32: #{tpu_custom_call.1} parent=1 // pred_region
      %s92 = ssub.s32 192, 192
      %93 = vsyncadd [#allocation12], %s92
      %s94 = sshll.u32 [#allocation13], 4
      %s95 = int_to_ptr.vmem [resolvable:$true] %s94
      %100 = dma.hbm_to_vmem [thread:$0]  %s7, 192, %s95, [#allocation12], 64, 64, 4
    $region33: #{tpu_custom_call.1} parent=1 // pred_fallthru
      _
    // Predicated region
    $region34: #{tpu_custom_call.1} parent=1 // pred_check
      _
    $region35: #{tpu_custom_call.1} parent=1 // pred_check_branch
      %102 = sbr.rel (0) target = $region37
    $region36: #{tpu_custom_call.1} parent=1 // pred_region
      %s104 = ssub.s32 16, 16
      %105 = vsyncadd [#allocation15], %s104
      %s107 = sshll.u32 [#allocation14], 4
      %s108 = int_to_ptr.vmem [resolvable:$true] %s107
      %110 = dma.hbm_to_vmem [thread:$0]  %s8, 16, %s108, [#allocation15]
    $region37: #{tpu_custom_call.1} parent=1 // pred_fallthru
      _
    // Predicated region
    $region38: #{tpu_custom_call.1} parent=1 // pred_check
      _
    $region39: #{tpu_custom_call.1} parent=1 // pred_check_branch
      %112 = sbr.rel (0) target = $region41
    $region40: #{tpu_custom_call.1} parent=1 // pred_region
      %s114 = ssub.s32 192, 192
      %115 = vsyncadd [#allocation15], %s114
      %s116 = sshll.u32 [#allocation16], 4
      %s117 = int_to_ptr.vmem [resolvable:$true] %s116
      %122 = dma.hbm_to_vmem [thread:$0]  %s9, 192, %s117, [#allocation15], 64, 64, 4
    $region41: #{tpu_custom_call.1} parent=1 // pred_fallthru
      _
    // Predicated region
    $region42: #{tpu_custom_call.1} parent=1 // pred_check
      _
    $region43: #{tpu_custom_call.1} parent=1 // pred_check_branch
      %124 = sbr.rel (0) target = $region45
    $region44: #{tpu_custom_call.1} parent=1 // pred_region
      %s126 = ssub.s32 16, 16
      %127 = vsyncadd [#allocation18], %s126
      %s129 = sshll.u32 [#allocation17], 4
      %s130 = int_to_ptr.vmem [resolvable:$true] %s129
      %132 = dma.hbm_to_vmem [thread:$0]  %s10, 16, %s130, [#allocation18]
    $region45: #{tpu_custom_call.1} parent=1 // pred_fallthru
      _
    // Predicated region
    $region46: #{tpu_custom_call.1} parent=1 // pred_check
      _
    $region47: #{tpu_custom_call.1} parent=1 // pred_check_branch
      %134 = sbr.rel (0) target = $region49
    $region48: #{tpu_custom_call.1} parent=1 // pred_region
      %135 = dma.done [#allocation3], 448
    $region49: #{tpu_custom_call.1} parent=1 // pred_fallthru
      _
    // Predicated region
    $region50: #{tpu_custom_call.1} parent=1 // pred_check
      _
    $region51: #{tpu_custom_call.1} parent=1 // pred_check_branch
      %137 = sbr.rel (0) target = $region53
    $region52: #{tpu_custom_call.1} parent=1 // pred_region
      %138 = dma.done [#allocation6], 50176
    $region53: #{tpu_custom_call.1} parent=1 // pred_fallthru
      _
    // Predicated region
    $region54: #{tpu_custom_call.1} parent=1 // pred_check
      _
    $region55: #{tpu_custom_call.1} parent=1 // pred_check_branch
      %140 = sbr.rel (0) target = $region57
    $region56: #{tpu_custom_call.1} parent=1 // pred_region
      %141 = dma.done [#allocation6], 128
    $region57: #{tpu_custom_call.1} parent=1 // pred_fallthru
      _
    // Predicated region
    $region58: #{tpu_custom_call.1} parent=1 // pred_check
      _
    $region59: #{tpu_custom_call.1} parent=1 // pred_check_branch
      %143 = sbr.rel (0) target = $region61
    $region60: #{tpu_custom_call.1} parent=1 // pred_region
      %144 = dma.done [#allocation9], 16
    $region61: #{tpu_custom_call.1} parent=1 // pred_fallthru
      _
    // Predicated region
    $region62: #{tpu_custom_call.1} parent=1 // pred_check
      _
    $region63: #{tpu_custom_call.1} parent=1 // pred_check_branch
      %146 = sbr.rel (0) target = $region65
    $region64: #{tpu_custom_call.1} parent=1 // pred_region
      %147 = dma.done [#allocation9], 192
    $region65: #{tpu_custom_call.1} parent=1 // pred_fallthru
      _
    // Predicated region
    $region66: #{tpu_custom_call.1} parent=1 // pred_check
      _
    $region67: #{tpu_custom_call.1} parent=1 // pred_check_branch
      %149 = sbr.rel (0) target = $region69
    $region68: #{tpu_custom_call.1} parent=1 // pred_region
      %150 = dma.done [#allocation12], 16
    $region69: #{tpu_custom_call.1} parent=1 // pred_fallthru
      _
    // Predicated region
    $region70: #{tpu_custom_call.1} parent=1 // pred_check
      _
    $region71: #{tpu_custom_call.1} parent=1 // pred_check_branch
      %152 = sbr.rel (0) target = $region73
    $region72: #{tpu_custom_call.1} parent=1 // pred_region
      %153 = dma.done [#allocation12], 192
    $region73: #{tpu_custom_call.1} parent=1 // pred_fallthru
      _
    // Predicated region
    $region74: #{tpu_custom_call.1} parent=1 // pred_check
      _
    $region75: #{tpu_custom_call.1} parent=1 // pred_check_branch
      %155 = sbr.rel (0) target = $region77
    $region76: #{tpu_custom_call.1} parent=1 // pred_region
      %156 = dma.done [#allocation15], 16
    $region77: #{tpu_custom_call.1} parent=1 // pred_fallthru
      _
    // Predicated region
    $region78: #{tpu_custom_call.1} parent=1 // pred_check
      _
    $region79: #{tpu_custom_call.1} parent=1 // pred_check_branch
      %158 = sbr.rel (0) target = $region81
    $region80: #{tpu_custom_call.1} parent=1 // pred_region
      %159 = dma.done [#allocation15], 192
    $region81: #{tpu_custom_call.1} parent=1 // pred_fallthru
      _
    // Predicated region
    $region82: #{tpu_custom_call.1} parent=1 // pred_check
      _
    $region83: #{tpu_custom_call.1} parent=1 // pred_check_branch
      %161 = sbr.rel (0) target = $region85
    $region84: #{tpu_custom_call.1} parent=1 // pred_region
      %162 = dma.done [#allocation18], 16
    $region85: #{tpu_custom_call.1} parent=1 // pred_fallthru
      _
    %v164 = vld [vmem:[#allocation2] sm:$0xff]
    %v165 = vld [vmem:[#allocation2 + $0x8] sm:$0xff]
    %v166 = vld [vmem:[#allocation2 + $0x10] sm:$0xff]
    %v167 = vld [vmem:[#allocation2 + $0x18] sm:$0xf]
    %v168 = vld [vmem:[#allocation5] sm:$0xff]
    %v169 = vld [vmem:[#allocation5 + $0x8] sm:$0xff]
    %v170 = vld [vmem:[#allocation5 + $0x10] sm:$0xff]
    %v171 = vld [vmem:[#allocation5 + $0x18] sm:$0xff]
    %v172 = vld [vmem:[#allocation5 + $0x20] sm:$0xff]
    %v173 = vld [vmem:[#allocation5 + $0x28] sm:$0xff]
    %v174 = vld [vmem:[#allocation5 + $0x30] sm:$0xff]
    %v175 = vld [vmem:[#allocation5 + $0x38] sm:$0xff]
    %v176 = vld [vmem:[#allocation5 + $0x40] sm:$0xff]
    %v177 = vld [vmem:[#allocation5 + $0x48] sm:$0xff]
    %v178 = vld [vmem:[#allocation5 + $0x50] sm:$0xff]
    %v179 = vld [vmem:[#allocation5 + $0x58] sm:$0xff]
    %v180 = vld [vmem:[#allocation5 + $0x60] sm:$0xff]
    %v181 = vld [vmem:[#allocation5 + $0x68] sm:$0xff]
    %v182 = vld [vmem:[#allocation5 + $0x70] sm:$0xff]
    %v183 = vld [vmem:[#allocation5 + $0x78] sm:$0xff]
    %v184 = vld [vmem:[#allocation5 + $0x80] sm:$0xff]
    %v185 = vld [vmem:[#allocation5 + $0x88] sm:$0xff]
    %v186 = vld [vmem:[#allocation5 + $0x90] sm:$0xff]
    %v187 = vld [vmem:[#allocation5 + $0x98] sm:$0xff]
    %v188 = vld [vmem:[#allocation5 + $0xa0] sm:$0xff]
    %v189 = vld [vmem:[#allocation5 + $0xa8] sm:$0xff]
    %v190 = vld [vmem:[#allocation5 + $0xb0] sm:$0xff]
    %v191 = vld [vmem:[#allocation5 + $0xb8] sm:$0xff]
    %v192 = vld [vmem:[#allocation5 + $0xc0] sm:$0xff]
    %v193 = vld [vmem:[#allocation5 + $0xc8] sm:$0xff]
    %v194 = vld [vmem:[#allocation5 + $0xd0] sm:$0xff]
    %v195 = vld [vmem:[#allocation5 + $0xd8] sm:$0xff]
    %v196 = vld [vmem:[#allocation5 + $0xe0] sm:$0xff]
    %v197 = vld [vmem:[#allocation5 + $0xe8] sm:$0xff]
    %v198 = vld [vmem:[#allocation5 + $0xf0] sm:$0xff]
    %v199 = vld [vmem:[#allocation5 + $0xf8] sm:$0xff]
    %v200 = vld [vmem:[#allocation5 + $0x100] sm:$0xff]
    %v201 = vld [vmem:[#allocation5 + $0x108] sm:$0xff]
    %v202 = vld [vmem:[#allocation5 + $0x110] sm:$0xff]
    %v203 = vld [vmem:[#allocation5 + $0x118] sm:$0xff]
    %v204 = vld [vmem:[#allocation5 + $0x120] sm:$0xff]
    %v205 = vld [vmem:[#allocation5 + $0x128] sm:$0xff]
    %v206 = vld [vmem:[#allocation5 + $0x130] sm:$0xff]
    %v207 = vld [vmem:[#allocation5 + $0x138] sm:$0xff]
    %v208 = vld [vmem:[#allocation5 + $0x140] sm:$0xff]
    %v209 = vld [vmem:[#allocation5 + $0x148] sm:$0xff]
    %v210 = vld [vmem:[#allocation5 + $0x150] sm:$0xff]
    %v211 = vld [vmem:[#allocation5 + $0x158] sm:$0xff]
    %v212 = vld [vmem:[#allocation5 + $0x160] sm:$0xff]
    %v213 = vld [vmem:[#allocation5 + $0x168] sm:$0xff]
    %v214 = vld [vmem:[#allocation5 + $0x170] sm:$0xff]
    %v215 = vld [vmem:[#allocation5 + $0x178] sm:$0xff]
    %v216 = vld [vmem:[#allocation5 + $0x180] sm:$0xff]
    %v217 = vld [vmem:[#allocation5 + $0x188] sm:$0xff]
    %v218 = vld [vmem:[#allocation5 + $0x190] sm:$0xff]
    %v219 = vld [vmem:[#allocation5 + $0x198] sm:$0xff]
    %v220 = vld [vmem:[#allocation5 + $0x1a0] sm:$0xff]
    %v221 = vld [vmem:[#allocation5 + $0x1a8] sm:$0xff]
    %v222 = vld [vmem:[#allocation5 + $0x1b0] sm:$0xff]
    %v223 = vld [vmem:[#allocation5 + $0x1b8] sm:$0xff]
    %v224 = vld [vmem:[#allocation5 + $0x1c0] sm:$0xff]
    %v225 = vld [vmem:[#allocation5 + $0x1c8] sm:$0xff]
    %v226 = vld [vmem:[#allocation5 + $0x1d0] sm:$0xff]
    %v227 = vld [vmem:[#allocation5 + $0x1d8] sm:$0xff]
    %v228 = vld [vmem:[#allocation5 + $0x1e0] sm:$0xff]
    %v229 = vld [vmem:[#allocation5 + $0x1e8] sm:$0xff]
    %v230 = vld [vmem:[#allocation5 + $0x1f0] sm:$0xff]
    %v231 = vld [vmem:[#allocation5 + $0x1f8] sm:$0xff]
    %v232 = vld [vmem:[#allocation5 + $0x200] sm:$0xff]
    %v233 = vld [vmem:[#allocation5 + $0x208] sm:$0xff]
    %v234 = vld [vmem:[#allocation5 + $0x210] sm:$0xff]
    %v235 = vld [vmem:[#allocation5 + $0x218] sm:$0xff]
    %v236 = vld [vmem:[#allocation5 + $0x220] sm:$0xff]
    %v237 = vld [vmem:[#allocation5 + $0x228] sm:$0xff]
    %v238 = vld [vmem:[#allocation5 + $0x230] sm:$0xff]
    %v239 = vld [vmem:[#allocation5 + $0x238] sm:$0xff]
    %v240 = vld [vmem:[#allocation5 + $0x240] sm:$0xff]
    %v241 = vld [vmem:[#allocation5 + $0x248] sm:$0xff]
    %v242 = vld [vmem:[#allocation5 + $0x250] sm:$0xff]
    %v243 = vld [vmem:[#allocation5 + $0x258] sm:$0xff]
    %v244 = vld [vmem:[#allocation5 + $0x260] sm:$0xff]
    %v245 = vld [vmem:[#allocation5 + $0x268] sm:$0xff]
    %v246 = vld [vmem:[#allocation5 + $0x270] sm:$0xff]
    %v247 = vld [vmem:[#allocation5 + $0x278] sm:$0xff]
    %v248 = vld [vmem:[#allocation5 + $0x280] sm:$0xff]
    %v249 = vld [vmem:[#allocation5 + $0x288] sm:$0xff]
    %v250 = vld [vmem:[#allocation5 + $0x290] sm:$0xff]
    %v251 = vld [vmem:[#allocation5 + $0x298] sm:$0xff]
    %v252 = vld [vmem:[#allocation5 + $0x2a0] sm:$0xff]
    %v253 = vld [vmem:[#allocation5 + $0x2a8] sm:$0xff]
    %v254 = vld [vmem:[#allocation5 + $0x2b0] sm:$0xff]
    %v255 = vld [vmem:[#allocation5 + $0x2b8] sm:$0xff]
    %v256 = vld [vmem:[#allocation5 + $0x2c0] sm:$0xff]
    %v257 = vld [vmem:[#allocation5 + $0x2c8] sm:$0xff]
    %v258 = vld [vmem:[#allocation5 + $0x2d0] sm:$0xff]
    %v259 = vld [vmem:[#allocation5 + $0x2d8] sm:$0xff]
    %v260 = vld [vmem:[#allocation5 + $0x2e0] sm:$0xff]
    %v261 = vld [vmem:[#allocation5 + $0x2e8] sm:$0xff]
    %v262 = vld [vmem:[#allocation5 + $0x2f0] sm:$0xff]
    %v263 = vld [vmem:[#allocation5 + $0x2f8] sm:$0xff]
    %v264 = vld [vmem:[#allocation5 + $0x300] sm:$0xff]
    %v265 = vld [vmem:[#allocation5 + $0x308] sm:$0xff]
    %v266 = vld [vmem:[#allocation5 + $0x310] sm:$0xff]
    %v267 = vld [vmem:[#allocation5 + $0x318] sm:$0xff]
    %v268 = vld [vmem:[#allocation5 + $0x320] sm:$0xff]
    %v269 = vld [vmem:[#allocation5 + $0x328] sm:$0xff]
    %v270 = vld [vmem:[#allocation5 + $0x330] sm:$0xff]
    %v271 = vld [vmem:[#allocation5 + $0x338] sm:$0xff]
    %v272 = vld [vmem:[#allocation5 + $0x340] sm:$0xff]
    %v273 = vld [vmem:[#allocation5 + $0x348] sm:$0xff]
    %v274 = vld [vmem:[#allocation5 + $0x350] sm:$0xff]
    %v275 = vld [vmem:[#allocation5 + $0x358] sm:$0xff]
    %v276 = vld [vmem:[#allocation5 + $0x360] sm:$0xff]
    %v277 = vld [vmem:[#allocation5 + $0x368] sm:$0xff]
    %v278 = vld [vmem:[#allocation5 + $0x370] sm:$0xff]
    %v279 = vld [vmem:[#allocation5 + $0x378] sm:$0xff]
    %v280 = vld [vmem:[#allocation5 + $0x380] sm:$0xff]
    %v281 = vld [vmem:[#allocation5 + $0x388] sm:$0xff]
    %v282 = vld [vmem:[#allocation5 + $0x390] sm:$0xff]
    %v283 = vld [vmem:[#allocation5 + $0x398] sm:$0xff]
    %v284 = vld [vmem:[#allocation5 + $0x3a0] sm:$0xff]
    %v285 = vld [vmem:[#allocation5 + $0x3a8] sm:$0xff]
    %v286 = vld [vmem:[#allocation5 + $0x3b0] sm:$0xff]
    %v287 = vld [vmem:[#allocation5 + $0x3b8] sm:$0xff]
    %v288 = vld [vmem:[#allocation5 + $0x3c0] sm:$0xff]
    %v289 = vld [vmem:[#allocation5 + $0x3c8] sm:$0xff]
    %v290 = vld [vmem:[#allocation5 + $0x3d0] sm:$0xff]
    %v291 = vld [vmem:[#allocation5 + $0x3d8] sm:$0xff]
    %v292 = vld [vmem:[#allocation5 + $0x3e0] sm:$0xff]
    %v293 = vld [vmem:[#allocation5 + $0x3e8] sm:$0xff]
    %v294 = vld [vmem:[#allocation5 + $0x3f0] sm:$0xff]
    %v295 = vld [vmem:[#allocation5 + $0x3f8] sm:$0xff]
    %v296 = vld [vmem:[#allocation5 + $0x400] sm:$0xff]
    %v297 = vld [vmem:[#allocation5 + $0x408] sm:$0xff]
    %v298 = vld [vmem:[#allocation5 + $0x410] sm:$0xff]
    %v299 = vld [vmem:[#allocation5 + $0x418] sm:$0xff]
    %v300 = vld [vmem:[#allocation5 + $0x420] sm:$0xff]
    %v301 = vld [vmem:[#allocation5 + $0x428] sm:$0xff]
    %v302 = vld [vmem:[#allocation5 + $0x430] sm:$0xff]
    %v303 = vld [vmem:[#allocation5 + $0x438] sm:$0xff]
    %v304 = vld [vmem:[#allocation5 + $0x440] sm:$0xff]
    %v305 = vld [vmem:[#allocation5 + $0x448] sm:$0xff]
    %v306 = vld [vmem:[#allocation5 + $0x450] sm:$0xff]
    %v307 = vld [vmem:[#allocation5 + $0x458] sm:$0xff]
    %v308 = vld [vmem:[#allocation5 + $0x460] sm:$0xff]
    %v309 = vld [vmem:[#allocation5 + $0x468] sm:$0xff]
    %v310 = vld [vmem:[#allocation5 + $0x470] sm:$0xff]
    %v311 = vld [vmem:[#allocation5 + $0x478] sm:$0xff]
    %v312 = vld [vmem:[#allocation5 + $0x480] sm:$0xff]
    %v313 = vld [vmem:[#allocation5 + $0x488] sm:$0xff]
    %v314 = vld [vmem:[#allocation5 + $0x490] sm:$0xff]
    %v315 = vld [vmem:[#allocation5 + $0x498] sm:$0xff]
    %v316 = vld [vmem:[#allocation5 + $0x4a0] sm:$0xff]
    %v317 = vld [vmem:[#allocation5 + $0x4a8] sm:$0xff]
    %v318 = vld [vmem:[#allocation5 + $0x4b0] sm:$0xff]
    %v319 = vld [vmem:[#allocation5 + $0x4b8] sm:$0xff]
    %v320 = vld [vmem:[#allocation5 + $0x4c0] sm:$0xff]
    %v321 = vld [vmem:[#allocation5 + $0x4c8] sm:$0xff]
    %v322 = vld [vmem:[#allocation5 + $0x4d0] sm:$0xff]
    %v323 = vld [vmem:[#allocation5 + $0x4d8] sm:$0xff]
    %v324 = vld [vmem:[#allocation5 + $0x4e0] sm:$0xff]
    %v325 = vld [vmem:[#allocation5 + $0x4e8] sm:$0xff]
    %v326 = vld [vmem:[#allocation5 + $0x4f0] sm:$0xff]
    %v327 = vld [vmem:[#allocation5 + $0x4f8] sm:$0xff]
    %v328 = vld [vmem:[#allocation5 + $0x500] sm:$0xff]
    %v329 = vld [vmem:[#allocation5 + $0x508] sm:$0xff]
    %v330 = vld [vmem:[#allocation5 + $0x510] sm:$0xff]
    %v331 = vld [vmem:[#allocation5 + $0x518] sm:$0xff]
    %v332 = vld [vmem:[#allocation5 + $0x520] sm:$0xff]
    %v333 = vld [vmem:[#allocation5 + $0x528] sm:$0xff]
    %v334 = vld [vmem:[#allocation5 + $0x530] sm:$0xff]
    %v335 = vld [vmem:[#allocation5 + $0x538] sm:$0xff]
    %v336 = vld [vmem:[#allocation5 + $0x540] sm:$0xff]
    %v337 = vld [vmem:[#allocation5 + $0x548] sm:$0xff]
    %v338 = vld [vmem:[#allocation5 + $0x550] sm:$0xff]
    %v339 = vld [vmem:[#allocation5 + $0x558] sm:$0xff]
    %v340 = vld [vmem:[#allocation5 + $0x560] sm:$0xff]
    %v341 = vld [vmem:[#allocation5 + $0x568] sm:$0xff]
    %v342 = vld [vmem:[#allocation5 + $0x570] sm:$0xff]
    %v343 = vld [vmem:[#allocation5 + $0x578] sm:$0xff]
    %v344 = vld [vmem:[#allocation5 + $0x580] sm:$0xff]
    %v345 = vld [vmem:[#allocation5 + $0x588] sm:$0xff]
    %v346 = vld [vmem:[#allocation5 + $0x590] sm:$0xff]
    %v347 = vld [vmem:[#allocation5 + $0x598] sm:$0xff]
    %v348 = vld [vmem:[#allocation5 + $0x5a0] sm:$0xff]
    %v349 = vld [vmem:[#allocation5 + $0x5a8] sm:$0xff]
    %v350 = vld [vmem:[#allocation5 + $0x5b0] sm:$0xff]
    %v351 = vld [vmem:[#allocation5 + $0x5b8] sm:$0xff]
    %v352 = vld [vmem:[#allocation5 + $0x5c0] sm:$0xff]
    %v353 = vld [vmem:[#allocation5 + $0x5c8] sm:$0xff]
    %v354 = vld [vmem:[#allocation5 + $0x5d0] sm:$0xff]
    %v355 = vld [vmem:[#allocation5 + $0x5d8] sm:$0xff]
    %v356 = vld [vmem:[#allocation5 + $0x5e0] sm:$0xff]
    %v357 = vld [vmem:[#allocation5 + $0x5e8] sm:$0xff]
    %v358 = vld [vmem:[#allocation5 + $0x5f0] sm:$0xff]
    %v359 = vld [vmem:[#allocation5 + $0x5f8] sm:$0xff]
    %v360 = vld [vmem:[#allocation5 + $0x600] sm:$0xff]
    %v361 = vld [vmem:[#allocation5 + $0x608] sm:$0xff]
    %v362 = vld [vmem:[#allocation5 + $0x610] sm:$0xff]
    %v363 = vld [vmem:[#allocation5 + $0x618] sm:$0xff]
    %v364 = vld [vmem:[#allocation5 + $0x620] sm:$0xff]
    %v365 = vld [vmem:[#allocation5 + $0x628] sm:$0xff]
    %v366 = vld [vmem:[#allocation5 + $0x630] sm:$0xff]
    %v367 = vld [vmem:[#allocation5 + $0x638] sm:$0xff]
    %v368 = vld [vmem:[#allocation5 + $0x640] sm:$0xff]
    %v369 = vld [vmem:[#allocation5 + $0x648] sm:$0xff]
    %v370 = vld [vmem:[#allocation5 + $0x650] sm:$0xff]
    %v371 = vld [vmem:[#allocation5 + $0x658] sm:$0xff]
    %v372 = vld [vmem:[#allocation5 + $0x660] sm:$0xff]
    %v373 = vld [vmem:[#allocation5 + $0x668] sm:$0xff]
    %v374 = vld [vmem:[#allocation5 + $0x670] sm:$0xff]
    %v375 = vld [vmem:[#allocation5 + $0x678] sm:$0xff]
    %v376 = vld [vmem:[#allocation5 + $0x680] sm:$0xff]
    %v377 = vld [vmem:[#allocation5 + $0x688] sm:$0xff]
    %v378 = vld [vmem:[#allocation5 + $0x690] sm:$0xff]
    %v379 = vld [vmem:[#allocation5 + $0x698] sm:$0xff]
    %v380 = vld [vmem:[#allocation5 + $0x6a0] sm:$0xff]
    %v381 = vld [vmem:[#allocation5 + $0x6a8] sm:$0xff]
    %v382 = vld [vmem:[#allocation5 + $0x6b0] sm:$0xff]
    %v383 = vld [vmem:[#allocation5 + $0x6b8] sm:$0xff]
    %v384 = vld [vmem:[#allocation5 + $0x6c0] sm:$0xff]
    %v385 = vld [vmem:[#allocation5 + $0x6c8] sm:$0xff]
    %v386 = vld [vmem:[#allocation5 + $0x6d0] sm:$0xff]
    %v387 = vld [vmem:[#allocation5 + $0x6d8] sm:$0xff]
    %v388 = vld [vmem:[#allocation5 + $0x6e0] sm:$0xff]
    %v389 = vld [vmem:[#allocation5 + $0x6e8] sm:$0xff]
    %v390 = vld [vmem:[#allocation5 + $0x6f0] sm:$0xff]
    %v391 = vld [vmem:[#allocation5 + $0x6f8] sm:$0xff]
    %v392 = vld [vmem:[#allocation5 + $0x700] sm:$0xff]
    %v393 = vld [vmem:[#allocation5 + $0x708] sm:$0xff]
    %v394 = vld [vmem:[#allocation5 + $0x710] sm:$0xff]
    %v395 = vld [vmem:[#allocation5 + $0x718] sm:$0xff]
    %v396 = vld [vmem:[#allocation5 + $0x720] sm:$0xff]
    %v397 = vld [vmem:[#allocation5 + $0x728] sm:$0xff]
    %v398 = vld [vmem:[#allocation5 + $0x730] sm:$0xff]
    %v399 = vld [vmem:[#allocation5 + $0x738] sm:$0xff]
    %v400 = vld [vmem:[#allocation5 + $0x740] sm:$0xff]
    %v401 = vld [vmem:[#allocation5 + $0x748] sm:$0xff]
    %v402 = vld [vmem:[#allocation5 + $0x750] sm:$0xff]
    %v403 = vld [vmem:[#allocation5 + $0x758] sm:$0xff]
    %v404 = vld [vmem:[#allocation5 + $0x760] sm:$0xff]
    %v405 = vld [vmem:[#allocation5 + $0x768] sm:$0xff]
    %v406 = vld [vmem:[#allocation5 + $0x770] sm:$0xff]
    %v407 = vld [vmem:[#allocation5 + $0x778] sm:$0xff]
    %v408 = vld [vmem:[#allocation5 + $0x780] sm:$0xff]
    %v409 = vld [vmem:[#allocation5 + $0x788] sm:$0xff]
    %v410 = vld [vmem:[#allocation5 + $0x790] sm:$0xff]
    %v411 = vld [vmem:[#allocation5 + $0x798] sm:$0xff]
    %v412 = vld [vmem:[#allocation5 + $0x7a0] sm:$0xff]
    %v413 = vld [vmem:[#allocation5 + $0x7a8] sm:$0xff]
    %v414 = vld [vmem:[#allocation5 + $0x7b0] sm:$0xff]
    %v415 = vld [vmem:[#allocation5 + $0x7b8] sm:$0xff]
    %v416 = vld [vmem:[#allocation5 + $0x7c0] sm:$0xff]
    %v417 = vld [vmem:[#allocation5 + $0x7c8] sm:$0xff]
    %v418 = vld [vmem:[#allocation5 + $0x7d0] sm:$0xff]
    %v419 = vld [vmem:[#allocation5 + $0x7d8] sm:$0xff]
    %v420 = vld [vmem:[#allocation5 + $0x7e0] sm:$0xff]
    %v421 = vld [vmem:[#allocation5 + $0x7e8] sm:$0xff]
    %v422 = vld [vmem:[#allocation5 + $0x7f0] sm:$0xff]
    %v423 = vld [vmem:[#allocation5 + $0x7f8] sm:$0xff]
    %v424 = vld [vmem:[#allocation5 + $0x800] sm:$0xff]
    %v425 = vld [vmem:[#allocation5 + $0x808] sm:$0xff]
    %v426 = vld [vmem:[#allocation5 + $0x810] sm:$0xff]
    %v427 = vld [vmem:[#allocation5 + $0x818] sm:$0xff]
    %v428 = vld [vmem:[#allocation5 + $0x820] sm:$0xff]
    %v429 = vld [vmem:[#allocation5 + $0x828] sm:$0xff]
    %v430 = vld [vmem:[#allocation5 + $0x830] sm:$0xff]
    %v431 = vld [vmem:[#allocation5 + $0x838] sm:$0xff]
    %v432 = vld [vmem:[#allocation5 + $0x840] sm:$0xff]
    %v433 = vld [vmem:[#allocation5 + $0x848] sm:$0xff]
    %v434 = vld [vmem:[#allocation5 + $0x850] sm:$0xff]
    %v435 = vld [vmem:[#allocation5 + $0x858] sm:$0xff]
    %v436 = vld [vmem:[#allocation5 + $0x860] sm:$0xff]
    %v437 = vld [vmem:[#allocation5 + $0x868] sm:$0xff]
    %v438 = vld [vmem:[#allocation5 + $0x870] sm:$0xff]
    %v439 = vld [vmem:[#allocation5 + $0x878] sm:$0xff]
    %v440 = vld [vmem:[#allocation5 + $0x880] sm:$0xff]
    %v441 = vld [vmem:[#allocation5 + $0x888] sm:$0xff]
    %v442 = vld [vmem:[#allocation5 + $0x890] sm:$0xff]
    %v443 = vld [vmem:[#allocation5 + $0x898] sm:$0xff]
    %v444 = vld [vmem:[#allocation5 + $0x8a0] sm:$0xff]
    %v445 = vld [vmem:[#allocation5 + $0x8a8] sm:$0xff]
    %v446 = vld [vmem:[#allocation5 + $0x8b0] sm:$0xff]
    %v447 = vld [vmem:[#allocation5 + $0x8b8] sm:$0xff]
    %v448 = vld [vmem:[#allocation5 + $0x8c0] sm:$0xff]
    %v449 = vld [vmem:[#allocation5 + $0x8c8] sm:$0xff]
    %v450 = vld [vmem:[#allocation5 + $0x8d0] sm:$0xff]
    %v451 = vld [vmem:[#allocation5 + $0x8d8] sm:$0xff]
    %v452 = vld [vmem:[#allocation5 + $0x8e0] sm:$0xff]
    %v453 = vld [vmem:[#allocation5 + $0x8e8] sm:$0xff]
    %v454 = vld [vmem:[#allocation5 + $0x8f0] sm:$0xff]
    %v455 = vld [vmem:[#allocation5 + $0x8f8] sm:$0xff]
    %v456 = vld [vmem:[#allocation5 + $0x900] sm:$0xff]
    %v457 = vld [vmem:[#allocation5 + $0x908] sm:$0xff]
    %v458 = vld [vmem:[#allocation5 + $0x910] sm:$0xff]
    %v459 = vld [vmem:[#allocation5 + $0x918] sm:$0xff]
    %v460 = vld [vmem:[#allocation5 + $0x920] sm:$0xff]
    %v461 = vld [vmem:[#allocation5 + $0x928] sm:$0xff]
    %v462 = vld [vmem:[#allocation5 + $0x930] sm:$0xff]
    %v463 = vld [vmem:[#allocation5 + $0x938] sm:$0xff]
    %v464 = vld [vmem:[#allocation5 + $0x940] sm:$0xff]
    %v465 = vld [vmem:[#allocation5 + $0x948] sm:$0xff]
    %v466 = vld [vmem:[#allocation5 + $0x950] sm:$0xff]
    %v467 = vld [vmem:[#allocation5 + $0x958] sm:$0xff]
    %v468 = vld [vmem:[#allocation5 + $0x960] sm:$0xff]
    %v469 = vld [vmem:[#allocation5 + $0x968] sm:$0xff]
    %v470 = vld [vmem:[#allocation5 + $0x970] sm:$0xff]
    %v471 = vld [vmem:[#allocation5 + $0x978] sm:$0xff]
    %v472 = vld [vmem:[#allocation5 + $0x980] sm:$0xff]
    %v473 = vld [vmem:[#allocation5 + $0x988] sm:$0xff]
    %v474 = vld [vmem:[#allocation5 + $0x990] sm:$0xff]
    %v475 = vld [vmem:[#allocation5 + $0x998] sm:$0xff]
    %v476 = vld [vmem:[#allocation5 + $0x9a0] sm:$0xff]
    %v477 = vld [vmem:[#allocation5 + $0x9a8] sm:$0xff]
    %v478 = vld [vmem:[#allocation5 + $0x9b0] sm:$0xff]
    %v479 = vld [vmem:[#allocation5 + $0x9b8] sm:$0xff]
    %v480 = vld [vmem:[#allocation5 + $0x9c0] sm:$0xff]
    %v481 = vld [vmem:[#allocation5 + $0x9c8] sm:$0xff]
    %v482 = vld [vmem:[#allocation5 + $0x9d0] sm:$0xff]
    %v483 = vld [vmem:[#allocation5 + $0x9d8] sm:$0xff]
    %v484 = vld [vmem:[#allocation5 + $0x9e0] sm:$0xff]
    %v485 = vld [vmem:[#allocation5 + $0x9e8] sm:$0xff]
    %v486 = vld [vmem:[#allocation5 + $0x9f0] sm:$0xff]
    %v487 = vld [vmem:[#allocation5 + $0x9f8] sm:$0xff]
    %v488 = vld [vmem:[#allocation5 + $0xa00] sm:$0xff]
    %v489 = vld [vmem:[#allocation5 + $0xa08] sm:$0xff]
    %v490 = vld [vmem:[#allocation5 + $0xa10] sm:$0xff]
    %v491 = vld [vmem:[#allocation5 + $0xa18] sm:$0xff]
    %v492 = vld [vmem:[#allocation5 + $0xa20] sm:$0xff]
    %v493 = vld [vmem:[#allocation5 + $0xa28] sm:$0xff]
    %v494 = vld [vmem:[#allocation5 + $0xa30] sm:$0xff]
    %v495 = vld [vmem:[#allocation5 + $0xa38] sm:$0xff]
    %v496 = vld [vmem:[#allocation5 + $0xa40] sm:$0xff]
    %v497 = vld [vmem:[#allocation5 + $0xa48] sm:$0xff]
    %v498 = vld [vmem:[#allocation5 + $0xa50] sm:$0xff]
    %v499 = vld [vmem:[#allocation5 + $0xa58] sm:$0xff]
    %v500 = vld [vmem:[#allocation5 + $0xa60] sm:$0xff]
    %v501 = vld [vmem:[#allocation5 + $0xa68] sm:$0xff]
    %v502 = vld [vmem:[#allocation5 + $0xa70] sm:$0xff]
    %v503 = vld [vmem:[#allocation5 + $0xa78] sm:$0xff]
    %v504 = vld [vmem:[#allocation5 + $0xa80] sm:$0xff]
    %v505 = vld [vmem:[#allocation5 + $0xa88] sm:$0xff]
    %v506 = vld [vmem:[#allocation5 + $0xa90] sm:$0xff]
    %v507 = vld [vmem:[#allocation5 + $0xa98] sm:$0xff]
    %v508 = vld [vmem:[#allocation5 + $0xaa0] sm:$0xff]
    %v509 = vld [vmem:[#allocation5 + $0xaa8] sm:$0xff]
    %v510 = vld [vmem:[#allocation5 + $0xab0] sm:$0xff]
    %v511 = vld [vmem:[#allocation5 + $0xab8] sm:$0xff]
    %v512 = vld [vmem:[#allocation5 + $0xac0] sm:$0xff]
    %v513 = vld [vmem:[#allocation5 + $0xac8] sm:$0xff]
    %v514 = vld [vmem:[#allocation5 + $0xad0] sm:$0xff]
    %v515 = vld [vmem:[#allocation5 + $0xad8] sm:$0xff]
    %v516 = vld [vmem:[#allocation5 + $0xae0] sm:$0xff]
    %v517 = vld [vmem:[#allocation5 + $0xae8] sm:$0xff]
    %v518 = vld [vmem:[#allocation5 + $0xaf0] sm:$0xff]
    %v519 = vld [vmem:[#allocation5 + $0xaf8] sm:$0xff]
    %v520 = vld [vmem:[#allocation5 + $0xb00] sm:$0xff]
    %v521 = vld [vmem:[#allocation5 + $0xb08] sm:$0xff]
    %v522 = vld [vmem:[#allocation5 + $0xb10] sm:$0xff]
    %v523 = vld [vmem:[#allocation5 + $0xb18] sm:$0xff]
    %v524 = vld [vmem:[#allocation5 + $0xb20] sm:$0xff]
    %v525 = vld [vmem:[#allocation5 + $0xb28] sm:$0xff]
    %v526 = vld [vmem:[#allocation5 + $0xb30] sm:$0xff]
    %v527 = vld [vmem:[#allocation5 + $0xb38] sm:$0xff]
    %v528 = vld [vmem:[#allocation5 + $0xb40] sm:$0xff]
    %v529 = vld [vmem:[#allocation5 + $0xb48] sm:$0xff]
    %v530 = vld [vmem:[#allocation5 + $0xb50] sm:$0xff]
    %v531 = vld [vmem:[#allocation5 + $0xb58] sm:$0xff]
    %v532 = vld [vmem:[#allocation5 + $0xb60] sm:$0xff]
    %v533 = vld [vmem:[#allocation5 + $0xb68] sm:$0xff]
    %v534 = vld [vmem:[#allocation5 + $0xb70] sm:$0xff]
    %v535 = vld [vmem:[#allocation5 + $0xb78] sm:$0xff]
    %v536 = vld [vmem:[#allocation5 + $0xb80] sm:$0xff]
    %v537 = vld [vmem:[#allocation5 + $0xb88] sm:$0xff]
    %v538 = vld [vmem:[#allocation5 + $0xb90] sm:$0xff]
    %v539 = vld [vmem:[#allocation5 + $0xb98] sm:$0xff]
    %v540 = vld [vmem:[#allocation5 + $0xba0] sm:$0xff]
    %v541 = vld [vmem:[#allocation5 + $0xba8] sm:$0xff]
    %v542 = vld [vmem:[#allocation5 + $0xbb0] sm:$0xff]
    %v543 = vld [vmem:[#allocation5 + $0xbb8] sm:$0xff]
    %v544 = vld [vmem:[#allocation5 + $0xbc0] sm:$0xff]
    %v545 = vld [vmem:[#allocation5 + $0xbc8] sm:$0xff]
    %v546 = vld [vmem:[#allocation5 + $0xbd0] sm:$0xff]
    %v547 = vld [vmem:[#allocation5 + $0xbd8] sm:$0xff]
    %v548 = vld [vmem:[#allocation5 + $0xbe0] sm:$0xff]
    %v549 = vld [vmem:[#allocation5 + $0xbe8] sm:$0xff]
    %v550 = vld [vmem:[#allocation5 + $0xbf0] sm:$0xff]
    %v551 = vld [vmem:[#allocation5 + $0xbf8] sm:$0xff]
    %v552 = vld [vmem:[#allocation5 + $0xc00] sm:$0xff]
    %v553 = vld [vmem:[#allocation5 + $0xc08] sm:$0xff]
    %v554 = vld [vmem:[#allocation5 + $0xc10] sm:$0xff]
    %v555 = vld [vmem:[#allocation5 + $0xc18] sm:$0xff]
    %v556 = vld [vmem:[#allocation5 + $0xc20] sm:$0xff]
    %v557 = vld [vmem:[#allocation5 + $0xc28] sm:$0xff]
    %v558 = vld [vmem:[#allocation5 + $0xc30] sm:$0xff]
    %v559 = vld [vmem:[#allocation5 + $0xc38] sm:$0xff]
    %v560 = vld [vmem:[#allocation7] sm:$0xff]
    %v562 = vlaneseq
    %v563 = vshrl.u32 %v562, 7
    %v564 = vsub.s32 0, %v563
    %v565 = vrot.slane %v560, %v564
    %v566 = vlaneseq
    %v567 = vshrl.u32 %v566, 7
    %v568 = vsub.s32 1, %v567
    %v569 = vrot.slane %v560, %v568
    %v570 = vlaneseq
    %v571 = vshrl.u32 %v570, 7
    %v572 = vsub.s32 2, %v571
    %v573 = vrot.slane %v560, %v572
    %v574 = vlaneseq
    %v575 = vshrl.u32 %v574, 7
    %v576 = vsub.s32 3, %v575
    %v577 = vrot.slane %v560, %v576
    %v578 = vlaneseq
    %v579 = vshrl.u32 %v578, 7
    %v580 = vsub.s32 4, %v579
    %v581 = vrot.slane %v560, %v580
    %v582 = vlaneseq
    %v583 = vshrl.u32 %v582, 7
    %v584 = vsub.s32 5, %v583
    %v585 = vrot.slane %v560, %v584
    %v586 = vlaneseq
    %v587 = vshrl.u32 %v586, 7
    %v588 = vsub.s32 6, %v587
    %v589 = vrot.slane %v560, %v588
    %v590 = vlaneseq
    %v591 = vshrl.u32 %v590, 7
    %v592 = vsub.s32 7, %v591
    %v593 = vrot.slane %v560, %v592
    %v606 = vunpack.c.l.b16 %v164
    %v607 = vunpack.c.h.b16 %v164
    %v608 = vunpack.c.l.b16 %v165
    %v609 = vunpack.c.h.b16 %v165
    %v610 = vunpack.c.l.b16 %v166
    %v611 = vunpack.c.h.b16 %v166
    %v612 = vunpack.c.l.b16 %v167
    %v613 = vpack.c.b16 %v606, %v606
    %v614 = vpack.c.b16 %v607, %v607
    %v615 = vpack.c.b16 %v608, %v608
    %v616 = vpack.c.b16 %v609, %v609
    %v617 = vpack.c.b16 %v610, %v610
    %v618 = vpack.c.b16 %v611, %v611
    %v619 = vpack.c.b16 %v612, %v612
    %v1018 = vunpack.c.l.b16 %v168
    %v1019 = vunpack.c.h.b16 %v168
    %v1020 = vunpack.c.l.b16 %v169
    %v1021 = vunpack.c.h.b16 %v169
    %v1022 = vunpack.c.l.b16 %v170
    %v1023 = vunpack.c.h.b16 %v170
    %v1024 = vunpack.c.l.b16 %v171
    %v1025 = vunpack.c.h.b16 %v171
    %v1026 = vunpack.c.l.b16 %v172
    %v1027 = vunpack.c.h.b16 %v172
    %v1028 = vunpack.c.l.b16 %v173
    %v1029 = vunpack.c.h.b16 %v173
    %v1030 = vunpack.c.l.b16 %v174
    %v1031 = vunpack.c.h.b16 %v174
    %v1032 = vunpack.c.l.b16 %v175
    %v1033 = vunpack.c.h.b16 %v175
    %v1034 = vunpack.c.l.b16 %v176
    %v1035 = vunpack.c.h.b16 %v176
    %v1036 = vunpack.c.l.b16 %v177
    %v1037 = vunpack.c.h.b16 %v177
    %v1038 = vunpack.c.l.b16 %v178
    %v1039 = vunpack.c.h.b16 %v178
    %v1040 = vunpack.c.l.b16 %v179
    %v1041 = vunpack.c.h.b16 %v179
    %v1042 = vunpack.c.l.b16 %v180
    %v1043 = vunpack.c.h.b16 %v180
    %v1044 = vunpack.c.l.b16 %v181
    %v1045 = vunpack.c.h.b16 %v181
    %v1046 = vunpack.c.l.b16 %v182
    %v1047 = vunpack.c.h.b16 %v182
    %v1048 = vunpack.c.l.b16 %v183
    %v1049 = vunpack.c.h.b16 %v183
    %v1050 = vunpack.c.l.b16 %v184
    %v1051 = vunpack.c.h.b16 %v184
    %v1052 = vunpack.c.l.b16 %v185
    %v1053 = vunpack.c.h.b16 %v185
    %v1054 = vunpack.c.l.b16 %v186
    %v1055 = vunpack.c.h.b16 %v186
    %v1056 = vunpack.c.l.b16 %v187
    %v1057 = vunpack.c.h.b16 %v187
    %v1058 = vunpack.c.l.b16 %v188
    %v1059 = vunpack.c.h.b16 %v188
    %v1060 = vunpack.c.l.b16 %v189
    %v1061 = vunpack.c.h.b16 %v189
    %v1062 = vunpack.c.l.b16 %v190
    %v1063 = vunpack.c.h.b16 %v190
    %v1064 = vunpack.c.l.b16 %v191
    %v1065 = vunpack.c.h.b16 %v191
    %v1066 = vunpack.c.l.b16 %v192
    %v1067 = vunpack.c.h.b16 %v192
    %v1068 = vunpack.c.l.b16 %v193
    %v1069 = vunpack.c.h.b16 %v193
    %v1070 = vunpack.c.l.b16 %v194
    %v1071 = vunpack.c.h.b16 %v194
    %v1072 = vunpack.c.l.b16 %v195
    %v1073 = vunpack.c.h.b16 %v195
    %v1074 = vunpack.c.l.b16 %v196
    %v1075 = vunpack.c.h.b16 %v196
    %v1076 = vunpack.c.l.b16 %v197
    %v1077 = vunpack.c.h.b16 %v197
    %v1078 = vunpack.c.l.b16 %v198
    %v1079 = vunpack.c.h.b16 %v198
    %v1080 = vunpack.c.l.b16 %v199
    %v1081 = vunpack.c.h.b16 %v199
    %v1082 = vunpack.c.l.b16 %v200
    %v1083 = vunpack.c.h.b16 %v200
    %v1084 = vunpack.c.l.b16 %v201
    %v1085 = vunpack.c.h.b16 %v201
    %v1086 = vunpack.c.l.b16 %v202
    %v1087 = vunpack.c.h.b16 %v202
    %v1088 = vunpack.c.l.b16 %v203
    %v1089 = vunpack.c.h.b16 %v203
    %v1090 = vunpack.c.l.b16 %v204
    %v1091 = vunpack.c.h.b16 %v204
    %v1092 = vunpack.c.l.b16 %v205
    %v1093 = vunpack.c.h.b16 %v205
    %v1094 = vunpack.c.l.b16 %v206
    %v1095 = vunpack.c.h.b16 %v206
    %v1096 = vunpack.c.l.b16 %v207
    %v1097 = vunpack.c.h.b16 %v207
    %v1098 = vunpack.c.l.b16 %v208
    %v1099 = vunpack.c.h.b16 %v208
    %v1100 = vunpack.c.l.b16 %v209
    %v1101 = vunpack.c.h.b16 %v209
    %v1102 = vunpack.c.l.b16 %v210
    %v1103 = vunpack.c.h.b16 %v210
    %v1104 = vunpack.c.l.b16 %v211
    %v1105 = vunpack.c.h.b16 %v211
    %v1106 = vunpack.c.l.b16 %v212
    %v1107 = vunpack.c.h.b16 %v212
    %v1108 = vunpack.c.l.b16 %v213
    %v1109 = vunpack.c.h.b16 %v213
    %v1110 = vunpack.c.l.b16 %v214
    %v1111 = vunpack.c.h.b16 %v214
    %v1112 = vunpack.c.l.b16 %v215
    %v1113 = vunpack.c.h.b16 %v215
    %v1114 = vunpack.c.l.b16 %v216
    %v1115 = vunpack.c.h.b16 %v216
    %v1116 = vunpack.c.l.b16 %v217
    %v1117 = vunpack.c.h.b16 %v217
    %v1118 = vunpack.c.l.b16 %v218
    %v1119 = vunpack.c.h.b16 %v218
    %v1120 = vunpack.c.l.b16 %v219
    %v1121 = vunpack.c.h.b16 %v219
    %v1122 = vunpack.c.l.b16 %v220
    %v1123 = vunpack.c.h.b16 %v220
    %v1124 = vunpack.c.l.b16 %v221
    %v1125 = vunpack.c.h.b16 %v221
    %v1126 = vunpack.c.l.b16 %v222
    %v1127 = vunpack.c.h.b16 %v222
    %v1128 = vunpack.c.l.b16 %v223
    %v1129 = vunpack.c.h.b16 %v223
    %v1130 = vunpack.c.l.b16 %v224
    %v1131 = vunpack.c.h.b16 %v224
    %v1132 = vunpack.c.l.b16 %v225
    %v1133 = vunpack.c.h.b16 %v225
    %v1134 = vunpack.c.l.b16 %v226
    %v1135 = vunpack.c.h.b16 %v226
    %v1136 = vunpack.c.l.b16 %v227
    %v1137 = vunpack.c.h.b16 %v227
    %v1138 = vunpack.c.l.b16 %v228
    %v1139 = vunpack.c.h.b16 %v228
    %v1140 = vunpack.c.l.b16 %v229
    %v1141 = vunpack.c.h.b16 %v229
    %v1142 = vunpack.c.l.b16 %v230
    %v1143 = vunpack.c.h.b16 %v230
    %v1144 = vunpack.c.l.b16 %v231
    %v1145 = vunpack.c.h.b16 %v231
    %v1146 = vunpack.c.l.b16 %v232
    %v1147 = vunpack.c.h.b16 %v232
    %v1148 = vunpack.c.l.b16 %v233
    %v1149 = vunpack.c.h.b16 %v233
    %v1150 = vunpack.c.l.b16 %v234
    %v1151 = vunpack.c.h.b16 %v234
    %v1152 = vunpack.c.l.b16 %v235
    %v1153 = vunpack.c.h.b16 %v235
    %v1154 = vunpack.c.l.b16 %v236
    %v1155 = vunpack.c.h.b16 %v236
    %v1156 = vunpack.c.l.b16 %v237
    %v1157 = vunpack.c.h.b16 %v237
    %v1158 = vunpack.c.l.b16 %v238
    %v1159 = vunpack.c.h.b16 %v238
    %v1160 = vunpack.c.l.b16 %v239
    %v1161 = vunpack.c.h.b16 %v239
    %v1162 = vunpack.c.l.b16 %v240
    %v1163 = vunpack.c.h.b16 %v240
    %v1164 = vunpack.c.l.b16 %v241
    %v1165 = vunpack.c.h.b16 %v241
    %v1166 = vunpack.c.l.b16 %v242
    %v1167 = vunpack.c.h.b16 %v242
    %v1168 = vunpack.c.l.b16 %v243
    %v1169 = vunpack.c.h.b16 %v243
    %v1170 = vunpack.c.l.b16 %v244
    %v1171 = vunpack.c.h.b16 %v244
    %v1172 = vunpack.c.l.b16 %v245
    %v1173 = vunpack.c.h.b16 %v245
    %v1174 = vunpack.c.l.b16 %v246
    %v1175 = vunpack.c.h.b16 %v246
    %v1176 = vunpack.c.l.b16 %v247
    %v1177 = vunpack.c.h.b16 %v247
    %v1178 = vunpack.c.l.b16 %v248
    %v1179 = vunpack.c.h.b16 %v248
    %v1180 = vunpack.c.l.b16 %v249
    %v1181 = vunpack.c.h.b16 %v249
    %v1182 = vunpack.c.l.b16 %v250
    %v1183 = vunpack.c.h.b16 %v250
    %v1184 = vunpack.c.l.b16 %v251
    %v1185 = vunpack.c.h.b16 %v251
    %v1186 = vunpack.c.l.b16 %v252
    %v1187 = vunpack.c.h.b16 %v252
    %v1188 = vunpack.c.l.b16 %v253
    %v1189 = vunpack.c.h.b16 %v253
    %v1190 = vunpack.c.l.b16 %v254
    %v1191 = vunpack.c.h.b16 %v254
    %v1192 = vunpack.c.l.b16 %v255
    %v1193 = vunpack.c.h.b16 %v255
    %v1194 = vunpack.c.l.b16 %v256
    %v1195 = vunpack.c.h.b16 %v256
    %v1196 = vunpack.c.l.b16 %v257
    %v1197 = vunpack.c.h.b16 %v257
    %v1198 = vunpack.c.l.b16 %v258
    %v1199 = vunpack.c.h.b16 %v258
    %v1200 = vunpack.c.l.b16 %v259
    %v1201 = vunpack.c.h.b16 %v259
    %v1202 = vunpack.c.l.b16 %v260
    %v1203 = vunpack.c.h.b16 %v260
    %v1204 = vunpack.c.l.b16 %v261
    %v1205 = vunpack.c.h.b16 %v261
    %v1206 = vunpack.c.l.b16 %v262
    %v1207 = vunpack.c.h.b16 %v262
    %v1208 = vunpack.c.l.b16 %v263
    %v1209 = vunpack.c.h.b16 %v263
    %v1210 = vunpack.c.l.b16 %v264
    %v1211 = vunpack.c.h.b16 %v264
    %v1212 = vunpack.c.l.b16 %v265
    %v1213 = vunpack.c.h.b16 %v265
    %v1214 = vunpack.c.l.b16 %v266
    %v1215 = vunpack.c.h.b16 %v266
    %v1216 = vunpack.c.l.b16 %v267
    %v1217 = vunpack.c.h.b16 %v267
    %v1218 = vunpack.c.l.b16 %v268
    %v1219 = vunpack.c.h.b16 %v268
    %v1220 = vunpack.c.l.b16 %v269
    %v1221 = vunpack.c.h.b16 %v269
    %v1222 = vunpack.c.l.b16 %v270
    %v1223 = vunpack.c.h.b16 %v270
    %v1224 = vunpack.c.l.b16 %v271
    %v1225 = vunpack.c.h.b16 %v271
    %v1226 = vunpack.c.l.b16 %v272
    %v1227 = vunpack.c.h.b16 %v272
    %v1228 = vunpack.c.l.b16 %v273
    %v1229 = vunpack.c.h.b16 %v273
    %v1230 = vunpack.c.l.b16 %v274
    %v1231 = vunpack.c.h.b16 %v274
    %v1232 = vunpack.c.l.b16 %v275
    %v1233 = vunpack.c.h.b16 %v275
    %v1234 = vunpack.c.l.b16 %v276
    %v1235 = vunpack.c.h.b16 %v276
    %v1236 = vunpack.c.l.b16 %v277
    %v1237 = vunpack.c.h.b16 %v277
    %v1238 = vunpack.c.l.b16 %v278
    %v1239 = vunpack.c.h.b16 %v278
    %v1240 = vunpack.c.l.b16 %v279
    %v1241 = vunpack.c.h.b16 %v279
    %v1242 = vunpack.c.l.b16 %v280
    %v1243 = vunpack.c.h.b16 %v280
    %v1244 = vunpack.c.l.b16 %v281
    %v1245 = vunpack.c.h.b16 %v281
    %v1246 = vunpack.c.l.b16 %v282
    %v1247 = vunpack.c.h.b16 %v282
    %v1248 = vunpack.c.l.b16 %v283
    %v1249 = vunpack.c.h.b16 %v283
    %v1250 = vunpack.c.l.b16 %v284
    %v1251 = vunpack.c.h.b16 %v284
    %v1252 = vunpack.c.l.b16 %v285
    %v1253 = vunpack.c.h.b16 %v285
    %v1254 = vunpack.c.l.b16 %v286
    %v1255 = vunpack.c.h.b16 %v286
    %v1256 = vunpack.c.l.b16 %v287
    %v1257 = vunpack.c.h.b16 %v287
    %v1258 = vunpack.c.l.b16 %v288
    %v1259 = vunpack.c.h.b16 %v288
    %v1260 = vunpack.c.l.b16 %v289
    %v1261 = vunpack.c.h.b16 %v289
    %v1262 = vunpack.c.l.b16 %v290
    %v1263 = vunpack.c.h.b16 %v290
    %v1264 = vunpack.c.l.b16 %v291
    %v1265 = vunpack.c.h.b16 %v291
    %v1266 = vunpack.c.l.b16 %v292
    %v1267 = vunpack.c.h.b16 %v292
    %v1268 = vunpack.c.l.b16 %v293
    %v1269 = vunpack.c.h.b16 %v293
    %v1270 = vunpack.c.l.b16 %v294
    %v1271 = vunpack.c.h.b16 %v294
    %v1272 = vunpack.c.l.b16 %v295
    %v1273 = vunpack.c.h.b16 %v295
    %v1274 = vunpack.c.l.b16 %v296
    %v1275 = vunpack.c.h.b16 %v296
    %v1276 = vunpack.c.l.b16 %v297
    %v1277 = vunpack.c.h.b16 %v297
    %v1278 = vunpack.c.l.b16 %v298
    %v1279 = vunpack.c.h.b16 %v298
    %v1280 = vunpack.c.l.b16 %v299
    %v1281 = vunpack.c.h.b16 %v299
    %v1282 = vunpack.c.l.b16 %v300
    %v1283 = vunpack.c.h.b16 %v300
    %v1284 = vunpack.c.l.b16 %v301
    %v1285 = vunpack.c.h.b16 %v301
    %v1286 = vunpack.c.l.b16 %v302
    %v1287 = vunpack.c.h.b16 %v302
    %v1288 = vunpack.c.l.b16 %v303
    %v1289 = vunpack.c.h.b16 %v303
    %v1290 = vunpack.c.l.b16 %v304
    %v1291 = vunpack.c.h.b16 %v304
    %v1292 = vunpack.c.l.b16 %v305
    %v1293 = vunpack.c.h.b16 %v305
    %v1294 = vunpack.c.l.b16 %v306
    %v1295 = vunpack.c.h.b16 %v306
    %v1296 = vunpack.c.l.b16 %v307
    %v1297 = vunpack.c.h.b16 %v307
    %v1298 = vunpack.c.l.b16 %v308
    %v1299 = vunpack.c.h.b16 %v308
    %v1300 = vunpack.c.l.b16 %v309
    %v1301 = vunpack.c.h.b16 %v309
    %v1302 = vunpack.c.l.b16 %v310
    %v1303 = vunpack.c.h.b16 %v310
    %v1304 = vunpack.c.l.b16 %v311
    %v1305 = vunpack.c.h.b16 %v311
    %v1306 = vunpack.c.l.b16 %v312
    %v1307 = vunpack.c.h.b16 %v312
    %v1308 = vunpack.c.l.b16 %v313
    %v1309 = vunpack.c.h.b16 %v313
    %v1310 = vunpack.c.l.b16 %v314
    %v1311 = vunpack.c.h.b16 %v314
    %v1312 = vunpack.c.l.b16 %v315
    %v1313 = vunpack.c.h.b16 %v315
    %v1314 = vunpack.c.l.b16 %v316
    %v1315 = vunpack.c.h.b16 %v316
    %v1316 = vunpack.c.l.b16 %v317
    %v1317 = vunpack.c.h.b16 %v317
    %v1318 = vunpack.c.l.b16 %v318
    %v1319 = vunpack.c.h.b16 %v318
    %v1320 = vunpack.c.l.b16 %v319
    %v1321 = vunpack.c.h.b16 %v319
    %v1322 = vunpack.c.l.b16 %v320
    %v1323 = vunpack.c.h.b16 %v320
    %v1324 = vunpack.c.l.b16 %v321
    %v1325 = vunpack.c.h.b16 %v321
    %v1326 = vunpack.c.l.b16 %v322
    %v1327 = vunpack.c.h.b16 %v322
    %v1328 = vunpack.c.l.b16 %v323
    %v1329 = vunpack.c.h.b16 %v323
    %v1330 = vunpack.c.l.b16 %v324
    %v1331 = vunpack.c.h.b16 %v324
    %v1332 = vunpack.c.l.b16 %v325
    %v1333 = vunpack.c.h.b16 %v325
    %v1334 = vunpack.c.l.b16 %v326
    %v1335 = vunpack.c.h.b16 %v326
    %v1336 = vunpack.c.l.b16 %v327
    %v1337 = vunpack.c.h.b16 %v327
    %v1338 = vunpack.c.l.b16 %v328
    %v1339 = vunpack.c.h.b16 %v328
    %v1340 = vunpack.c.l.b16 %v329
    %v1341 = vunpack.c.h.b16 %v329
    %v1342 = vunpack.c.l.b16 %v330
    %v1343 = vunpack.c.h.b16 %v330
    %v1344 = vunpack.c.l.b16 %v331
    %v1345 = vunpack.c.h.b16 %v331
    %v1346 = vunpack.c.l.b16 %v332
    %v1347 = vunpack.c.h.b16 %v332
    %v1348 = vunpack.c.l.b16 %v333
    %v1349 = vunpack.c.h.b16 %v333
    %v1350 = vunpack.c.l.b16 %v334
    %v1351 = vunpack.c.h.b16 %v334
    %v1352 = vunpack.c.l.b16 %v335
    %v1353 = vunpack.c.h.b16 %v335
    %v1354 = vunpack.c.l.b16 %v336
    %v1355 = vunpack.c.h.b16 %v336
    %v1356 = vunpack.c.l.b16 %v337
    %v1357 = vunpack.c.h.b16 %v337
    %v1358 = vunpack.c.l.b16 %v338
    %v1359 = vunpack.c.h.b16 %v338
    %v1360 = vunpack.c.l.b16 %v339
    %v1361 = vunpack.c.h.b16 %v339
    %v1362 = vunpack.c.l.b16 %v340
    %v1363 = vunpack.c.h.b16 %v340
    %v1364 = vunpack.c.l.b16 %v341
    %v1365 = vunpack.c.h.b16 %v341
    %v1366 = vunpack.c.l.b16 %v342
    %v1367 = vunpack.c.h.b16 %v342
    %v1368 = vunpack.c.l.b16 %v343
    %v1369 = vunpack.c.h.b16 %v343
    %v1370 = vunpack.c.l.b16 %v344
    %v1371 = vunpack.c.h.b16 %v344
    %v1372 = vunpack.c.l.b16 %v345
    %v1373 = vunpack.c.h.b16 %v345
    %v1374 = vunpack.c.l.b16 %v346
    %v1375 = vunpack.c.h.b16 %v346
    %v1376 = vunpack.c.l.b16 %v347
    %v1377 = vunpack.c.h.b16 %v347
    %v1378 = vunpack.c.l.b16 %v348
    %v1379 = vunpack.c.h.b16 %v348
    %v1380 = vunpack.c.l.b16 %v349
    %v1381 = vunpack.c.h.b16 %v349
    %v1382 = vunpack.c.l.b16 %v350
    %v1383 = vunpack.c.h.b16 %v350
    %v1384 = vunpack.c.l.b16 %v351
    %v1385 = vunpack.c.h.b16 %v351
    %v1386 = vunpack.c.l.b16 %v352
    %v1387 = vunpack.c.h.b16 %v352
    %v1388 = vunpack.c.l.b16 %v353
    %v1389 = vunpack.c.h.b16 %v353
    %v1390 = vunpack.c.l.b16 %v354
    %v1391 = vunpack.c.h.b16 %v354
    %v1392 = vunpack.c.l.b16 %v355
    %v1393 = vunpack.c.h.b16 %v355
    %v1394 = vunpack.c.l.b16 %v356
    %v1395 = vunpack.c.h.b16 %v356
    %v1396 = vunpack.c.l.b16 %v357
    %v1397 = vunpack.c.h.b16 %v357
    %v1398 = vunpack.c.l.b16 %v358
    %v1399 = vunpack.c.h.b16 %v358
    %v1400 = vunpack.c.l.b16 %v359
    %v1401 = vunpack.c.h.b16 %v359
    %v1402 = vunpack.c.l.b16 %v360
    %v1403 = vunpack.c.h.b16 %v360
    %v1404 = vunpack.c.l.b16 %v361
    %v1405 = vunpack.c.h.b16 %v361
    %v1406 = vunpack.c.l.b16 %v362
    %v1407 = vunpack.c.h.b16 %v362
    %v1408 = vunpack.c.l.b16 %v363
    %v1409 = vunpack.c.h.b16 %v363
    %v1410 = vunpack.c.l.b16 %v364
    %v1411 = vunpack.c.h.b16 %v364
    %v1412 = vunpack.c.l.b16 %v365
    %v1413 = vunpack.c.h.b16 %v365
    %v1414 = vunpack.c.l.b16 %v366
    %v1415 = vunpack.c.h.b16 %v366
    %v1416 = vunpack.c.l.b16 %v367
    %v1417 = vunpack.c.h.b16 %v367
    %v1418 = vunpack.c.l.b16 %v368
    %v1419 = vunpack.c.h.b16 %v368
    %v1420 = vunpack.c.l.b16 %v369
    %v1421 = vunpack.c.h.b16 %v369
    %v1422 = vunpack.c.l.b16 %v370
    %v1423 = vunpack.c.h.b16 %v370
    %v1424 = vunpack.c.l.b16 %v371
    %v1425 = vunpack.c.h.b16 %v371
    %v1426 = vunpack.c.l.b16 %v372
    %v1427 = vunpack.c.h.b16 %v372
    %v1428 = vunpack.c.l.b16 %v373
    %v1429 = vunpack.c.h.b16 %v373
    %v1430 = vunpack.c.l.b16 %v374
    %v1431 = vunpack.c.h.b16 %v374
    %v1432 = vunpack.c.l.b16 %v375
    %v1433 = vunpack.c.h.b16 %v375
    %v1434 = vunpack.c.l.b16 %v376
    %v1435 = vunpack.c.h.b16 %v376
    %v1436 = vunpack.c.l.b16 %v377
    %v1437 = vunpack.c.h.b16 %v377
    %v1438 = vunpack.c.l.b16 %v378
    %v1439 = vunpack.c.h.b16 %v378
    %v1440 = vunpack.c.l.b16 %v379
    %v1441 = vunpack.c.h.b16 %v379
    %v1442 = vunpack.c.l.b16 %v380
    %v1443 = vunpack.c.h.b16 %v380
    %v1444 = vunpack.c.l.b16 %v381
    %v1445 = vunpack.c.h.b16 %v381
    %v1446 = vunpack.c.l.b16 %v382
    %v1447 = vunpack.c.h.b16 %v382
    %v1448 = vunpack.c.l.b16 %v383
    %v1449 = vunpack.c.h.b16 %v383
    %v1450 = vunpack.c.l.b16 %v384
    %v1451 = vunpack.c.h.b16 %v384
    %v1452 = vunpack.c.l.b16 %v385
    %v1453 = vunpack.c.h.b16 %v385
    %v1454 = vunpack.c.l.b16 %v386
    %v1455 = vunpack.c.h.b16 %v386
    %v1456 = vunpack.c.l.b16 %v387
    %v1457 = vunpack.c.h.b16 %v387
    %v1458 = vunpack.c.l.b16 %v388
    %v1459 = vunpack.c.h.b16 %v388
    %v1460 = vunpack.c.l.b16 %v389
    %v1461 = vunpack.c.h.b16 %v389
    %v1462 = vunpack.c.l.b16 %v390
    %v1463 = vunpack.c.h.b16 %v390
    %v1464 = vunpack.c.l.b16 %v391
    %v1465 = vunpack.c.h.b16 %v391
    %v1466 = vunpack.c.l.b16 %v392
    %v1467 = vunpack.c.h.b16 %v392
    %v1468 = vunpack.c.l.b16 %v393
    %v1469 = vunpack.c.h.b16 %v393
    %v1470 = vunpack.c.l.b16 %v394
    %v1471 = vunpack.c.h.b16 %v394
    %v1472 = vunpack.c.l.b16 %v395
    %v1473 = vunpack.c.h.b16 %v395
    %v1474 = vunpack.c.l.b16 %v396
    %v1475 = vunpack.c.h.b16 %v396
    %v1476 = vunpack.c.l.b16 %v397
    %v1477 = vunpack.c.h.b16 %v397
    %v1478 = vunpack.c.l.b16 %v398
    %v1479 = vunpack.c.h.b16 %v398
    %v1480 = vunpack.c.l.b16 %v399
    %v1481 = vunpack.c.h.b16 %v399
    %v1482 = vunpack.c.l.b16 %v400
    %v1483 = vunpack.c.h.b16 %v400
    %v1484 = vunpack.c.l.b16 %v401
    %v1485 = vunpack.c.h.b16 %v401
    %v1486 = vunpack.c.l.b16 %v402
    %v1487 = vunpack.c.h.b16 %v402
    %v1488 = vunpack.c.l.b16 %v403
    %v1489 = vunpack.c.h.b16 %v403
    %v1490 = vunpack.c.l.b16 %v404
    %v1491 = vunpack.c.h.b16 %v404
    %v1492 = vunpack.c.l.b16 %v405
    %v1493 = vunpack.c.h.b16 %v405
    %v1494 = vunpack.c.l.b16 %v406
    %v1495 = vunpack.c.h.b16 %v406
    %v1496 = vunpack.c.l.b16 %v407
    %v1497 = vunpack.c.h.b16 %v407
    %v1498 = vunpack.c.l.b16 %v408
    %v1499 = vunpack.c.h.b16 %v408
    %v1500 = vunpack.c.l.b16 %v409
    %v1501 = vunpack.c.h.b16 %v409
    %v1502 = vunpack.c.l.b16 %v410
    %v1503 = vunpack.c.h.b16 %v410
    %v1504 = vunpack.c.l.b16 %v411
    %v1505 = vunpack.c.h.b16 %v411
    %v1506 = vunpack.c.l.b16 %v412
    %v1507 = vunpack.c.h.b16 %v412
    %v1508 = vunpack.c.l.b16 %v413
    %v1509 = vunpack.c.h.b16 %v413
    %v1510 = vunpack.c.l.b16 %v414
    %v1511 = vunpack.c.h.b16 %v414
    %v1512 = vunpack.c.l.b16 %v415
    %v1513 = vunpack.c.h.b16 %v415
    %v1514 = vunpack.c.l.b16 %v416
    %v1515 = vunpack.c.h.b16 %v416
    %v1516 = vunpack.c.l.b16 %v417
    %v1517 = vunpack.c.h.b16 %v417
    %v1518 = vunpack.c.l.b16 %v418
    %v1519 = vunpack.c.h.b16 %v418
    %v1520 = vunpack.c.l.b16 %v419
    %v1521 = vunpack.c.h.b16 %v419
    %v1522 = vunpack.c.l.b16 %v420
    %v1523 = vunpack.c.h.b16 %v420
    %v1524 = vunpack.c.l.b16 %v421
    %v1525 = vunpack.c.h.b16 %v421
    %v1526 = vunpack.c.l.b16 %v422
    %v1527 = vunpack.c.h.b16 %v422
    %v1528 = vunpack.c.l.b16 %v423
    %v1529 = vunpack.c.h.b16 %v423
    %v1530 = vunpack.c.l.b16 %v424
    %v1531 = vunpack.c.h.b16 %v424
    %v1532 = vunpack.c.l.b16 %v425
    %v1533 = vunpack.c.h.b16 %v425
    %v1534 = vunpack.c.l.b16 %v426
    %v1535 = vunpack.c.h.b16 %v426
    %v1536 = vunpack.c.l.b16 %v427
    %v1537 = vunpack.c.h.b16 %v427
    %v1538 = vunpack.c.l.b16 %v428
    %v1539 = vunpack.c.h.b16 %v428
    %v1540 = vunpack.c.l.b16 %v429
    %v1541 = vunpack.c.h.b16 %v429
    %v1542 = vunpack.c.l.b16 %v430
    %v1543 = vunpack.c.h.b16 %v430
    %v1544 = vunpack.c.l.b16 %v431
    %v1545 = vunpack.c.h.b16 %v431
    %v1546 = vunpack.c.l.b16 %v432
    %v1547 = vunpack.c.h.b16 %v432
    %v1548 = vunpack.c.l.b16 %v433
    %v1549 = vunpack.c.h.b16 %v433
    %v1550 = vunpack.c.l.b16 %v434
    %v1551 = vunpack.c.h.b16 %v434
    %v1552 = vunpack.c.l.b16 %v435
    %v1553 = vunpack.c.h.b16 %v435
    %v1554 = vunpack.c.l.b16 %v436
    %v1555 = vunpack.c.h.b16 %v436
    %v1556 = vunpack.c.l.b16 %v437
    %v1557 = vunpack.c.h.b16 %v437
    %v1558 = vunpack.c.l.b16 %v438
    %v1559 = vunpack.c.h.b16 %v438
    %v1560 = vunpack.c.l.b16 %v439
    %v1561 = vunpack.c.h.b16 %v439
    %v1562 = vunpack.c.l.b16 %v440
    %v1563 = vunpack.c.h.b16 %v440
    %v1564 = vunpack.c.l.b16 %v441
    %v1565 = vunpack.c.h.b16 %v441
    %v1566 = vunpack.c.l.b16 %v442
    %v1567 = vunpack.c.h.b16 %v442
    %v1568 = vunpack.c.l.b16 %v443
    %v1569 = vunpack.c.h.b16 %v443
    %v1570 = vunpack.c.l.b16 %v444
    %v1571 = vunpack.c.h.b16 %v444
    %v1572 = vunpack.c.l.b16 %v445
    %v1573 = vunpack.c.h.b16 %v445
    %v1574 = vunpack.c.l.b16 %v446
    %v1575 = vunpack.c.h.b16 %v446
    %v1576 = vunpack.c.l.b16 %v447
    %v1577 = vunpack.c.h.b16 %v447
    %v1578 = vunpack.c.l.b16 %v448
    %v1579 = vunpack.c.h.b16 %v448
    %v1580 = vunpack.c.l.b16 %v449
    %v1581 = vunpack.c.h.b16 %v449
    %v1582 = vunpack.c.l.b16 %v450
    %v1583 = vunpack.c.h.b16 %v450
    %v1584 = vunpack.c.l.b16 %v451
    %v1585 = vunpack.c.h.b16 %v451
    %v1586 = vunpack.c.l.b16 %v452
    %v1587 = vunpack.c.h.b16 %v452
    %v1588 = vunpack.c.l.b16 %v453
    %v1589 = vunpack.c.h.b16 %v453
    %v1590 = vunpack.c.l.b16 %v454
    %v1591 = vunpack.c.h.b16 %v454
    %v1592 = vunpack.c.l.b16 %v455
    %v1593 = vunpack.c.h.b16 %v455
    %v1594 = vunpack.c.l.b16 %v456
    %v1595 = vunpack.c.h.b16 %v456
    %v1596 = vunpack.c.l.b16 %v457
    %v1597 = vunpack.c.h.b16 %v457
    %v1598 = vunpack.c.l.b16 %v458
    %v1599 = vunpack.c.h.b16 %v458
    %v1600 = vunpack.c.l.b16 %v459
    %v1601 = vunpack.c.h.b16 %v459
    %v1602 = vunpack.c.l.b16 %v460
    %v1603 = vunpack.c.h.b16 %v460
    %v1604 = vunpack.c.l.b16 %v461
    %v1605 = vunpack.c.h.b16 %v461
    %v1606 = vunpack.c.l.b16 %v462
    %v1607 = vunpack.c.h.b16 %v462
    %v1608 = vunpack.c.l.b16 %v463
    %v1609 = vunpack.c.h.b16 %v463
    %v1610 = vunpack.c.l.b16 %v464
    %v1611 = vunpack.c.h.b16 %v464
    %v1612 = vunpack.c.l.b16 %v465
    %v1613 = vunpack.c.h.b16 %v465
    %v1614 = vunpack.c.l.b16 %v466
    %v1615 = vunpack.c.h.b16 %v466
    %v1616 = vunpack.c.l.b16 %v467
    %v1617 = vunpack.c.h.b16 %v467
    %v1618 = vunpack.c.l.b16 %v468
    %v1619 = vunpack.c.h.b16 %v468
    %v1620 = vunpack.c.l.b16 %v469
    %v1621 = vunpack.c.h.b16 %v469
    %v1622 = vunpack.c.l.b16 %v470
    %v1623 = vunpack.c.h.b16 %v470
    %v1624 = vunpack.c.l.b16 %v471
    %v1625 = vunpack.c.h.b16 %v471
    %v1626 = vunpack.c.l.b16 %v472
    %v1627 = vunpack.c.h.b16 %v472
    %v1628 = vunpack.c.l.b16 %v473
    %v1629 = vunpack.c.h.b16 %v473
    %v1630 = vunpack.c.l.b16 %v474
    %v1631 = vunpack.c.h.b16 %v474
    %v1632 = vunpack.c.l.b16 %v475
    %v1633 = vunpack.c.h.b16 %v475
    %v1634 = vunpack.c.l.b16 %v476
    %v1635 = vunpack.c.h.b16 %v476
    %v1636 = vunpack.c.l.b16 %v477
    %v1637 = vunpack.c.h.b16 %v477
    %v1638 = vunpack.c.l.b16 %v478
    %v1639 = vunpack.c.h.b16 %v478
    %v1640 = vunpack.c.l.b16 %v479
    %v1641 = vunpack.c.h.b16 %v479
    %v1642 = vunpack.c.l.b16 %v480
    %v1643 = vunpack.c.h.b16 %v480
    %v1644 = vunpack.c.l.b16 %v481
    %v1645 = vunpack.c.h.b16 %v481
    %v1646 = vunpack.c.l.b16 %v482
    %v1647 = vunpack.c.h.b16 %v482
    %v1648 = vunpack.c.l.b16 %v483
    %v1649 = vunpack.c.h.b16 %v483
    %v1650 = vunpack.c.l.b16 %v484
    %v1651 = vunpack.c.h.b16 %v484
    %v1652 = vunpack.c.l.b16 %v485
    %v1653 = vunpack.c.h.b16 %v485
    %v1654 = vunpack.c.l.b16 %v486
    %v1655 = vunpack.c.h.b16 %v486
    %v1656 = vunpack.c.l.b16 %v487
    %v1657 = vunpack.c.h.b16 %v487
    %v1658 = vunpack.c.l.b16 %v488
    %v1659 = vunpack.c.h.b16 %v488
    %v1660 = vunpack.c.l.b16 %v489
    %v1661 = vunpack.c.h.b16 %v489
    %v1662 = vunpack.c.l.b16 %v490
    %v1663 = vunpack.c.h.b16 %v490
    %v1664 = vunpack.c.l.b16 %v491
    %v1665 = vunpack.c.h.b16 %v491
    %v1666 = vunpack.c.l.b16 %v492
    %v1667 = vunpack.c.h.b16 %v492
    %v1668 = vunpack.c.l.b16 %v493
    %v1669 = vunpack.c.h.b16 %v493
    %v1670 = vunpack.c.l.b16 %v494
    %v1671 = vunpack.c.h.b16 %v494
    %v1672 = vunpack.c.l.b16 %v495
    %v1673 = vunpack.c.h.b16 %v495
    %v1674 = vunpack.c.l.b16 %v496
    %v1675 = vunpack.c.h.b16 %v496
    %v1676 = vunpack.c.l.b16 %v497
    %v1677 = vunpack.c.h.b16 %v497
    %v1678 = vunpack.c.l.b16 %v498
    %v1679 = vunpack.c.h.b16 %v498
    %v1680 = vunpack.c.l.b16 %v499
    %v1681 = vunpack.c.h.b16 %v499
    %v1682 = vunpack.c.l.b16 %v500
    %v1683 = vunpack.c.h.b16 %v500
    %v1684 = vunpack.c.l.b16 %v501
    %v1685 = vunpack.c.h.b16 %v501
    %v1686 = vunpack.c.l.b16 %v502
    %v1687 = vunpack.c.h.b16 %v502
    %v1688 = vunpack.c.l.b16 %v503
    %v1689 = vunpack.c.h.b16 %v503
    %v1690 = vunpack.c.l.b16 %v504
    %v1691 = vunpack.c.h.b16 %v504
    %v1692 = vunpack.c.l.b16 %v505
    %v1693 = vunpack.c.h.b16 %v505
    %v1694 = vunpack.c.l.b16 %v506
    %v1695 = vunpack.c.h.b16 %v506
    %v1696 = vunpack.c.l.b16 %v507
    %v1697 = vunpack.c.h.b16 %v507
    %v1698 = vunpack.c.l.b16 %v508
    %v1699 = vunpack.c.h.b16 %v508
    %v1700 = vunpack.c.l.b16 %v509
    %v1701 = vunpack.c.h.b16 %v509
    %v1702 = vunpack.c.l.b16 %v510
    %v1703 = vunpack.c.h.b16 %v510
    %v1704 = vunpack.c.l.b16 %v511
    %v1705 = vunpack.c.h.b16 %v511
    %v1706 = vunpack.c.l.b16 %v512
    %v1707 = vunpack.c.h.b16 %v512
    %v1708 = vunpack.c.l.b16 %v513
    %v1709 = vunpack.c.h.b16 %v513
    %v1710 = vunpack.c.l.b16 %v514
    %v1711 = vunpack.c.h.b16 %v514
    %v1712 = vunpack.c.l.b16 %v515
    %v1713 = vunpack.c.h.b16 %v515
    %v1714 = vunpack.c.l.b16 %v516
    %v1715 = vunpack.c.h.b16 %v516
    %v1716 = vunpack.c.l.b16 %v517
    %v1717 = vunpack.c.h.b16 %v517
    %v1718 = vunpack.c.l.b16 %v518
    %v1719 = vunpack.c.h.b16 %v518
    %v1720 = vunpack.c.l.b16 %v519
    %v1721 = vunpack.c.h.b16 %v519
    %v1722 = vunpack.c.l.b16 %v520
    %v1723 = vunpack.c.h.b16 %v520
    %v1724 = vunpack.c.l.b16 %v521
    %v1725 = vunpack.c.h.b16 %v521
    %v1726 = vunpack.c.l.b16 %v522
    %v1727 = vunpack.c.h.b16 %v522
    %v1728 = vunpack.c.l.b16 %v523
    %v1729 = vunpack.c.h.b16 %v523
    %v1730 = vunpack.c.l.b16 %v524
    %v1731 = vunpack.c.h.b16 %v524
    %v1732 = vunpack.c.l.b16 %v525
    %v1733 = vunpack.c.h.b16 %v525
    %v1734 = vunpack.c.l.b16 %v526
    %v1735 = vunpack.c.h.b16 %v526
    %v1736 = vunpack.c.l.b16 %v527
    %v1737 = vunpack.c.h.b16 %v527
    %v1738 = vunpack.c.l.b16 %v528
    %v1739 = vunpack.c.h.b16 %v528
    %v1740 = vunpack.c.l.b16 %v529
    %v1741 = vunpack.c.h.b16 %v529
    %v1742 = vunpack.c.l.b16 %v530
    %v1743 = vunpack.c.h.b16 %v530
    %v1744 = vunpack.c.l.b16 %v531
    %v1745 = vunpack.c.h.b16 %v531
    %v1746 = vunpack.c.l.b16 %v532
    %v1747 = vunpack.c.h.b16 %v532
    %v1748 = vunpack.c.l.b16 %v533
    %v1749 = vunpack.c.h.b16 %v533
    %v1750 = vunpack.c.l.b16 %v534
    %v1751 = vunpack.c.h.b16 %v534
    %v1752 = vunpack.c.l.b16 %v535
    %v1753 = vunpack.c.h.b16 %v535
    %v1754 = vunpack.c.l.b16 %v536
    %v1755 = vunpack.c.h.b16 %v536
    %v1756 = vunpack.c.l.b16 %v537
    %v1757 = vunpack.c.h.b16 %v537
    %v1758 = vunpack.c.l.b16 %v538
    %v1759 = vunpack.c.h.b16 %v538
    %v1760 = vunpack.c.l.b16 %v539
    %v1761 = vunpack.c.h.b16 %v539
    %v1762 = vunpack.c.l.b16 %v540
    %v1763 = vunpack.c.h.b16 %v540
    %v1764 = vunpack.c.l.b16 %v541
    %v1765 = vunpack.c.h.b16 %v541
    %v1766 = vunpack.c.l.b16 %v542
    %v1767 = vunpack.c.h.b16 %v542
    %v1768 = vunpack.c.l.b16 %v543
    %v1769 = vunpack.c.h.b16 %v543
    %v1770 = vunpack.c.l.b16 %v544
    %v1771 = vunpack.c.h.b16 %v544
    %v1772 = vunpack.c.l.b16 %v545
    %v1773 = vunpack.c.h.b16 %v545
    %v1774 = vunpack.c.l.b16 %v546
    %v1775 = vunpack.c.h.b16 %v546
    %v1776 = vunpack.c.l.b16 %v547
    %v1777 = vunpack.c.h.b16 %v547
    %v1778 = vunpack.c.l.b16 %v548
    %v1779 = vunpack.c.h.b16 %v548
    %v1780 = vunpack.c.l.b16 %v549
    %v1781 = vunpack.c.h.b16 %v549
    %v1782 = vunpack.c.l.b16 %v550
    %v1783 = vunpack.c.h.b16 %v550
    %v1784 = vunpack.c.l.b16 %v551
    %v1785 = vunpack.c.h.b16 %v551
    %v1786 = vunpack.c.l.b16 %v552
    %v1787 = vunpack.c.h.b16 %v552
    %v1788 = vunpack.c.l.b16 %v553
    %v1789 = vunpack.c.h.b16 %v553
    %v1790 = vunpack.c.l.b16 %v554
    %v1791 = vunpack.c.h.b16 %v554
    %v1792 = vunpack.c.l.b16 %v555
    %v1793 = vunpack.c.h.b16 %v555
    %v1794 = vunpack.c.l.b16 %v556
    %v1795 = vunpack.c.h.b16 %v556
    %v1796 = vunpack.c.l.b16 %v557
    %v1797 = vunpack.c.h.b16 %v557
    %v1798 = vunpack.c.l.b16 %v558
    %v1799 = vunpack.c.h.b16 %v558
    %v1800 = vunpack.c.l.b16 %v559
    %v1801 = vunpack.c.h.b16 %v559
    %v1802 = vpack.c.b16 %v1026, %v1018
    %v1803 = vpack.c.b16 %v1027, %v1019
    %v1804 = vpack.c.b16 %v1028, %v1020
    %v1805 = vpack.c.b16 %v1029, %v1021
    %v1806 = vpack.c.b16 %v1030, %v1022
    %v1807 = vpack.c.b16 %v1031, %v1023
    %v1808 = vpack.c.b16 %v1032, %v1024
    %v1809 = vpack.c.b16 %v1033, %v1025
    %v1810 = vpack.c.b16 %v1042, %v1034
    %v1811 = vpack.c.b16 %v1043, %v1035
    %v1812 = vpack.c.b16 %v1044, %v1036
    %v1813 = vpack.c.b16 %v1045, %v1037
    %v1814 = vpack.c.b16 %v1046, %v1038
    %v1815 = vpack.c.b16 %v1047, %v1039
    %v1816 = vpack.c.b16 %v1048, %v1040
    %v1817 = vpack.c.b16 %v1049, %v1041
    %v1818 = vpack.c.b16 %v1058, %v1050
    %v1819 = vpack.c.b16 %v1059, %v1051
    %v1820 = vpack.c.b16 %v1060, %v1052
    %v1821 = vpack.c.b16 %v1061, %v1053
    %v1822 = vpack.c.b16 %v1062, %v1054
    %v1823 = vpack.c.b16 %v1063, %v1055
    %v1824 = vpack.c.b16 %v1064, %v1056
    %v1825 = vpack.c.b16 %v1065, %v1057
    %v1826 = vpack.c.b16 %v1074, %v1066
    %v1827 = vpack.c.b16 %v1075, %v1067
    %v1828 = vpack.c.b16 %v1076, %v1068
    %v1829 = vpack.c.b16 %v1077, %v1069
    %v1830 = vpack.c.b16 %v1078, %v1070
    %v1831 = vpack.c.b16 %v1079, %v1071
    %v1832 = vpack.c.b16 %v1080, %v1072
    %v1833 = vpack.c.b16 %v1081, %v1073
    %v1834 = vpack.c.b16 %v1090, %v1082
    %v1835 = vpack.c.b16 %v1091, %v1083
    %v1836 = vpack.c.b16 %v1092, %v1084
    %v1837 = vpack.c.b16 %v1093, %v1085
    %v1838 = vpack.c.b16 %v1094, %v1086
    %v1839 = vpack.c.b16 %v1095, %v1087
    %v1840 = vpack.c.b16 %v1096, %v1088
    %v1841 = vpack.c.b16 %v1097, %v1089
    %v1842 = vpack.c.b16 %v1106, %v1098
    %v1843 = vpack.c.b16 %v1107, %v1099
    %v1844 = vpack.c.b16 %v1108, %v1100
    %v1845 = vpack.c.b16 %v1109, %v1101
    %v1846 = vpack.c.b16 %v1110, %v1102
    %v1847 = vpack.c.b16 %v1111, %v1103
    %v1848 = vpack.c.b16 %v1112, %v1104
    %v1849 = vpack.c.b16 %v1113, %v1105
    %v1850 = vpack.c.b16 %v1122, %v1114
    %v1851 = vpack.c.b16 %v1123, %v1115
    %v1852 = vpack.c.b16 %v1124, %v1116
    %v1853 = vpack.c.b16 %v1125, %v1117
    %v1854 = vpack.c.b16 %v1126, %v1118
    %v1855 = vpack.c.b16 %v1127, %v1119
    %v1856 = vpack.c.b16 %v1128, %v1120
    %v1857 = vpack.c.b16 %v1129, %v1121
    %v1858 = vpack.c.b16 %v1138, %v1130
    %v1859 = vpack.c.b16 %v1139, %v1131
    %v1860 = vpack.c.b16 %v1140, %v1132
    %v1861 = vpack.c.b16 %v1141, %v1133
    %v1862 = vpack.c.b16 %v1142, %v1134
    %v1863 = vpack.c.b16 %v1143, %v1135
    %v1864 = vpack.c.b16 %v1144, %v1136
    %v1865 = vpack.c.b16 %v1145, %v1137
    %v1866 = vpack.c.b16 %v1154, %v1146
    %v1867 = vpack.c.b16 %v1155, %v1147
    %v1868 = vpack.c.b16 %v1156, %v1148
    %v1869 = vpack.c.b16 %v1157, %v1149
    %v1870 = vpack.c.b16 %v1158, %v1150
    %v1871 = vpack.c.b16 %v1159, %v1151
    %v1872 = vpack.c.b16 %v1160, %v1152
    %v1873 = vpack.c.b16 %v1161, %v1153
    %v1874 = vpack.c.b16 %v1170, %v1162
    %v1875 = vpack.c.b16 %v1171, %v1163
    %v1876 = vpack.c.b16 %v1172, %v1164
    %v1877 = vpack.c.b16 %v1173, %v1165
    %v1878 = vpack.c.b16 %v1174, %v1166
    %v1879 = vpack.c.b16 %v1175, %v1167
    %v1880 = vpack.c.b16 %v1176, %v1168
    %v1881 = vpack.c.b16 %v1177, %v1169
    %v1882 = vpack.c.b16 %v1186, %v1178
    %v1883 = vpack.c.b16 %v1187, %v1179
    %v1884 = vpack.c.b16 %v1188, %v1180
    %v1885 = vpack.c.b16 %v1189, %v1181
    %v1886 = vpack.c.b16 %v1190, %v1182
    %v1887 = vpack.c.b16 %v1191, %v1183
    %v1888 = vpack.c.b16 %v1192, %v1184
    %v1889 = vpack.c.b16 %v1193, %v1185
    %v1890 = vpack.c.b16 %v1202, %v1194
    %v1891 = vpack.c.b16 %v1203, %v1195
    %v1892 = vpack.c.b16 %v1204, %v1196
    %v1893 = vpack.c.b16 %v1205, %v1197
    %v1894 = vpack.c.b16 %v1206, %v1198
    %v1895 = vpack.c.b16 %v1207, %v1199
    %v1896 = vpack.c.b16 %v1208, %v1200
    %v1897 = vpack.c.b16 %v1209, %v1201
    %v1898 = vpack.c.b16 %v1218, %v1210
    %v1899 = vpack.c.b16 %v1219, %v1211
    %v1900 = vpack.c.b16 %v1220, %v1212
    %v1901 = vpack.c.b16 %v1221, %v1213
    %v1902 = vpack.c.b16 %v1222, %v1214
    %v1903 = vpack.c.b16 %v1223, %v1215
    %v1904 = vpack.c.b16 %v1224, %v1216
    %v1905 = vpack.c.b16 %v1225, %v1217
    %v1906 = vpack.c.b16 %v1234, %v1226
    %v1907 = vpack.c.b16 %v1235, %v1227
    %v1908 = vpack.c.b16 %v1236, %v1228
    %v1909 = vpack.c.b16 %v1237, %v1229
    %v1910 = vpack.c.b16 %v1238, %v1230
    %v1911 = vpack.c.b16 %v1239, %v1231
    %v1912 = vpack.c.b16 %v1240, %v1232
    %v1913 = vpack.c.b16 %v1241, %v1233
    %v1914 = vpack.c.b16 %v1250, %v1242
    %v1915 = vpack.c.b16 %v1251, %v1243
    %v1916 = vpack.c.b16 %v1252, %v1244
    %v1917 = vpack.c.b16 %v1253, %v1245
    %v1918 = vpack.c.b16 %v1254, %v1246
    %v1919 = vpack.c.b16 %v1255, %v1247
    %v1920 = vpack.c.b16 %v1256, %v1248
    %v1921 = vpack.c.b16 %v1257, %v1249
    %v1922 = vpack.c.b16 %v1266, %v1258
    %v1923 = vpack.c.b16 %v1267, %v1259
    %v1924 = vpack.c.b16 %v1268, %v1260
    %v1925 = vpack.c.b16 %v1269, %v1261
    %v1926 = vpack.c.b16 %v1270, %v1262
    %v1927 = vpack.c.b16 %v1271, %v1263
    %v1928 = vpack.c.b16 %v1272, %v1264
    %v1929 = vpack.c.b16 %v1273, %v1265
    %v1930 = vpack.c.b16 %v1282, %v1274
    %v1931 = vpack.c.b16 %v1283, %v1275
    %v1932 = vpack.c.b16 %v1284, %v1276
    %v1933 = vpack.c.b16 %v1285, %v1277
    %v1934 = vpack.c.b16 %v1286, %v1278
    %v1935 = vpack.c.b16 %v1287, %v1279
    %v1936 = vpack.c.b16 %v1288, %v1280
    %v1937 = vpack.c.b16 %v1289, %v1281
    %v1938 = vpack.c.b16 %v1298, %v1290
    %v1939 = vpack.c.b16 %v1299, %v1291
    %v1940 = vpack.c.b16 %v1300, %v1292
    %v1941 = vpack.c.b16 %v1301, %v1293
    %v1942 = vpack.c.b16 %v1302, %v1294
    %v1943 = vpack.c.b16 %v1303, %v1295
    %v1944 = vpack.c.b16 %v1304, %v1296
    %v1945 = vpack.c.b16 %v1305, %v1297
    %v1946 = vpack.c.b16 %v1314, %v1306
    %v1947 = vpack.c.b16 %v1315, %v1307
    %v1948 = vpack.c.b16 %v1316, %v1308
    %v1949 = vpack.c.b16 %v1317, %v1309
    %v1950 = vpack.c.b16 %v1318, %v1310
    %v1951 = vpack.c.b16 %v1319, %v1311
    %v1952 = vpack.c.b16 %v1320, %v1312
    %v1953 = vpack.c.b16 %v1321, %v1313
    %v1954 = vpack.c.b16 %v1330, %v1322
    %v1955 = vpack.c.b16 %v1331, %v1323
    %v1956 = vpack.c.b16 %v1332, %v1324
    %v1957 = vpack.c.b16 %v1333, %v1325
    %v1958 = vpack.c.b16 %v1334, %v1326
    %v1959 = vpack.c.b16 %v1335, %v1327
    %v1960 = vpack.c.b16 %v1336, %v1328
    %v1961 = vpack.c.b16 %v1337, %v1329
    %v1962 = vpack.c.b16 %v1346, %v1338
    %v1963 = vpack.c.b16 %v1347, %v1339
    %v1964 = vpack.c.b16 %v1348, %v1340
    %v1965 = vpack.c.b16 %v1349, %v1341
    %v1966 = vpack.c.b16 %v1350, %v1342
    %v1967 = vpack.c.b16 %v1351, %v1343
    %v1968 = vpack.c.b16 %v1352, %v1344
    %v1969 = vpack.c.b16 %v1353, %v1345
    %v1970 = vpack.c.b16 %v1362, %v1354
    %v1971 = vpack.c.b16 %v1363, %v1355
    %v1972 = vpack.c.b16 %v1364, %v1356
    %v1973 = vpack.c.b16 %v1365, %v1357
    %v1974 = vpack.c.b16 %v1366, %v1358
    %v1975 = vpack.c.b16 %v1367, %v1359
    %v1976 = vpack.c.b16 %v1368, %v1360
    %v1977 = vpack.c.b16 %v1369, %v1361
    %v1978 = vpack.c.b16 %v1378, %v1370
    %v1979 = vpack.c.b16 %v1379, %v1371
    %v1980 = vpack.c.b16 %v1380, %v1372
    %v1981 = vpack.c.b16 %v1381, %v1373
    %v1982 = vpack.c.b16 %v1382, %v1374
    %v1983 = vpack.c.b16 %v1383, %v1375
    %v1984 = vpack.c.b16 %v1384, %v1376
    %v1985 = vpack.c.b16 %v1385, %v1377
    %v1986 = vpack.c.b16 %v1394, %v1386
    %v1987 = vpack.c.b16 %v1395, %v1387
    %v1988 = vpack.c.b16 %v1396, %v1388
    %v1989 = vpack.c.b16 %v1397, %v1389
    %v1990 = vpack.c.b16 %v1398, %v1390
    %v1991 = vpack.c.b16 %v1399, %v1391
    %v1992 = vpack.c.b16 %v1400, %v1392
    %v1993 = vpack.c.b16 %v1401, %v1393
    %v1994 = vpack.c.b16 %v1410, %v1402
    %v1995 = vpack.c.b16 %v1411, %v1403
    %v1996 = vpack.c.b16 %v1412, %v1404
    %v1997 = vpack.c.b16 %v1413, %v1405
    %v1998 = vpack.c.b16 %v1414, %v1406
    %v1999 = vpack.c.b16 %v1415, %v1407
    %v2000 = vpack.c.b16 %v1416, %v1408
    %v2001 = vpack.c.b16 %v1417, %v1409
    %v2002 = vpack.c.b16 %v1426, %v1418
    %v2003 = vpack.c.b16 %v1427, %v1419
    %v2004 = vpack.c.b16 %v1428, %v1420
    %v2005 = vpack.c.b16 %v1429, %v1421
    %v2006 = vpack.c.b16 %v1430, %v1422
    %v2007 = vpack.c.b16 %v1431, %v1423
    %v2008 = vpack.c.b16 %v1432, %v1424
    %v2009 = vpack.c.b16 %v1433, %v1425
    %v2010 = vpack.c.b16 %v1442, %v1434
    %v2011 = vpack.c.b16 %v1443, %v1435
    %v2012 = vpack.c.b16 %v1444, %v1436
    %v2013 = vpack.c.b16 %v1445, %v1437
    %v2014 = vpack.c.b16 %v1446, %v1438
    %v2015 = vpack.c.b16 %v1447, %v1439
    %v2016 = vpack.c.b16 %v1448, %v1440
    %v2017 = vpack.c.b16 %v1449, %v1441
    %v2018 = vpack.c.b16 %v1458, %v1450
    %v2019 = vpack.c.b16 %v1459, %v1451
    %v2020 = vpack.c.b16 %v1460, %v1452
    %v2021 = vpack.c.b16 %v1461, %v1453
    %v2022 = vpack.c.b16 %v1462, %v1454
    %v2023 = vpack.c.b16 %v1463, %v1455
    %v2024 = vpack.c.b16 %v1464, %v1456
    %v2025 = vpack.c.b16 %v1465, %v1457
    %v2026 = vpack.c.b16 %v1474, %v1466
    %v2027 = vpack.c.b16 %v1475, %v1467
    %v2028 = vpack.c.b16 %v1476, %v1468
    %v2029 = vpack.c.b16 %v1477, %v1469
    %v2030 = vpack.c.b16 %v1478, %v1470
    %v2031 = vpack.c.b16 %v1479, %v1471
    %v2032 = vpack.c.b16 %v1480, %v1472
    %v2033 = vpack.c.b16 %v1481, %v1473
    %v2034 = vpack.c.b16 %v1490, %v1482
    %v2035 = vpack.c.b16 %v1491, %v1483
    %v2036 = vpack.c.b16 %v1492, %v1484
    %v2037 = vpack.c.b16 %v1493, %v1485
    %v2038 = vpack.c.b16 %v1494, %v1486
    %v2039 = vpack.c.b16 %v1495, %v1487
    %v2040 = vpack.c.b16 %v1496, %v1488
    %v2041 = vpack.c.b16 %v1497, %v1489
    %v2042 = vpack.c.b16 %v1506, %v1498
    %v2043 = vpack.c.b16 %v1507, %v1499
    %v2044 = vpack.c.b16 %v1508, %v1500
    %v2045 = vpack.c.b16 %v1509, %v1501
    %v2046 = vpack.c.b16 %v1510, %v1502
    %v2047 = vpack.c.b16 %v1511, %v1503
    %v2048 = vpack.c.b16 %v1512, %v1504
    %v2049 = vpack.c.b16 %v1513, %v1505
    %v2050 = vpack.c.b16 %v1522, %v1514
    %v2051 = vpack.c.b16 %v1523, %v1515
    %v2052 = vpack.c.b16 %v1524, %v1516
    %v2053 = vpack.c.b16 %v1525, %v1517
    %v2054 = vpack.c.b16 %v1526, %v1518
    %v2055 = vpack.c.b16 %v1527, %v1519
    %v2056 = vpack.c.b16 %v1528, %v1520
    %v2057 = vpack.c.b16 %v1529, %v1521
    %v2058 = vpack.c.b16 %v1538, %v1530
    %v2059 = vpack.c.b16 %v1539, %v1531
    %v2060 = vpack.c.b16 %v1540, %v1532
    %v2061 = vpack.c.b16 %v1541, %v1533
    %v2062 = vpack.c.b16 %v1542, %v1534
    %v2063 = vpack.c.b16 %v1543, %v1535
    %v2064 = vpack.c.b16 %v1544, %v1536
    %v2065 = vpack.c.b16 %v1545, %v1537
    %v2066 = vpack.c.b16 %v1554, %v1546
    %v2067 = vpack.c.b16 %v1555, %v1547
    %v2068 = vpack.c.b16 %v1556, %v1548
    %v2069 = vpack.c.b16 %v1557, %v1549
    %v2070 = vpack.c.b16 %v1558, %v1550
    %v2071 = vpack.c.b16 %v1559, %v1551
    %v2072 = vpack.c.b16 %v1560, %v1552
    %v2073 = vpack.c.b16 %v1561, %v1553
    %v2074 = vpack.c.b16 %v1570, %v1562
    %v2075 = vpack.c.b16 %v1571, %v1563
    %v2076 = vpack.c.b16 %v1572, %v1564
    %v2077 = vpack.c.b16 %v1573, %v1565
    %v2078 = vpack.c.b16 %v1574, %v1566
    %v2079 = vpack.c.b16 %v1575, %v1567
    %v2080 = vpack.c.b16 %v1576, %v1568
    %v2081 = vpack.c.b16 %v1577, %v1569
    %v2082 = vpack.c.b16 %v1586, %v1578
    %v2083 = vpack.c.b16 %v1587, %v1579
    %v2084 = vpack.c.b16 %v1588, %v1580
    %v2085 = vpack.c.b16 %v1589, %v1581
    %v2086 = vpack.c.b16 %v1590, %v1582
    %v2087 = vpack.c.b16 %v1591, %v1583
    %v2088 = vpack.c.b16 %v1592, %v1584
    %v2089 = vpack.c.b16 %v1593, %v1585
    %v2090 = vpack.c.b16 %v1602, %v1594
    %v2091 = vpack.c.b16 %v1603, %v1595
    %v2092 = vpack.c.b16 %v1604, %v1596
    %v2093 = vpack.c.b16 %v1605, %v1597
    %v2094 = vpack.c.b16 %v1606, %v1598
    %v2095 = vpack.c.b16 %v1607, %v1599
    %v2096 = vpack.c.b16 %v1608, %v1600
    %v2097 = vpack.c.b16 %v1609, %v1601
    %v2098 = vpack.c.b16 %v1618, %v1610
    %v2099 = vpack.c.b16 %v1619, %v1611
    %v2100 = vpack.c.b16 %v1620, %v1612
    %v2101 = vpack.c.b16 %v1621, %v1613
    %v2102 = vpack.c.b16 %v1622, %v1614
    %v2103 = vpack.c.b16 %v1623, %v1615
    %v2104 = vpack.c.b16 %v1624, %v1616
    %v2105 = vpack.c.b16 %v1625, %v1617
    %v2106 = vpack.c.b16 %v1634, %v1626
    %v2107 = vpack.c.b16 %v1635, %v1627
    %v2108 = vpack.c.b16 %v1636, %v1628
    %v2109 = vpack.c.b16 %v1637, %v1629
    %v2110 = vpack.c.b16 %v1638, %v1630
    %v2111 = vpack.c.b16 %v1639, %v1631
    %v2112 = vpack.c.b16 %v1640, %v1632
    %v2113 = vpack.c.b16 %v1641, %v1633
    %v2114 = vpack.c.b16 %v1650, %v1642
    %v2115 = vpack.c.b16 %v1651, %v1643
    %v2116 = vpack.c.b16 %v1652, %v1644
    %v2117 = vpack.c.b16 %v1653, %v1645
    %v2118 = vpack.c.b16 %v1654, %v1646
    %v2119 = vpack.c.b16 %v1655, %v1647
    %v2120 = vpack.c.b16 %v1656, %v1648
    %v2121 = vpack.c.b16 %v1657, %v1649
    %v2122 = vpack.c.b16 %v1666, %v1658
    %v2123 = vpack.c.b16 %v1667, %v1659
    %v2124 = vpack.c.b16 %v1668, %v1660
    %v2125 = vpack.c.b16 %v1669, %v1661
    %v2126 = vpack.c.b16 %v1670, %v1662
    %v2127 = vpack.c.b16 %v1671, %v1663
    %v2128 = vpack.c.b16 %v1672, %v1664
    %v2129 = vpack.c.b16 %v1673, %v1665
    %v2130 = vpack.c.b16 %v1682, %v1674
    %v2131 = vpack.c.b16 %v1683, %v1675
    %v2132 = vpack.c.b16 %v1684, %v1676
    %v2133 = vpack.c.b16 %v1685, %v1677
    %v2134 = vpack.c.b16 %v1686, %v1678
    %v2135 = vpack.c.b16 %v1687, %v1679
    %v2136 = vpack.c.b16 %v1688, %v1680
    %v2137 = vpack.c.b16 %v1689, %v1681
    %v2138 = vpack.c.b16 %v1698, %v1690
    %v2139 = vpack.c.b16 %v1699, %v1691
    %v2140 = vpack.c.b16 %v1700, %v1692
    %v2141 = vpack.c.b16 %v1701, %v1693
    %v2142 = vpack.c.b16 %v1702, %v1694
    %v2143 = vpack.c.b16 %v1703, %v1695
    %v2144 = vpack.c.b16 %v1704, %v1696
    %v2145 = vpack.c.b16 %v1705, %v1697
    %v2146 = vpack.c.b16 %v1714, %v1706
    %v2147 = vpack.c.b16 %v1715, %v1707
    %v2148 = vpack.c.b16 %v1716, %v1708
    %v2149 = vpack.c.b16 %v1717, %v1709
    %v2150 = vpack.c.b16 %v1718, %v1710
    %v2151 = vpack.c.b16 %v1719, %v1711
    %v2152 = vpack.c.b16 %v1720, %v1712
    %v2153 = vpack.c.b16 %v1721, %v1713
    %v2154 = vpack.c.b16 %v1730, %v1722
    %v2155 = vpack.c.b16 %v1731, %v1723
    %v2156 = vpack.c.b16 %v1732, %v1724
    %v2157 = vpack.c.b16 %v1733, %v1725
    %v2158 = vpack.c.b16 %v1734, %v1726
    %v2159 = vpack.c.b16 %v1735, %v1727
    %v2160 = vpack.c.b16 %v1736, %v1728
    %v2161 = vpack.c.b16 %v1737, %v1729
    %v2162 = vpack.c.b16 %v1746, %v1738
    %v2163 = vpack.c.b16 %v1747, %v1739
    %v2164 = vpack.c.b16 %v1748, %v1740
    %v2165 = vpack.c.b16 %v1749, %v1741
    %v2166 = vpack.c.b16 %v1750, %v1742
    %v2167 = vpack.c.b16 %v1751, %v1743
    %v2168 = vpack.c.b16 %v1752, %v1744
    %v2169 = vpack.c.b16 %v1753, %v1745
    %v2170 = vpack.c.b16 %v1762, %v1754
    %v2171 = vpack.c.b16 %v1763, %v1755
    %v2172 = vpack.c.b16 %v1764, %v1756
    %v2173 = vpack.c.b16 %v1765, %v1757
    %v2174 = vpack.c.b16 %v1766, %v1758
    %v2175 = vpack.c.b16 %v1767, %v1759
    %v2176 = vpack.c.b16 %v1768, %v1760
    %v2177 = vpack.c.b16 %v1769, %v1761
    %v2178 = vpack.c.b16 %v1778, %v1770
    %v2179 = vpack.c.b16 %v1779, %v1771
    %v2180 = vpack.c.b16 %v1780, %v1772
    %v2181 = vpack.c.b16 %v1781, %v1773
    %v2182 = vpack.c.b16 %v1782, %v1774
    %v2183 = vpack.c.b16 %v1783, %v1775
    %v2184 = vpack.c.b16 %v1784, %v1776
    %v2185 = vpack.c.b16 %v1785, %v1777
    %v2186 = vpack.c.b16 %v1794, %v1786
    %v2187 = vpack.c.b16 %v1795, %v1787
    %v2188 = vpack.c.b16 %v1796, %v1788
    %v2189 = vpack.c.b16 %v1797, %v1789
    %v2190 = vpack.c.b16 %v1798, %v1790
    %v2191 = vpack.c.b16 %v1799, %v1791
    %v2192 = vpack.c.b16 %v1800, %v1792
    %v2193 = vpack.c.b16 %v1801, %v1793
    %vm2586 = vcmask 130048
    %v2588 = vsel %vm2586, %v619, 0
    %2590 = vmatprep.subr.bf16.mxu0 %v1803
    %2591 = vmatpush1.bf16.msra.mxu0 %v1802
    %2592 = vmatprep.subr.bf16.mxu0 %v1811
    %2593 = vmatpush1.bf16.msra.mxu0 %v1810
    %2594 = vmatprep.subr.bf16.mxu0 %v1819
    %2595 = vmatpush1.bf16.msra.mxu0 %v1818
    %2596 = vmatprep.subr.bf16.mxu0 %v1827
    %2597 = vmatpush1.bf16.msra.mxu0 %v1826
    %2598 = vmatprep.subr.bf16.mxu0 %v1835
    %2599 = vmatpush1.bf16.msra.mxu0 %v1834
    %2600 = vmatprep.subr.bf16.mxu0 %v1843
    %2601 = vmatpush1.bf16.msra.mxu0 %v1842
    %2602 = vmatprep.subr.bf16.mxu0 %v1851
    %2603 = vmatpush1.bf16.msra.mxu0 %v1850
    %2604 = vmatprep.subr.bf16.mxu0 %v1859
    %2605 = vmatpush1.bf16.msra.mxu0 %v1858
    %2606 = vmatprep.subr.bf16.mxu0 %v1867
    %2607 = vmatpush1.bf16.msra.mxu0 %v1866
    %2608 = vmatprep.subr.bf16.mxu0 %v1875
    %2609 = vmatpush1.bf16.msra.mxu0 %v1874
    %2610 = vmatprep.subr.bf16.mxu0 %v1883
    %2611 = vmatpush1.bf16.msra.mxu0 %v1882
    %2612 = vmatprep.subr.bf16.mxu0 %v1891
    %2613 = vmatpush1.bf16.msra.mxu0 %v1890
    %2614 = vmatprep.subr.bf16.mxu0 %v1899
    %2615 = vmatpush1.bf16.msra.mxu0 %v1898
    %2616 = vmatprep.subr.bf16.mxu0 %v1907
    %2617 = vmatpush1.bf16.msra.mxu0 %v1906
    %2618 = vmatprep.subr.bf16.mxu0 %v1915
    %2619 = vmatpush1.bf16.msra.mxu0 %v1914
    %2620 = vmatprep.subr.bf16.mxu0 %v1923
    %2621 = vmatpush1.bf16.msra.mxu0 %v1922
    %2622 = vmatprep.mubr.bf16.mxu0 %v614
    %2623 = vmatmul.mubr.bf16.gmra.mrb[0].mxu0 %v613
    %v2624 = vpop.f32.mrb[0].mxu0
    %v2625 = vadd.f32 %v565, %v2624
    %v2626 = vpop.f32.mrb[0].mxu0
    %v2627 = vadd.f32 %v569, %v2626
    %v2628 = vpop.f32.mrb[0].mxu0
    %v2629 = vpop.f32.mrb[0].mxu0
    %2630 = vdwg.mxu0
    %2631 = vmatprep.subr.bf16.mxu0 %v1931
    %2632 = vmatpush1.bf16.msra.mxu0 %v1930
    %2633 = vmatprep.subr.bf16.mxu0 %v1939
    %2634 = vmatpush1.bf16.msra.mxu0 %v1938
    %2635 = vmatprep.subr.bf16.mxu0 %v1947
    %2636 = vmatpush1.bf16.msra.mxu0 %v1946
    %2637 = vmatprep.subr.bf16.mxu0 %v1955
    %2638 = vmatpush1.bf16.msra.mxu0 %v1954
    %2639 = vmatprep.subr.bf16.mxu0 %v1963
    %2640 = vmatpush1.bf16.msra.mxu0 %v1962
    %2641 = vmatprep.subr.bf16.mxu0 %v1971
    %2642 = vmatpush1.bf16.msra.mxu0 %v1970
    %2643 = vmatprep.subr.bf16.mxu0 %v1979
    %2644 = vmatpush1.bf16.msra.mxu0 %v1978
    %2645 = vmatprep.subr.bf16.mxu0 %v1987
    %2646 = vmatpush1.bf16.msra.mxu0 %v1986
    %2647 = vmatprep.subr.bf16.mxu0 %v1995
    %2648 = vmatpush1.bf16.msra.mxu0 %v1994
    %2649 = vmatprep.subr.bf16.mxu0 %v2003
    %2650 = vmatpush1.bf16.msra.mxu0 %v2002
    %2651 = vmatprep.subr.bf16.mxu0 %v2011
    %2652 = vmatpush1.bf16.msra.mxu0 %v2010
    %2653 = vmatprep.subr.bf16.mxu0 %v2019
    %2654 = vmatpush1.bf16.msra.mxu0 %v2018
    %2655 = vmatprep.subr.bf16.mxu0 %v2027
    %2656 = vmatpush1.bf16.msra.mxu0 %v2026
    %2657 = vmatprep.subr.bf16.mxu0 %v2035
    %2658 = vmatpush1.bf16.msra.mxu0 %v2034
    %2659 = vmatprep.subr.bf16.mxu0 %v2043
    %2660 = vmatpush1.bf16.msra.mxu0 %v2042
    %2661 = vmatprep.subr.bf16.mxu0 %v2051
    %2662 = vmatpush1.bf16.msra.mxu0 %v2050
    %2663 = vmatprep.mubr.bf16.mxu0 %v616
    %2664 = vmatmul.mubr.bf16.gmra.mrb[0].mxu0 %v615
    %v2665 = vpop.f32.mrb[0].mxu0
    %v2666 = vadd.f32 %v2625, %v2665
    %v2667 = vpop.f32.mrb[0].mxu0
    %v2668 = vadd.f32 %v2627, %v2667
    %v2669 = vpop.f32.mrb[0].mxu0
    %v2670 = vpop.f32.mrb[0].mxu0
    %2671 = vdwg.mxu0
    %2672 = vmatprep.subr.bf16.mxu0 %v2059
    %2673 = vmatpush1.bf16.msra.mxu0 %v2058
    %2674 = vmatprep.subr.bf16.mxu0 %v2067
    %2675 = vmatpush1.bf16.msra.mxu0 %v2066
    %2676 = vmatprep.subr.bf16.mxu0 %v2075
    %2677 = vmatpush1.bf16.msra.mxu0 %v2074
    %2678 = vmatprep.subr.bf16.mxu0 %v2083
    %2679 = vmatpush1.bf16.msra.mxu0 %v2082
    %2680 = vmatprep.subr.bf16.mxu0 %v2091
    %2681 = vmatpush1.bf16.msra.mxu0 %v2090
    %2682 = vmatprep.subr.bf16.mxu0 %v2099
    %2683 = vmatpush1.bf16.msra.mxu0 %v2098
    %2684 = vmatprep.subr.bf16.mxu0 %v2107
    %2685 = vmatpush1.bf16.msra.mxu0 %v2106
    %2686 = vmatprep.subr.bf16.mxu0 %v2115
    %2687 = vmatpush1.bf16.msra.mxu0 %v2114
    %2688 = vmatprep.subr.bf16.mxu0 %v2123
    %2689 = vmatpush1.bf16.msra.mxu0 %v2122
    %2690 = vmatprep.subr.bf16.mxu0 %v2131
    %2691 = vmatpush1.bf16.msra.mxu0 %v2130
    %2692 = vmatprep.subr.bf16.mxu0 %v2139
    %2693 = vmatpush1.bf16.msra.mxu0 %v2138
    %2694 = vmatprep.subr.bf16.mxu0 %v2147
    %2695 = vmatpush1.bf16.msra.mxu0 %v2146
    %2696 = vmatprep.subr.bf16.mxu0 %v2155
    %2697 = vmatpush1.bf16.msra.mxu0 %v2154
    %2698 = vmatprep.subr.bf16.mxu0 %v2163
    %2699 = vmatpush1.bf16.msra.mxu0 %v2162
    %2700 = vmatprep.subr.bf16.mxu0 %v2171
    %2701 = vmatpush1.bf16.msra.mxu0 %v2170
    %2702 = vmatprep.subr.bf16.mxu0 %v2179
    %2703 = vmatpush1.bf16.msra.mxu0 %v2178
    %2704 = vmatprep.mubr.bf16.mxu0 %v618
    %2705 = vmatmul.mubr.bf16.gmra.mrb[0].mxu0 %v617
    %v2706 = vpop.f32.mrb[0].mxu0
    %v2707 = vadd.f32 %v2666, %v2706
    %v2708 = vpop.f32.mrb[0].mxu0
    %v2709 = vadd.f32 %v2668, %v2708
    %v2710 = vpop.f32.mrb[0].mxu0
    %v2711 = vpop.f32.mrb[0].mxu0
    %2712 = vdwg.mxu0
    %2713 = vmatprep.subr.bf16.mxu0 %v2187
    %2714 = vmatpush1.bf16.msra.mxu0 %v2186
    %2715 = vmatprep.subr.bf16.mxu0 0
    %2716 = vmatpush1.bf16.msra.mxu0 0
    %2717 = vmatprep.subr.bf16.mxu0 0
    %2718 = vmatpush1.bf16.msra.mxu0 0
    %2719 = vmatprep.subr.bf16.mxu0 0
    %2720 = vmatpush1.bf16.msra.mxu0 0
    %2721 = vmatprep.subr.bf16.mxu0 0
    %2722 = vmatpush1.bf16.msra.mxu0 0
    %2723 = vmatprep.subr.bf16.mxu0 0
    %2724 = vmatpush1.bf16.msra.mxu0 0
    %2725 = vmatprep.subr.bf16.mxu0 0
    %2726 = vmatpush1.bf16.msra.mxu0 0
    %2727 = vmatprep.subr.bf16.mxu0 0
    %2728 = vmatpush1.bf16.msra.mxu0 0
    %2729 = vmatprep.subr.bf16.mxu0 0
    %2730 = vmatpush1.bf16.msra.mxu0 0
    %2731 = vmatprep.subr.bf16.mxu0 0
    %2732 = vmatpush1.bf16.msra.mxu0 0
    %2733 = vmatprep.subr.bf16.mxu0 0
    %2734 = vmatpush1.bf16.msra.mxu0 0
    %2735 = vmatprep.subr.bf16.mxu0 0
    %2736 = vmatpush1.bf16.msra.mxu0 0
    %2737 = vmatprep.subr.bf16.mxu0 0
    %2738 = vmatpush1.bf16.msra.mxu0 0
    %2739 = vmatprep.subr.bf16.mxu0 0
    %2740 = vmatpush1.bf16.msra.mxu0 0
    %2741 = vmatprep.subr.bf16.mxu0 0
    %2742 = vmatpush1.bf16.msra.mxu0 0
    %2743 = vmatprep.subr.bf16.mxu0 0
    %2744 = vmatpush1.bf16.msra.mxu0 0
    %2745 = vmatprep.mubr.bf16.mxu0 0
    %2746 = vmatmul.mubr.bf16.gmra.mrb[0].mxu0 %v2588
    %v2747 = vpop.f32.mrb[0].mxu0
    %v2748 = vadd.f32 %v2707, %v2747
    %v2749 = vpop.f32.mrb[0].mxu0
    %v2750 = vadd.f32 %v2709, %v2749
    %v2751 = vpop.f32.mrb[0].mxu0
    %v2752 = vpop.f32.mrb[0].mxu0
    %2753 = vdwg.mxu0
    %2754 = vmatprep.subr.bf16.mxu0 %v1805
    %2755 = vmatpush1.bf16.msra.mxu0 %v1804
    %2756 = vmatprep.subr.bf16.mxu0 %v1813
    %2757 = vmatpush1.bf16.msra.mxu0 %v1812
    %2758 = vmatprep.subr.bf16.mxu0 %v1821
    %2759 = vmatpush1.bf16.msra.mxu0 %v1820
    %2760 = vmatprep.subr.bf16.mxu0 %v1829
    %2761 = vmatpush1.bf16.msra.mxu0 %v1828
    %2762 = vmatprep.subr.bf16.mxu0 %v1837
    %2763 = vmatpush1.bf16.msra.mxu0 %v1836
    %2764 = vmatprep.subr.bf16.mxu0 %v1845
    %2765 = vmatpush1.bf16.msra.mxu0 %v1844
    %2766 = vmatprep.subr.bf16.mxu0 %v1853
    %2767 = vmatpush1.bf16.msra.mxu0 %v1852
    %2768 = vmatprep.subr.bf16.mxu0 %v1861
    %2769 = vmatpush1.bf16.msra.mxu0 %v1860
    %2770 = vmatprep.subr.bf16.mxu0 %v1869
    %2771 = vmatpush1.bf16.msra.mxu0 %v1868
    %2772 = vmatprep.subr.bf16.mxu0 %v1877
    %2773 = vmatpush1.bf16.msra.mxu0 %v1876
    %2774 = vmatprep.subr.bf16.mxu0 %v1885
    %2775 = vmatpush1.bf16.msra.mxu0 %v1884
    %2776 = vmatprep.subr.bf16.mxu0 %v1893
    %2777 = vmatpush1.bf16.msra.mxu0 %v1892
    %2778 = vmatprep.subr.bf16.mxu0 %v1901
    %2779 = vmatpush1.bf16.msra.mxu0 %v1900
    %2780 = vmatprep.subr.bf16.mxu0 %v1909
    %2781 = vmatpush1.bf16.msra.mxu0 %v1908
    %2782 = vmatprep.subr.bf16.mxu0 %v1917
    %2783 = vmatpush1.bf16.msra.mxu0 %v1916
    %2784 = vmatprep.subr.bf16.mxu0 %v1925
    %2785 = vmatpush1.bf16.msra.mxu0 %v1924
    %2786 = vmatprep.mubr.bf16.mxu0 %v614
    %2787 = vmatmul.mubr.bf16.gmra.mrb[0].mxu0 %v613
    %v2788 = vpop.f32.mrb[0].mxu0
    %v2789 = vadd.f32 %v573, %v2788
    %v2790 = vpop.f32.mrb[0].mxu0
    %v2791 = vadd.f32 %v577, %v2790
    %v2792 = vpop.f32.mrb[0].mxu0
    %v2793 = vpop.f32.mrb[0].mxu0
    %2794 = vdwg.mxu0
    %2795 = vmatprep.subr.bf16.mxu0 %v1933
    %2796 = vmatpush1.bf16.msra.mxu0 %v1932
    %2797 = vmatprep.subr.bf16.mxu0 %v1941
    %2798 = vmatpush1.bf16.msra.mxu0 %v1940
    %2799 = vmatprep.subr.bf16.mxu0 %v1949
    %2800 = vmatpush1.bf16.msra.mxu0 %v1948
    %2801 = vmatprep.subr.bf16.mxu0 %v1957
    %2802 = vmatpush1.bf16.msra.mxu0 %v1956
    %2803 = vmatprep.subr.bf16.mxu0 %v1965
    %2804 = vmatpush1.bf16.msra.mxu0 %v1964
    %2805 = vmatprep.subr.bf16.mxu0 %v1973
    %2806 = vmatpush1.bf16.msra.mxu0 %v1972
    %2807 = vmatprep.subr.bf16.mxu0 %v1981
    %2808 = vmatpush1.bf16.msra.mxu0 %v1980
    %2809 = vmatprep.subr.bf16.mxu0 %v1989
    %2810 = vmatpush1.bf16.msra.mxu0 %v1988
    %2811 = vmatprep.subr.bf16.mxu0 %v1997
    %2812 = vmatpush1.bf16.msra.mxu0 %v1996
    %2813 = vmatprep.subr.bf16.mxu0 %v2005
    %2814 = vmatpush1.bf16.msra.mxu0 %v2004
    %2815 = vmatprep.subr.bf16.mxu0 %v2013
    %2816 = vmatpush1.bf16.msra.mxu0 %v2012
    %2817 = vmatprep.subr.bf16.mxu0 %v2021
    %2818 = vmatpush1.bf16.msra.mxu0 %v2020
    %2819 = vmatprep.subr.bf16.mxu0 %v2029
    %2820 = vmatpush1.bf16.msra.mxu0 %v2028
    %2821 = vmatprep.subr.bf16.mxu0 %v2037
    %2822 = vmatpush1.bf16.msra.mxu0 %v2036
    %2823 = vmatprep.subr.bf16.mxu0 %v2045
    %2824 = vmatpush1.bf16.msra.mxu0 %v2044
    %2825 = vmatprep.subr.bf16.mxu0 %v2053
    %2826 = vmatpush1.bf16.msra.mxu0 %v2052
    %2827 = vmatprep.mubr.bf16.mxu0 %v616
    %2828 = vmatmul.mubr.bf16.gmra.mrb[0].mxu0 %v615
    %v2829 = vpop.f32.mrb[0].mxu0
    %v2830 = vadd.f32 %v2789, %v2829
    %v2831 = vpop.f32.mrb[0].mxu0
    %v2832 = vadd.f32 %v2791, %v2831
    %v2833 = vpop.f32.mrb[0].mxu0
    %v2834 = vpop.f32.mrb[0].mxu0
    %2835 = vdwg.mxu0
    %2836 = vmatprep.subr.bf16.mxu0 %v2061
    %2837 = vmatpush1.bf16.msra.mxu0 %v2060
    %2838 = vmatprep.subr.bf16.mxu0 %v2069
    %2839 = vmatpush1.bf16.msra.mxu0 %v2068
    %2840 = vmatprep.subr.bf16.mxu0 %v2077
    %2841 = vmatpush1.bf16.msra.mxu0 %v2076
    %2842 = vmatprep.subr.bf16.mxu0 %v2085
    %2843 = vmatpush1.bf16.msra.mxu0 %v2084
    %2844 = vmatprep.subr.bf16.mxu0 %v2093
    %2845 = vmatpush1.bf16.msra.mxu0 %v2092
    %2846 = vmatprep.subr.bf16.mxu0 %v2101
    %2847 = vmatpush1.bf16.msra.mxu0 %v2100
    %2848 = vmatprep.subr.bf16.mxu0 %v2109
    %2849 = vmatpush1.bf16.msra.mxu0 %v2108
    %2850 = vmatprep.subr.bf16.mxu0 %v2117
    %2851 = vmatpush1.bf16.msra.mxu0 %v2116
    %2852 = vmatprep.subr.bf16.mxu0 %v2125
    %2853 = vmatpush1.bf16.msra.mxu0 %v2124
    %2854 = vmatprep.subr.bf16.mxu0 %v2133
    %2855 = vmatpush1.bf16.msra.mxu0 %v2132
    %2856 = vmatprep.subr.bf16.mxu0 %v2141
    %2857 = vmatpush1.bf16.msra.mxu0 %v2140
    %2858 = vmatprep.subr.bf16.mxu0 %v2149
    %2859 = vmatpush1.bf16.msra.mxu0 %v2148
    %2860 = vmatprep.subr.bf16.mxu0 %v2157
    %2861 = vmatpush1.bf16.msra.mxu0 %v2156
    %2862 = vmatprep.subr.bf16.mxu0 %v2165
    %2863 = vmatpush1.bf16.msra.mxu0 %v2164
    %2864 = vmatprep.subr.bf16.mxu0 %v2173
    %2865 = vmatpush1.bf16.msra.mxu0 %v2172
    %2866 = vmatprep.subr.bf16.mxu0 %v2181
    %2867 = vmatpush1.bf16.msra.mxu0 %v2180
    %2868 = vmatprep.mubr.bf16.mxu0 %v618
    %2869 = vmatmul.mubr.bf16.gmra.mrb[0].mxu0 %v617
    %v2870 = vpop.f32.mrb[0].mxu0
    %v2871 = vadd.f32 %v2830, %v2870
    %v2872 = vpop.f32.mrb[0].mxu0
    %v2873 = vadd.f32 %v2832, %v2872
    %v2874 = vpop.f32.mrb[0].mxu0
    %v2875 = vpop.f32.mrb[0].mxu0
    %2876 = vdwg.mxu0
    %2877 = vmatprep.subr.bf16.mxu0 %v2189
    %2878 = vmatpush1.bf16.msra.mxu0 %v2188
    %2879 = vmatprep.subr.bf16.mxu0 0
    %2880 = vmatpush1.bf16.msra.mxu0 0
    %2881 = vmatprep.subr.bf16.mxu0 0
    %2882 = vmatpush1.bf16.msra.mxu0 0
    %2883 = vmatprep.subr.bf16.mxu0 0
    %2884 = vmatpush1.bf16.msra.mxu0 0
    %2885 = vmatprep.subr.bf16.mxu0 0
    %2886 = vmatpush1.bf16.msra.mxu0 0
    %2887 = vmatprep.subr.bf16.mxu0 0
    %2888 = vmatpush1.bf16.msra.mxu0 0
    %2889 = vmatprep.subr.bf16.mxu0 0
    %2890 = vmatpush1.bf16.msra.mxu0 0
    %2891 = vmatprep.subr.bf16.mxu0 0
    %2892 = vmatpush1.bf16.msra.mxu0 0
    %2893 = vmatprep.subr.bf16.mxu0 0
    %2894 = vmatpush1.bf16.msra.mxu0 0
    %2895 = vmatprep.subr.bf16.mxu0 0
    %2896 = vmatpush1.bf16.msra.mxu0 0
    %2897 = vmatprep.subr.bf16.mxu0 0
    %2898 = vmatpush1.bf16.msra.mxu0 0
    %2899 = vmatprep.subr.bf16.mxu0 0
    %2900 = vmatpush1.bf16.msra.mxu0 0
    %2901 = vmatprep.subr.bf16.mxu0 0
    %2902 = vmatpush1.bf16.msra.mxu0 0
    %2903 = vmatprep.subr.bf16.mxu0 0
    %2904 = vmatpush1.bf16.msra.mxu0 0
    %2905 = vmatprep.subr.bf16.mxu0 0
    %2906 = vmatpush1.bf16.msra.mxu0 0
    %2907 = vmatprep.subr.bf16.mxu0 0
    %2908 = vmatpush1.bf16.msra.mxu0 0
    %2909 = vmatprep.mubr.bf16.mxu0 0
    %2910 = vmatmul.mubr.bf16.gmra.mrb[0].mxu0 %v2588
    %v2911 = vpop.f32.mrb[0].mxu0
    %v2912 = vadd.f32 %v2871, %v2911
    %v2913 = vpop.f32.mrb[0].mxu0
    %v2914 = vadd.f32 %v2873, %v2913
    %v2915 = vpop.f32.mrb[0].mxu0
    %v2916 = vpop.f32.mrb[0].mxu0
    %2917 = vdwg.mxu0
    %2918 = vmatprep.subr.bf16.mxu0 %v1807
    %2919 = vmatpush1.bf16.msra.mxu0 %v1806
    %2920 = vmatprep.subr.bf16.mxu0 %v1815
    %2921 = vmatpush1.bf16.msra.mxu0 %v1814
    %2922 = vmatprep.subr.bf16.mxu0 %v1823
    %2923 = vmatpush1.bf16.msra.mxu0 %v1822
    %2924 = vmatprep.subr.bf16.mxu0 %v1831
    %2925 = vmatpush1.bf16.msra.mxu0 %v1830
    %2926 = vmatprep.subr.bf16.mxu0 %v1839
    %2927 = vmatpush1.bf16.msra.mxu0 %v1838
    %2928 = vmatprep.subr.bf16.mxu0 %v1847
    %2929 = vmatpush1.bf16.msra.mxu0 %v1846
    %2930 = vmatprep.subr.bf16.mxu0 %v1855
    %2931 = vmatpush1.bf16.msra.mxu0 %v1854
    %2932 = vmatprep.subr.bf16.mxu0 %v1863
    %2933 = vmatpush1.bf16.msra.mxu0 %v1862
    %2934 = vmatprep.subr.bf16.mxu0 %v1871
    %2935 = vmatpush1.bf16.msra.mxu0 %v1870
    %2936 = vmatprep.subr.bf16.mxu0 %v1879
    %2937 = vmatpush1.bf16.msra.mxu0 %v1878
    %2938 = vmatprep.subr.bf16.mxu0 %v1887
    %2939 = vmatpush1.bf16.msra.mxu0 %v1886
    %2940 = vmatprep.subr.bf16.mxu0 %v1895
    %2941 = vmatpush1.bf16.msra.mxu0 %v1894
    %2942 = vmatprep.subr.bf16.mxu0 %v1903
    %2943 = vmatpush1.bf16.msra.mxu0 %v1902
    %2944 = vmatprep.subr.bf16.mxu0 %v1911
    %2945 = vmatpush1.bf16.msra.mxu0 %v1910
    %2946 = vmatprep.subr.bf16.mxu0 %v1919
    %2947 = vmatpush1.bf16.msra.mxu0 %v1918
    %2948 = vmatprep.subr.bf16.mxu0 %v1927
    %2949 = vmatpush1.bf16.msra.mxu0 %v1926
    %2950 = vmatprep.mubr.bf16.mxu0 %v614
    %2951 = vmatmul.mubr.bf16.gmra.mrb[0].mxu0 %v613
    %v2952 = vpop.f32.mrb[0].mxu0
    %v2953 = vadd.f32 %v581, %v2952
    %v2954 = vpop.f32.mrb[0].mxu0
    %v2955 = vadd.f32 %v585, %v2954
    %v2956 = vpop.f32.mrb[0].mxu0
    %v2957 = vpop.f32.mrb[0].mxu0
    %2958 = vdwg.mxu0
    %2959 = vmatprep.subr.bf16.mxu0 %v1935
    %2960 = vmatpush1.bf16.msra.mxu0 %v1934
    %2961 = vmatprep.subr.bf16.mxu0 %v1943
    %2962 = vmatpush1.bf16.msra.mxu0 %v1942
    %2963 = vmatprep.subr.bf16.mxu0 %v1951
    %2964 = vmatpush1.bf16.msra.mxu0 %v1950
    %2965 = vmatprep.subr.bf16.mxu0 %v1959
    %2966 = vmatpush1.bf16.msra.mxu0 %v1958
    %2967 = vmatprep.subr.bf16.mxu0 %v1967
    %2968 = vmatpush1.bf16.msra.mxu0 %v1966
    %2969 = vmatprep.subr.bf16.mxu0 %v1975
    %2970 = vmatpush1.bf16.msra.mxu0 %v1974
    %2971 = vmatprep.subr.bf16.mxu0 %v1983
    %2972 = vmatpush1.bf16.msra.mxu0 %v1982
    %2973 = vmatprep.subr.bf16.mxu0 %v1991
    %2974 = vmatpush1.bf16.msra.mxu0 %v1990
    %2975 = vmatprep.subr.bf16.mxu0 %v1999
    %2976 = vmatpush1.bf16.msra.mxu0 %v1998
    %2977 = vmatprep.subr.bf16.mxu0 %v2007
    %2978 = vmatpush1.bf16.msra.mxu0 %v2006
    %2979 = vmatprep.subr.bf16.mxu0 %v2015
    %2980 = vmatpush1.bf16.msra.mxu0 %v2014
    %2981 = vmatprep.subr.bf16.mxu0 %v2023
    %2982 = vmatpush1.bf16.msra.mxu0 %v2022
    %2983 = vmatprep.subr.bf16.mxu0 %v2031
    %2984 = vmatpush1.bf16.msra.mxu0 %v2030
    %2985 = vmatprep.subr.bf16.mxu0 %v2039
    %2986 = vmatpush1.bf16.msra.mxu0 %v2038
    %2987 = vmatprep.subr.bf16.mxu0 %v2047
    %2988 = vmatpush1.bf16.msra.mxu0 %v2046
    %2989 = vmatprep.subr.bf16.mxu0 %v2055
    %2990 = vmatpush1.bf16.msra.mxu0 %v2054
    %2991 = vmatprep.mubr.bf16.mxu0 %v616
    %2992 = vmatmul.mubr.bf16.gmra.mrb[0].mxu0 %v615
    %v2993 = vpop.f32.mrb[0].mxu0
    %v2994 = vadd.f32 %v2953, %v2993
    %v2995 = vpop.f32.mrb[0].mxu0
    %v2996 = vadd.f32 %v2955, %v2995
    %v2997 = vpop.f32.mrb[0].mxu0
    %v2998 = vpop.f32.mrb[0].mxu0
    %2999 = vdwg.mxu0
    %3000 = vmatprep.subr.bf16.mxu0 %v2063
    %3001 = vmatpush1.bf16.msra.mxu0 %v2062
    %3002 = vmatprep.subr.bf16.mxu0 %v2071
    %3003 = vmatpush1.bf16.msra.mxu0 %v2070
    %3004 = vmatprep.subr.bf16.mxu0 %v2079
    %3005 = vmatpush1.bf16.msra.mxu0 %v2078
    %3006 = vmatprep.subr.bf16.mxu0 %v2087
    %3007 = vmatpush1.bf16.msra.mxu0 %v2086
    %3008 = vmatprep.subr.bf16.mxu0 %v2095
    %3009 = vmatpush1.bf16.msra.mxu0 %v2094
    %3010 = vmatprep.subr.bf16.mxu0 %v2103
    %3011 = vmatpush1.bf16.msra.mxu0 %v2102
    %3012 = vmatprep.subr.bf16.mxu0 %v2111
    %3013 = vmatpush1.bf16.msra.mxu0 %v2110
    %3014 = vmatprep.subr.bf16.mxu0 %v2119
    %3015 = vmatpush1.bf16.msra.mxu0 %v2118
    %3016 = vmatprep.subr.bf16.mxu0 %v2127
    %3017 = vmatpush1.bf16.msra.mxu0 %v2126
    %3018 = vmatprep.subr.bf16.mxu0 %v2135
    %3019 = vmatpush1.bf16.msra.mxu0 %v2134
    %3020 = vmatprep.subr.bf16.mxu0 %v2143
    %3021 = vmatpush1.bf16.msra.mxu0 %v2142
    %3022 = vmatprep.subr.bf16.mxu0 %v2151
    %3023 = vmatpush1.bf16.msra.mxu0 %v2150
    %3024 = vmatprep.subr.bf16.mxu0 %v2159
    %3025 = vmatpush1.bf16.msra.mxu0 %v2158
    %3026 = vmatprep.subr.bf16.mxu0 %v2167
    %3027 = vmatpush1.bf16.msra.mxu0 %v2166
    %3028 = vmatprep.subr.bf16.mxu0 %v2175
    %3029 = vmatpush1.bf16.msra.mxu0 %v2174
    %3030 = vmatprep.subr.bf16.mxu0 %v2183
    %3031 = vmatpush1.bf16.msra.mxu0 %v2182
    %3032 = vmatprep.mubr.bf16.mxu0 %v618
    %3033 = vmatmul.mubr.bf16.gmra.mrb[0].mxu0 %v617
    %v3034 = vpop.f32.mrb[0].mxu0
    %v3035 = vadd.f32 %v2994, %v3034
    %v3036 = vpop.f32.mrb[0].mxu0
    %v3037 = vadd.f32 %v2996, %v3036
    %v3038 = vpop.f32.mrb[0].mxu0
    %v3039 = vpop.f32.mrb[0].mxu0
    %3040 = vdwg.mxu0
    %3041 = vmatprep.subr.bf16.mxu0 %v2191
    %3042 = vmatpush1.bf16.msra.mxu0 %v2190
    %3043 = vmatprep.subr.bf16.mxu0 0
    %3044 = vmatpush1.bf16.msra.mxu0 0
    %3045 = vmatprep.subr.bf16.mxu0 0
    %3046 = vmatpush1.bf16.msra.mxu0 0
    %3047 = vmatprep.subr.bf16.mxu0 0
    %3048 = vmatpush1.bf16.msra.mxu0 0
    %3049 = vmatprep.subr.bf16.mxu0 0
    %3050 = vmatpush1.bf16.msra.mxu0 0
    %3051 = vmatprep.subr.bf16.mxu0 0
    %3052 = vmatpush1.bf16.msra.mxu0 0
    %3053 = vmatprep.subr.bf16.mxu0 0
    %3054 = vmatpush1.bf16.msra.mxu0 0
    %3055 = vmatprep.subr.bf16.mxu0 0
    %3056 = vmatpush1.bf16.msra.mxu0 0
    %3057 = vmatprep.subr.bf16.mxu0 0
    %3058 = vmatpush1.bf16.msra.mxu0 0
    %3059 = vmatprep.subr.bf16.mxu0 0
    %3060 = vmatpush1.bf16.msra.mxu0 0
    %3061 = vmatprep.subr.bf16.mxu0 0
    %3062 = vmatpush1.bf16.msra.mxu0 0
    %3063 = vmatprep.subr.bf16.mxu0 0
    %3064 = vmatpush1.bf16.msra.mxu0 0
    %3065 = vmatprep.subr.bf16.mxu0 0
    %3066 = vmatpush1.bf16.msra.mxu0 0
    %3067 = vmatprep.subr.bf16.mxu0 0
    %3068 = vmatpush1.bf16.msra.mxu0 0
    %3069 = vmatprep.subr.bf16.mxu0 0
    %3070 = vmatpush1.bf16.msra.mxu0 0
    %3071 = vmatprep.subr.bf16.mxu0 0
    %3072 = vmatpush1.bf16.msra.mxu0 0
    %3073 = vmatprep.mubr.bf16.mxu0 0
    %3074 = vmatmul.mubr.bf16.gmra.mrb[0].mxu0 %v2588
    %v3075 = vpop.f32.mrb[0].mxu0
    %v3076 = vadd.f32 %v3035, %v3075
    %v3077 = vpop.f32.mrb[0].mxu0
    %v3078 = vadd.f32 %v3037, %v3077
    %v3079 = vpop.f32.mrb[0].mxu0
    %v3080 = vpop.f32.mrb[0].mxu0
    %3081 = vdwg.mxu0
    %3082 = vmatprep.subr.bf16.mxu0 %v1809
    %3083 = vmatpush1.bf16.msra.mxu0 %v1808
    %3084 = vmatprep.subr.bf16.mxu0 %v1817
    %3085 = vmatpush1.bf16.msra.mxu0 %v1816
    %3086 = vmatprep.subr.bf16.mxu0 %v1825
    %3087 = vmatpush1.bf16.msra.mxu0 %v1824
    %3088 = vmatprep.subr.bf16.mxu0 %v1833
    %3089 = vmatpush1.bf16.msra.mxu0 %v1832
    %3090 = vmatprep.subr.bf16.mxu0 %v1841
    %3091 = vmatpush1.bf16.msra.mxu0 %v1840
    %3092 = vmatprep.subr.bf16.mxu0 %v1849
    %3093 = vmatpush1.bf16.msra.mxu0 %v1848
    %3094 = vmatprep.subr.bf16.mxu0 %v1857
    %3095 = vmatpush1.bf16.msra.mxu0 %v1856
    %3096 = vmatprep.subr.bf16.mxu0 %v1865
    %3097 = vmatpush1.bf16.msra.mxu0 %v1864
    %3098 = vmatprep.subr.bf16.mxu0 %v1873
    %3099 = vmatpush1.bf16.msra.mxu0 %v1872
    %3100 = vmatprep.subr.bf16.mxu0 %v1881
    %3101 = vmatpush1.bf16.msra.mxu0 %v1880
    %3102 = vmatprep.subr.bf16.mxu0 %v1889
    %3103 = vmatpush1.bf16.msra.mxu0 %v1888
    %3104 = vmatprep.subr.bf16.mxu0 %v1897
    %3105 = vmatpush1.bf16.msra.mxu0 %v1896
    %3106 = vmatprep.subr.bf16.mxu0 %v1905
    %3107 = vmatpush1.bf16.msra.mxu0 %v1904
    %3108 = vmatprep.subr.bf16.mxu0 %v1913
    %3109 = vmatpush1.bf16.msra.mxu0 %v1912
    %3110 = vmatprep.subr.bf16.mxu0 %v1921
    %3111 = vmatpush1.bf16.msra.mxu0 %v1920
    %3112 = vmatprep.subr.bf16.mxu0 %v1929
    %3113 = vmatpush1.bf16.msra.mxu0 %v1928
    %3114 = vmatprep.mubr.bf16.mxu0 %v614
    %3115 = vmatmul.mubr.bf16.gmra.mrb[0].mxu0 %v613
    %v3116 = vpop.f32.mrb[0].mxu0
    %v3117 = vadd.f32 %v589, %v3116
    %v3118 = vpop.f32.mrb[0].mxu0
    %v3119 = vadd.f32 %v593, %v3118
    %v3120 = vpop.f32.mrb[0].mxu0
    %v3121 = vpop.f32.mrb[0].mxu0
    %3122 = vdwg.mxu0
    %3123 = vmatprep.subr.bf16.mxu0 %v1937
    %3124 = vmatpush1.bf16.msra.mxu0 %v1936
    %3125 = vmatprep.subr.bf16.mxu0 %v1945
    %3126 = vmatpush1.bf16.msra.mxu0 %v1944
    %3127 = vmatprep.subr.bf16.mxu0 %v1953
    %3128 = vmatpush1.bf16.msra.mxu0 %v1952
    %3129 = vmatprep.subr.bf16.mxu0 %v1961
    %3130 = vmatpush1.bf16.msra.mxu0 %v1960
    %3131 = vmatprep.subr.bf16.mxu0 %v1969
    %3132 = vmatpush1.bf16.msra.mxu0 %v1968
    %3133 = vmatprep.subr.bf16.mxu0 %v1977
    %3134 = vmatpush1.bf16.msra.mxu0 %v1976
    %3135 = vmatprep.subr.bf16.mxu0 %v1985
    %3136 = vmatpush1.bf16.msra.mxu0 %v1984
    %3137 = vmatprep.subr.bf16.mxu0 %v1993
    %3138 = vmatpush1.bf16.msra.mxu0 %v1992
    %3139 = vmatprep.subr.bf16.mxu0 %v2001
    %3140 = vmatpush1.bf16.msra.mxu0 %v2000
    %3141 = vmatprep.subr.bf16.mxu0 %v2009
    %3142 = vmatpush1.bf16.msra.mxu0 %v2008
    %3143 = vmatprep.subr.bf16.mxu0 %v2017
    %3144 = vmatpush1.bf16.msra.mxu0 %v2016
    %3145 = vmatprep.subr.bf16.mxu0 %v2025
    %3146 = vmatpush1.bf16.msra.mxu0 %v2024
    %3147 = vmatprep.subr.bf16.mxu0 %v2033
    %3148 = vmatpush1.bf16.msra.mxu0 %v2032
    %3149 = vmatprep.subr.bf16.mxu0 %v2041
    %3150 = vmatpush1.bf16.msra.mxu0 %v2040
    %3151 = vmatprep.subr.bf16.mxu0 %v2049
    %3152 = vmatpush1.bf16.msra.mxu0 %v2048
    %3153 = vmatprep.subr.bf16.mxu0 %v2057
    %3154 = vmatpush1.bf16.msra.mxu0 %v2056
    %3155 = vmatprep.mubr.bf16.mxu0 %v616
    %3156 = vmatmul.mubr.bf16.gmra.mrb[0].mxu0 %v615
    %v3157 = vpop.f32.mrb[0].mxu0
    %v3158 = vadd.f32 %v3117, %v3157
    %v3159 = vpop.f32.mrb[0].mxu0
    %v3160 = vadd.f32 %v3119, %v3159
    %v3161 = vpop.f32.mrb[0].mxu0
    %v3162 = vpop.f32.mrb[0].mxu0
    %3163 = vdwg.mxu0
    %3164 = vmatprep.subr.bf16.mxu0 %v2065
    %3165 = vmatpush1.bf16.msra.mxu0 %v2064
    %3166 = vmatprep.subr.bf16.mxu0 %v2073
    %3167 = vmatpush1.bf16.msra.mxu0 %v2072
    %3168 = vmatprep.subr.bf16.mxu0 %v2081
    %3169 = vmatpush1.bf16.msra.mxu0 %v2080
    %3170 = vmatprep.subr.bf16.mxu0 %v2089
    %3171 = vmatpush1.bf16.msra.mxu0 %v2088
    %3172 = vmatprep.subr.bf16.mxu0 %v2097
    %3173 = vmatpush1.bf16.msra.mxu0 %v2096
    %3174 = vmatprep.subr.bf16.mxu0 %v2105
    %3175 = vmatpush1.bf16.msra.mxu0 %v2104
    %3176 = vmatprep.subr.bf16.mxu0 %v2113
    %3177 = vmatpush1.bf16.msra.mxu0 %v2112
    %3178 = vmatprep.subr.bf16.mxu0 %v2121
    %3179 = vmatpush1.bf16.msra.mxu0 %v2120
    %3180 = vmatprep.subr.bf16.mxu0 %v2129
    %3181 = vmatpush1.bf16.msra.mxu0 %v2128
    %3182 = vmatprep.subr.bf16.mxu0 %v2137
    %3183 = vmatpush1.bf16.msra.mxu0 %v2136
    %3184 = vmatprep.subr.bf16.mxu0 %v2145
    %3185 = vmatpush1.bf16.msra.mxu0 %v2144
    %3186 = vmatprep.subr.bf16.mxu0 %v2153
    %3187 = vmatpush1.bf16.msra.mxu0 %v2152
    %3188 = vmatprep.subr.bf16.mxu0 %v2161
    %3189 = vmatpush1.bf16.msra.mxu0 %v2160
    %3190 = vmatprep.subr.bf16.mxu0 %v2169
    %3191 = vmatpush1.bf16.msra.mxu0 %v2168
    %3192 = vmatprep.subr.bf16.mxu0 %v2177
    %3193 = vmatpush1.bf16.msra.mxu0 %v2176
    %3194 = vmatprep.subr.bf16.mxu0 %v2185
    %3195 = vmatpush1.bf16.msra.mxu0 %v2184
    %3196 = vmatprep.mubr.bf16.mxu0 %v618
    %3197 = vmatmul.mubr.bf16.gmra.mrb[0].mxu0 %v617
    %v3198 = vpop.f32.mrb[0].mxu0
    %v3199 = vadd.f32 %v3158, %v3198
    %v3200 = vpop.f32.mrb[0].mxu0
    %v3201 = vadd.f32 %v3160, %v3200
    %v3202 = vpop.f32.mrb[0].mxu0
    %v3203 = vpop.f32.mrb[0].mxu0
    %3204 = vdwg.mxu0
    %3205 = vmatprep.subr.bf16.mxu0 %v2193
    %3206 = vmatpush1.bf16.msra.mxu0 %v2192
    %3207 = vmatprep.subr.bf16.mxu0 0
    %3208 = vmatpush1.bf16.msra.mxu0 0
    %3209 = vmatprep.subr.bf16.mxu0 0
    %3210 = vmatpush1.bf16.msra.mxu0 0
    %3211 = vmatprep.subr.bf16.mxu0 0
    %3212 = vmatpush1.bf16.msra.mxu0 0
    %3213 = vmatprep.subr.bf16.mxu0 0
    %3214 = vmatpush1.bf16.msra.mxu0 0
    %3215 = vmatprep.subr.bf16.mxu0 0
    %3216 = vmatpush1.bf16.msra.mxu0 0
    %3217 = vmatprep.subr.bf16.mxu0 0
    %3218 = vmatpush1.bf16.msra.mxu0 0
    %3219 = vmatprep.subr.bf16.mxu0 0
    %3220 = vmatpush1.bf16.msra.mxu0 0
    %3221 = vmatprep.subr.bf16.mxu0 0
    %3222 = vmatpush1.bf16.msra.mxu0 0
    %3223 = vmatprep.subr.bf16.mxu0 0
    %3224 = vmatpush1.bf16.msra.mxu0 0
    %3225 = vmatprep.subr.bf16.mxu0 0
    %3226 = vmatpush1.bf16.msra.mxu0 0
    %3227 = vmatprep.subr.bf16.mxu0 0
    %3228 = vmatpush1.bf16.msra.mxu0 0
    %3229 = vmatprep.subr.bf16.mxu0 0
    %3230 = vmatpush1.bf16.msra.mxu0 0
    %3231 = vmatprep.subr.bf16.mxu0 0
    %3232 = vmatpush1.bf16.msra.mxu0 0
    %3233 = vmatprep.subr.bf16.mxu0 0
    %3234 = vmatpush1.bf16.msra.mxu0 0
    %3235 = vmatprep.subr.bf16.mxu0 0
    %3236 = vmatpush1.bf16.msra.mxu0 0
    %3237 = vmatprep.mubr.bf16.mxu0 0
    %3238 = vmatmul.mubr.bf16.gmra.mrb[0].mxu0 %v2588
    %v3239 = vpop.f32.mrb[0].mxu0
    %v3240 = vadd.f32 %v3199, %v3239
    %v3241 = vpop.f32.mrb[0].mxu0
    %v3242 = vadd.f32 %v3201, %v3241
    %v3243 = vpop.f32.mrb[0].mxu0
    %v3244 = vpop.f32.mrb[0].mxu0
    %3245 = vdwg.mxu0
    %v3246 = vmax.f32 %v2748, 0.0
    %v3247 = vmax.f32 %v2750, 0.0
    %v3248 = vmax.f32 %v2912, 0.0
    %v3249 = vmax.f32 %v2914, 0.0
    %v3250 = vmax.f32 %v3076, 0.0
    %v3251 = vmax.f32 %v3078, 0.0
    %v3252 = vmax.f32 %v3240, 0.0
    %v3253 = vmax.f32 %v3242, 0.0
    %v3254 = vpack.c.bf16 %v3246, %v3246
    %v3255 = vpack.c.bf16 %v3247, %v3247
    %v3256 = vpack.c.bf16 %v3248, %v3248
    %v3257 = vpack.c.bf16 %v3249, %v3249
    %v3258 = vpack.c.bf16 %v3250, %v3250
    %v3259 = vpack.c.bf16 %v3251, %v3251
    %v3260 = vpack.c.bf16 %v3252, %v3252
    %v3261 = vpack.c.bf16 %v3253, %v3253
    %v3262 = vld [vmem:[%s3] sm:$0xf]
    %v3263 = vld [vmem:[%s3 + $0x4] sm:$0xf]
    %v3264 = vld [vmem:[%s3 + $0x8] sm:$0xf]
    %v3265 = vld [vmem:[%s3 + $0xc] sm:$0xf]
    %v3266 = vld [vmem:[%s3 + $0x10] sm:$0xf]
    %v3267 = vld [vmem:[%s3 + $0x14] sm:$0xf]
    %v3268 = vld [vmem:[%s3 + $0x18] sm:$0xf]
    %v3269 = vld [vmem:[%s3 + $0x1c] sm:$0xf]
    %v3270 = vld [vmem:[%s3 + $0x20] sm:$0xf]
    %v3271 = vld [vmem:[%s3 + $0x24] sm:$0xf]
    %v3272 = vld [vmem:[%s3 + $0x28] sm:$0xf]
    %v3273 = vld [vmem:[%s3 + $0x2c] sm:$0xf]
    %v3274 = vld [vmem:[%s3 + $0x30] sm:$0xf]
    %v3275 = vld [vmem:[%s3 + $0x34] sm:$0xf]
    %v3276 = vld [vmem:[%s3 + $0x38] sm:$0xf]
    %v3277 = vld [vmem:[%s3 + $0x3c] sm:$0xf]
    %v3278 = vld [vmem:[%s3 + $0x40] sm:$0xf]
    %v3279 = vld [vmem:[%s3 + $0x44] sm:$0xf]
    %v3280 = vld [vmem:[%s3 + $0x48] sm:$0xf]
    %v3281 = vld [vmem:[%s3 + $0x4c] sm:$0xf]
    %v3282 = vld [vmem:[%s3 + $0x50] sm:$0xf]
    %v3283 = vld [vmem:[%s3 + $0x54] sm:$0xf]
    %v3284 = vld [vmem:[%s3 + $0x58] sm:$0xf]
    %v3285 = vld [vmem:[%s3 + $0x5c] sm:$0xf]
    %v3286 = vld [vmem:[%s3 + $0x60] sm:$0xf]
    %v3287 = vld [vmem:[%s3 + $0x64] sm:$0xf]
    %v3288 = vld [vmem:[%s3 + $0x68] sm:$0xf]
    %v3289 = vld [vmem:[%s3 + $0x6c] sm:$0xf]
    %v3290 = vld [vmem:[%s3 + $0x70] sm:$0xf]
    %v3291 = vld [vmem:[%s3 + $0x74] sm:$0xf]
    %v3292 = vld [vmem:[%s3 + $0x78] sm:$0xf]
    %v3293 = vld [vmem:[%s3 + $0x7c] sm:$0xf]
    %v3294 = vld [vmem:[%s3 + $0x80] sm:$0xf]
    %v3295 = vld [vmem:[%s3 + $0x84] sm:$0xf]
    %v3296 = vld [vmem:[%s3 + $0x88] sm:$0xf]
    %v3297 = vld [vmem:[%s3 + $0x8c] sm:$0xf]
    %v3298 = vld [vmem:[%s3 + $0x90] sm:$0xf]
    %v3299 = vld [vmem:[%s3 + $0x94] sm:$0xf]
    %v3300 = vld [vmem:[%s3 + $0x98] sm:$0xf]
    %v3301 = vld [vmem:[%s3 + $0x9c] sm:$0xf]
    %v3302 = vld [vmem:[%s3 + $0xa0] sm:$0xf]
    %v3303 = vld [vmem:[%s3 + $0xa4] sm:$0xf]
    %v3304 = vld [vmem:[%s3 + $0xa8] sm:$0xf]
    %v3305 = vld [vmem:[%s3 + $0xac] sm:$0xf]
    %v3306 = vld [vmem:[%s3 + $0xb0] sm:$0xf]
    %v3307 = vld [vmem:[%s3 + $0xb4] sm:$0xf]
    %v3308 = vld [vmem:[%s3 + $0xb8] sm:$0xf]
    %v3309 = vld [vmem:[%s3 + $0xbc] sm:$0xf]
    %v3310 = vld [vmem:[%s3 + $0xc0] sm:$0xf]
    %v3311 = vld [vmem:[%s3 + $0xc4] sm:$0xf]
    %v3312 = vld [vmem:[%s3 + $0xc8] sm:$0xf]
    %v3313 = vld [vmem:[%s3 + $0xcc] sm:$0xf]
    %v3314 = vld [vmem:[%s3 + $0xd0] sm:$0xf]
    %v3315 = vld [vmem:[%s3 + $0xd4] sm:$0xf]
    %v3316 = vld [vmem:[%s3 + $0xd8] sm:$0xf]
    %v3317 = vld [vmem:[%s3 + $0xdc] sm:$0xf]
    %v3318 = vld [vmem:[%s3 + $0xe0] sm:$0xf]
    %v3319 = vld [vmem:[%s3 + $0xe4] sm:$0xf]
    %v3320 = vld [vmem:[%s3 + $0xe8] sm:$0xf]
    %v3321 = vld [vmem:[%s3 + $0xec] sm:$0xf]
    %v3322 = vld [vmem:[%s3 + $0xf0] sm:$0xf]
    %v3323 = vld [vmem:[%s3 + $0xf4] sm:$0xf]
    %v3324 = vld [vmem:[%s3 + $0xf8] sm:$0xf]
    %v3325 = vld [vmem:[%s3 + $0xfc] sm:$0xf]
    %v3326 = vld [vmem:[%s3 + $0x100] sm:$0xf]
    %v3327 = vld [vmem:[%s3 + $0x104] sm:$0xf]
    %v3328 = vld [vmem:[%s3 + $0x108] sm:$0xf]
    %v3329 = vld [vmem:[%s3 + $0x10c] sm:$0xf]
    %v3330 = vld [vmem:[%s3 + $0x110] sm:$0xf]
    %v3331 = vld [vmem:[%s3 + $0x114] sm:$0xf]
    %v3332 = vld [vmem:[%s3 + $0x118] sm:$0xf]
    %v3333 = vld [vmem:[%s3 + $0x11c] sm:$0xf]
    %v3334 = vld [vmem:[%s3 + $0x120] sm:$0xf]
    %v3335 = vld [vmem:[%s3 + $0x124] sm:$0xf]
    %v3336 = vld [vmem:[%s3 + $0x128] sm:$0xf]
    %v3337 = vld [vmem:[%s3 + $0x12c] sm:$0xf]
    %v3338 = vld [vmem:[%s3 + $0x130] sm:$0xf]
    %v3339 = vld [vmem:[%s3 + $0x134] sm:$0xf]
    %v3340 = vld [vmem:[%s3 + $0x138] sm:$0xf]
    %v3341 = vld [vmem:[%s3 + $0x13c] sm:$0xf]
    %v3342 = vld [vmem:[%s3 + $0x140] sm:$0xf]
    %v3343 = vld [vmem:[%s3 + $0x144] sm:$0xf]
    %v3344 = vld [vmem:[%s3 + $0x148] sm:$0xf]
    %v3345 = vld [vmem:[%s3 + $0x14c] sm:$0xf]
    %v3346 = vld [vmem:[%s3 + $0x150] sm:$0xf]
    %v3347 = vld [vmem:[%s3 + $0x154] sm:$0xf]
    %v3348 = vld [vmem:[%s3 + $0x158] sm:$0xf]
    %v3349 = vld [vmem:[%s3 + $0x15c] sm:$0xf]
    %v3350 = vld [vmem:[%s3 + $0x160] sm:$0xf]
    %v3351 = vld [vmem:[%s3 + $0x164] sm:$0xf]
    %v3352 = vld [vmem:[%s3 + $0x168] sm:$0xf]
    %v3353 = vld [vmem:[%s3 + $0x16c] sm:$0xf]
    %v3354 = vld [vmem:[%s3 + $0x170] sm:$0xf]
    %v3355 = vld [vmem:[%s3 + $0x174] sm:$0xf]
    %v3356 = vld [vmem:[%s3 + $0x178] sm:$0xf]
    %v3357 = vld [vmem:[%s3 + $0x17c] sm:$0xf]
    %v3358 = vld [vmem:[%s3 + $0x180] sm:$0xf]
    %v3359 = vld [vmem:[%s3 + $0x184] sm:$0xf]
    %v3360 = vld [vmem:[%s3 + $0x188] sm:$0xf]
    %v3361 = vld [vmem:[%s3 + $0x18c] sm:$0xf]
    %v3362 = vld [vmem:[%s3 + $0x190] sm:$0xf]
    %v3363 = vld [vmem:[%s3 + $0x194] sm:$0xf]
    %v3364 = vld [vmem:[%s3 + $0x198] sm:$0xf]
    %v3365 = vld [vmem:[%s3 + $0x19c] sm:$0xf]
    %v3366 = vld [vmem:[%s3 + $0x1a0] sm:$0xf]
    %v3367 = vld [vmem:[%s3 + $0x1a4] sm:$0xf]
    %v3368 = vld [vmem:[%s3 + $0x1a8] sm:$0xf]
    %v3369 = vld [vmem:[%s3 + $0x1ac] sm:$0xf]
    %v3370 = vld [vmem:[%s3 + $0x1b0] sm:$0xf]
    %v3371 = vld [vmem:[%s3 + $0x1b4] sm:$0xf]
    %v3372 = vld [vmem:[%s3 + $0x1b8] sm:$0xf]
    %v3373 = vld [vmem:[%s3 + $0x1bc] sm:$0xf]
    %v3374 = vld [vmem:[%s3 + $0x1c0] sm:$0xf]
    %v3375 = vld [vmem:[%s3 + $0x1c4] sm:$0xf]
    %v3376 = vld [vmem:[%s3 + $0x1c8] sm:$0xf]
    %v3377 = vld [vmem:[%s3 + $0x1cc] sm:$0xf]
    %v3378 = vld [vmem:[%s3 + $0x1d0] sm:$0xf]
    %v3379 = vld [vmem:[%s3 + $0x1d4] sm:$0xf]
    %v3380 = vld [vmem:[%s3 + $0x1d8] sm:$0xf]
    %v3381 = vld [vmem:[%s3 + $0x1dc] sm:$0xf]
    %v3382 = vld [vmem:[%s3 + $0x1e0] sm:$0xf]
    %v3383 = vld [vmem:[%s3 + $0x1e4] sm:$0xf]
    %v3384 = vld [vmem:[%s3 + $0x1e8] sm:$0xf]
    %v3385 = vld [vmem:[%s3 + $0x1ec] sm:$0xf]
    %v3386 = vld [vmem:[%s3 + $0x1f0] sm:$0xf]
    %v3387 = vld [vmem:[%s3 + $0x1f4] sm:$0xf]
    %v3388 = vld [vmem:[%s3 + $0x1f8] sm:$0xf]
    %v3389 = vld [vmem:[%s3 + $0x1fc] sm:$0xf]
    %v3390 = vld [vmem:[#allocation8] sm:$0x1]
    %v3392 = vlaneseq
    %v3393 = vshrl.u32 %v3392, 7
    %v3394 = vsub.s32 0, %v3393
    %v3395 = vrot.slane %v3390, %v3394
    %v3525 = vunpack.c.l.b16 %v3262
    %v3526 = vunpack.c.l.b16 %v3263
    %v3527 = vunpack.c.l.b16 %v3264
    %v3528 = vunpack.c.l.b16 %v3265
    %v3529 = vunpack.c.l.b16 %v3266
    %v3530 = vunpack.c.l.b16 %v3267
    %v3531 = vunpack.c.l.b16 %v3268
    %v3532 = vunpack.c.l.b16 %v3269
    %v3533 = vunpack.c.l.b16 %v3270
    %v3534 = vunpack.c.l.b16 %v3271
    %v3535 = vunpack.c.l.b16 %v3272
    %v3536 = vunpack.c.l.b16 %v3273
    %v3537 = vunpack.c.l.b16 %v3274
    %v3538 = vunpack.c.l.b16 %v3275
    %v3539 = vunpack.c.l.b16 %v3276
    %v3540 = vunpack.c.l.b16 %v3277
    %v3541 = vunpack.c.l.b16 %v3278
    %v3542 = vunpack.c.l.b16 %v3279
    %v3543 = vunpack.c.l.b16 %v3280
    %v3544 = vunpack.c.l.b16 %v3281
    %v3545 = vunpack.c.l.b16 %v3282
    %v3546 = vunpack.c.l.b16 %v3283
    %v3547 = vunpack.c.l.b16 %v3284
    %v3548 = vunpack.c.l.b16 %v3285
    %v3549 = vunpack.c.l.b16 %v3286
    %v3550 = vunpack.c.l.b16 %v3287
    %v3551 = vunpack.c.l.b16 %v3288
    %v3552 = vunpack.c.l.b16 %v3289
    %v3553 = vunpack.c.l.b16 %v3290
    %v3554 = vunpack.c.l.b16 %v3291
    %v3555 = vunpack.c.l.b16 %v3292
    %v3556 = vunpack.c.l.b16 %v3293
    %v3557 = vunpack.c.l.b16 %v3294
    %v3558 = vunpack.c.l.b16 %v3295
    %v3559 = vunpack.c.l.b16 %v3296
    %v3560 = vunpack.c.l.b16 %v3297
    %v3561 = vunpack.c.l.b16 %v3298
    %v3562 = vunpack.c.l.b16 %v3299
    %v3563 = vunpack.c.l.b16 %v3300
    %v3564 = vunpack.c.l.b16 %v3301
    %v3565 = vunpack.c.l.b16 %v3302
    %v3566 = vunpack.c.l.b16 %v3303
    %v3567 = vunpack.c.l.b16 %v3304
    %v3568 = vunpack.c.l.b16 %v3305
    %v3569 = vunpack.c.l.b16 %v3306
    %v3570 = vunpack.c.l.b16 %v3307
    %v3571 = vunpack.c.l.b16 %v3308
    %v3572 = vunpack.c.l.b16 %v3309
    %v3573 = vunpack.c.l.b16 %v3310
    %v3574 = vunpack.c.l.b16 %v3311
    %v3575 = vunpack.c.l.b16 %v3312
    %v3576 = vunpack.c.l.b16 %v3313
    %v3577 = vunpack.c.l.b16 %v3314
    %v3578 = vunpack.c.l.b16 %v3315
    %v3579 = vunpack.c.l.b16 %v3316
    %v3580 = vunpack.c.l.b16 %v3317
    %v3581 = vunpack.c.l.b16 %v3318
    %v3582 = vunpack.c.l.b16 %v3319
    %v3583 = vunpack.c.l.b16 %v3320
    %v3584 = vunpack.c.l.b16 %v3321
    %v3585 = vunpack.c.l.b16 %v3322
    %v3586 = vunpack.c.l.b16 %v3323
    %v3587 = vunpack.c.l.b16 %v3324
    %v3588 = vunpack.c.l.b16 %v3325
    %v3589 = vunpack.c.l.b16 %v3326
    %v3590 = vunpack.c.l.b16 %v3327
    %v3591 = vunpack.c.l.b16 %v3328
    %v3592 = vunpack.c.l.b16 %v3329
    %v3593 = vunpack.c.l.b16 %v3330
    %v3594 = vunpack.c.l.b16 %v3331
    %v3595 = vunpack.c.l.b16 %v3332
    %v3596 = vunpack.c.l.b16 %v3333
    %v3597 = vunpack.c.l.b16 %v3334
    %v3598 = vunpack.c.l.b16 %v3335
    %v3599 = vunpack.c.l.b16 %v3336
    %v3600 = vunpack.c.l.b16 %v3337
    %v3601 = vunpack.c.l.b16 %v3338
    %v3602 = vunpack.c.l.b16 %v3339
    %v3603 = vunpack.c.l.b16 %v3340
    %v3604 = vunpack.c.l.b16 %v3341
    %v3605 = vunpack.c.l.b16 %v3342
    %v3606 = vunpack.c.l.b16 %v3343
    %v3607 = vunpack.c.l.b16 %v3344
    %v3608 = vunpack.c.l.b16 %v3345
    %v3609 = vunpack.c.l.b16 %v3346
    %v3610 = vunpack.c.l.b16 %v3347
    %v3611 = vunpack.c.l.b16 %v3348
    %v3612 = vunpack.c.l.b16 %v3349
    %v3613 = vunpack.c.l.b16 %v3350
    %v3614 = vunpack.c.l.b16 %v3351
    %v3615 = vunpack.c.l.b16 %v3352
    %v3616 = vunpack.c.l.b16 %v3353
    %v3617 = vunpack.c.l.b16 %v3354
    %v3618 = vunpack.c.l.b16 %v3355
    %v3619 = vunpack.c.l.b16 %v3356
    %v3620 = vunpack.c.l.b16 %v3357
    %v3621 = vunpack.c.l.b16 %v3358
    %v3622 = vunpack.c.l.b16 %v3359
    %v3623 = vunpack.c.l.b16 %v3360
    %v3624 = vunpack.c.l.b16 %v3361
    %v3625 = vunpack.c.l.b16 %v3362
    %v3626 = vunpack.c.l.b16 %v3363
    %v3627 = vunpack.c.l.b16 %v3364
    %v3628 = vunpack.c.l.b16 %v3365
    %v3629 = vunpack.c.l.b16 %v3366
    %v3630 = vunpack.c.l.b16 %v3367
    %v3631 = vunpack.c.l.b16 %v3368
    %v3632 = vunpack.c.l.b16 %v3369
    %v3633 = vunpack.c.l.b16 %v3370
    %v3634 = vunpack.c.l.b16 %v3371
    %v3635 = vunpack.c.l.b16 %v3372
    %v3636 = vunpack.c.l.b16 %v3373
    %v3637 = vunpack.c.l.b16 %v3374
    %v3638 = vunpack.c.l.b16 %v3375
    %v3639 = vunpack.c.l.b16 %v3376
    %v3640 = vunpack.c.l.b16 %v3377
    %v3641 = vunpack.c.l.b16 %v3378
    %v3642 = vunpack.c.l.b16 %v3379
    %v3643 = vunpack.c.l.b16 %v3380
    %v3644 = vunpack.c.l.b16 %v3381
    %v3645 = vunpack.c.l.b16 %v3382
    %v3646 = vunpack.c.l.b16 %v3383
    %v3647 = vunpack.c.l.b16 %v3384
    %v3648 = vunpack.c.l.b16 %v3385
    %v3649 = vunpack.c.l.b16 %v3386
    %v3650 = vunpack.c.l.b16 %v3387
    %v3651 = vunpack.c.l.b16 %v3388
    %v3652 = vunpack.c.l.b16 %v3389
    %v3653 = vpack.c.b16 %v3526, %v3525
    %v3654 = vpack.c.b16 %v3528, %v3527
    %v3655 = vpack.c.b16 %v3530, %v3529
    %v3656 = vpack.c.b16 %v3532, %v3531
    %v3657 = vpack.c.b16 %v3534, %v3533
    %v3658 = vpack.c.b16 %v3536, %v3535
    %v3659 = vpack.c.b16 %v3538, %v3537
    %v3660 = vpack.c.b16 %v3540, %v3539
    %v3661 = vpack.c.b16 %v3542, %v3541
    %v3662 = vpack.c.b16 %v3544, %v3543
    %v3663 = vpack.c.b16 %v3546, %v3545
    %v3664 = vpack.c.b16 %v3548, %v3547
    %v3665 = vpack.c.b16 %v3550, %v3549
    %v3666 = vpack.c.b16 %v3552, %v3551
    %v3667 = vpack.c.b16 %v3554, %v3553
    %v3668 = vpack.c.b16 %v3556, %v3555
    %v3669 = vpack.c.b16 %v3558, %v3557
    %v3670 = vpack.c.b16 %v3560, %v3559
    %v3671 = vpack.c.b16 %v3562, %v3561
    %v3672 = vpack.c.b16 %v3564, %v3563
    %v3673 = vpack.c.b16 %v3566, %v3565
    %v3674 = vpack.c.b16 %v3568, %v3567
    %v3675 = vpack.c.b16 %v3570, %v3569
    %v3676 = vpack.c.b16 %v3572, %v3571
    %v3677 = vpack.c.b16 %v3574, %v3573
    %v3678 = vpack.c.b16 %v3576, %v3575
    %v3679 = vpack.c.b16 %v3578, %v3577
    %v3680 = vpack.c.b16 %v3580, %v3579
    %v3681 = vpack.c.b16 %v3582, %v3581
    %v3682 = vpack.c.b16 %v3584, %v3583
    %v3683 = vpack.c.b16 %v3586, %v3585
    %v3684 = vpack.c.b16 %v3588, %v3587
    %v3685 = vpack.c.b16 %v3590, %v3589
    %v3686 = vpack.c.b16 %v3592, %v3591
    %v3687 = vpack.c.b16 %v3594, %v3593
    %v3688 = vpack.c.b16 %v3596, %v3595
    %v3689 = vpack.c.b16 %v3598, %v3597
    %v3690 = vpack.c.b16 %v3600, %v3599
    %v3691 = vpack.c.b16 %v3602, %v3601
    %v3692 = vpack.c.b16 %v3604, %v3603
    %v3693 = vpack.c.b16 %v3606, %v3605
    %v3694 = vpack.c.b16 %v3608, %v3607
    %v3695 = vpack.c.b16 %v3610, %v3609
    %v3696 = vpack.c.b16 %v3612, %v3611
    %v3697 = vpack.c.b16 %v3614, %v3613
    %v3698 = vpack.c.b16 %v3616, %v3615
    %v3699 = vpack.c.b16 %v3618, %v3617
    %v3700 = vpack.c.b16 %v3620, %v3619
    %v3701 = vpack.c.b16 %v3622, %v3621
    %v3702 = vpack.c.b16 %v3624, %v3623
    %v3703 = vpack.c.b16 %v3626, %v3625
    %v3704 = vpack.c.b16 %v3628, %v3627
    %v3705 = vpack.c.b16 %v3630, %v3629
    %v3706 = vpack.c.b16 %v3632, %v3631
    %v3707 = vpack.c.b16 %v3634, %v3633
    %v3708 = vpack.c.b16 %v3636, %v3635
    %v3709 = vpack.c.b16 %v3638, %v3637
    %v3710 = vpack.c.b16 %v3640, %v3639
    %v3711 = vpack.c.b16 %v3642, %v3641
    %v3712 = vpack.c.b16 %v3644, %v3643
    %v3713 = vpack.c.b16 %v3646, %v3645
    %v3714 = vpack.c.b16 %v3648, %v3647
    %v3715 = vpack.c.b16 %v3650, %v3649
    %v3716 = vpack.c.b16 %v3652, %v3651
    %3781 = vmatprep.subr.bf16.mxu0 0
    %3782 = vmatpush1.bf16.msra.mxu0 %v3653
    %3783 = vmatprep.subr.bf16.mxu0 0
    %3784 = vmatpush1.bf16.msra.mxu0 %v3654
    %3785 = vmatprep.subr.bf16.mxu0 0
    %3786 = vmatpush1.bf16.msra.mxu0 %v3655
    %3787 = vmatprep.subr.bf16.mxu0 0
    %3788 = vmatpush1.bf16.msra.mxu0 %v3656
    %3789 = vmatprep.subr.bf16.mxu0 0
    %3790 = vmatpush1.bf16.msra.mxu0 %v3657
    %3791 = vmatprep.subr.bf16.mxu0 0
    %3792 = vmatpush1.bf16.msra.mxu0 %v3658
    %3793 = vmatprep.subr.bf16.mxu0 0
    %3794 = vmatpush1.bf16.msra.mxu0 %v3659
    %3795 = vmatprep.subr.bf16.mxu0 0
    %3796 = vmatpush1.bf16.msra.mxu0 %v3660
    %3797 = vmatprep.subr.bf16.mxu0 0
    %3798 = vmatpush1.bf16.msra.mxu0 %v3661
    %3799 = vmatprep.subr.bf16.mxu0 0
    %3800 = vmatpush1.bf16.msra.mxu0 %v3662
    %3801 = vmatprep.subr.bf16.mxu0 0
    %3802 = vmatpush1.bf16.msra.mxu0 %v3663
    %3803 = vmatprep.subr.bf16.mxu0 0
    %3804 = vmatpush1.bf16.msra.mxu0 %v3664
    %3805 = vmatprep.subr.bf16.mxu0 0
    %3806 = vmatpush1.bf16.msra.mxu0 %v3665
    %3807 = vmatprep.subr.bf16.mxu0 0
    %3808 = vmatpush1.bf16.msra.mxu0 %v3666
    %3809 = vmatprep.subr.bf16.mxu0 0
    %3810 = vmatpush1.bf16.msra.mxu0 %v3667
    %3811 = vmatprep.subr.bf16.mxu0 0
    %3812 = vmatpush1.bf16.msra.mxu0 %v3668
    %3813 = vmatprep.mubr.bf16.mxu0 %v3255
    %3814 = vmatmul.mubr.bf16.gmra.mrb[0].mxu0 %v3254
    %v3815 = vpop.f32.mrb[0].mxu0
    %v3816 = vadd.f32 %v3395, %v3815
    %v3817 = vpop.f32.mrb[0].mxu0
    %v3818 = vpop.f32.mrb[0].mxu0
    %v3819 = vpop.f32.mrb[0].mxu0
    %3820 = vdwg.mxu0
    %3821 = vmatprep.subr.bf16.mxu0 0
    %3822 = vmatpush1.bf16.msra.mxu0 %v3669
    %3823 = vmatprep.subr.bf16.mxu0 0
    %3824 = vmatpush1.bf16.msra.mxu0 %v3670
    %3825 = vmatprep.subr.bf16.mxu0 0
    %3826 = vmatpush1.bf16.msra.mxu0 %v3671
    %3827 = vmatprep.subr.bf16.mxu0 0
    %3828 = vmatpush1.bf16.msra.mxu0 %v3672
    %3829 = vmatprep.subr.bf16.mxu0 0
    %3830 = vmatpush1.bf16.msra.mxu0 %v3673
    %3831 = vmatprep.subr.bf16.mxu0 0
    %3832 = vmatpush1.bf16.msra.mxu0 %v3674
    %3833 = vmatprep.subr.bf16.mxu0 0
    %3834 = vmatpush1.bf16.msra.mxu0 %v3675
    %3835 = vmatprep.subr.bf16.mxu0 0
    %3836 = vmatpush1.bf16.msra.mxu0 %v3676
    %3837 = vmatprep.subr.bf16.mxu0 0
    %3838 = vmatpush1.bf16.msra.mxu0 %v3677
    %3839 = vmatprep.subr.bf16.mxu0 0
    %3840 = vmatpush1.bf16.msra.mxu0 %v3678
    %3841 = vmatprep.subr.bf16.mxu0 0
    %3842 = vmatpush1.bf16.msra.mxu0 %v3679
    %3843 = vmatprep.subr.bf16.mxu0 0
    %3844 = vmatpush1.bf16.msra.mxu0 %v3680
    %3845 = vmatprep.subr.bf16.mxu0 0
    %3846 = vmatpush1.bf16.msra.mxu0 %v3681
    %3847 = vmatprep.subr.bf16.mxu0 0
    %3848 = vmatpush1.bf16.msra.mxu0 %v3682
    %3849 = vmatprep.subr.bf16.mxu0 0
    %3850 = vmatpush1.bf16.msra.mxu0 %v3683
    %3851 = vmatprep.subr.bf16.mxu0 0
    %3852 = vmatpush1.bf16.msra.mxu0 %v3684
    %3853 = vmatprep.mubr.bf16.mxu0 %v3257
    %3854 = vmatmul.mubr.bf16.gmra.mrb[0].mxu0 %v3256
    %v3855 = vpop.f32.mrb[0].mxu0
    %v3856 = vadd.f32 %v3816, %v3855
    %v3857 = vpop.f32.mrb[0].mxu0
    %v3858 = vpop.f32.mrb[0].mxu0
    %v3859 = vpop.f32.mrb[0].mxu0
    %3860 = vdwg.mxu0
    %3861 = vmatprep.subr.bf16.mxu0 0
    %3862 = vmatpush1.bf16.msra.mxu0 %v3685
    %3863 = vmatprep.subr.bf16.mxu0 0
    %3864 = vmatpush1.bf16.msra.mxu0 %v3686
    %3865 = vmatprep.subr.bf16.mxu0 0
    %3866 = vmatpush1.bf16.msra.mxu0 %v3687
    %3867 = vmatprep.subr.bf16.mxu0 0
    %3868 = vmatpush1.bf16.msra.mxu0 %v3688
    %3869 = vmatprep.subr.bf16.mxu0 0
    %3870 = vmatpush1.bf16.msra.mxu0 %v3689
    %3871 = vmatprep.subr.bf16.mxu0 0
    %3872 = vmatpush1.bf16.msra.mxu0 %v3690
    %3873 = vmatprep.subr.bf16.mxu0 0
    %3874 = vmatpush1.bf16.msra.mxu0 %v3691
    %3875 = vmatprep.subr.bf16.mxu0 0
    %3876 = vmatpush1.bf16.msra.mxu0 %v3692
    %3877 = vmatprep.subr.bf16.mxu0 0
    %3878 = vmatpush1.bf16.msra.mxu0 %v3693
    %3879 = vmatprep.subr.bf16.mxu0 0
    %3880 = vmatpush1.bf16.msra.mxu0 %v3694
    %3881 = vmatprep.subr.bf16.mxu0 0
    %3882 = vmatpush1.bf16.msra.mxu0 %v3695
    %3883 = vmatprep.subr.bf16.mxu0 0
    %3884 = vmatpush1.bf16.msra.mxu0 %v3696
    %3885 = vmatprep.subr.bf16.mxu0 0
    %3886 = vmatpush1.bf16.msra.mxu0 %v3697
    %3887 = vmatprep.subr.bf16.mxu0 0
    %3888 = vmatpush1.bf16.msra.mxu0 %v3698
    %3889 = vmatprep.subr.bf16.mxu0 0
    %3890 = vmatpush1.bf16.msra.mxu0 %v3699
    %3891 = vmatprep.subr.bf16.mxu0 0
    %3892 = vmatpush1.bf16.msra.mxu0 %v3700
    %3893 = vmatprep.mubr.bf16.mxu0 %v3259
    %3894 = vmatmul.mubr.bf16.gmra.mrb[0].mxu0 %v3258
    %v3895 = vpop.f32.mrb[0].mxu0
    %v3896 = vadd.f32 %v3856, %v3895
    %v3897 = vpop.f32.mrb[0].mxu0
    %v3898 = vpop.f32.mrb[0].mxu0
    %v3899 = vpop.f32.mrb[0].mxu0
    %3900 = vdwg.mxu0
    %3901 = vmatprep.subr.bf16.mxu0 0
    %3902 = vmatpush1.bf16.msra.mxu0 %v3701
    %3903 = vmatprep.subr.bf16.mxu0 0
    %3904 = vmatpush1.bf16.msra.mxu0 %v3702
    %3905 = vmatprep.subr.bf16.mxu0 0
    %3906 = vmatpush1.bf16.msra.mxu0 %v3703
    %3907 = vmatprep.subr.bf16.mxu0 0
    %3908 = vmatpush1.bf16.msra.mxu0 %v3704
    %3909 = vmatprep.subr.bf16.mxu0 0
    %3910 = vmatpush1.bf16.msra.mxu0 %v3705
    %3911 = vmatprep.subr.bf16.mxu0 0
    %3912 = vmatpush1.bf16.msra.mxu0 %v3706
    %3913 = vmatprep.subr.bf16.mxu0 0
    %3914 = vmatpush1.bf16.msra.mxu0 %v3707
    %3915 = vmatprep.subr.bf16.mxu0 0
    %3916 = vmatpush1.bf16.msra.mxu0 %v3708
    %3917 = vmatprep.subr.bf16.mxu0 0
    %3918 = vmatpush1.bf16.msra.mxu0 %v3709
    %3919 = vmatprep.subr.bf16.mxu0 0
    %3920 = vmatpush1.bf16.msra.mxu0 %v3710
    %3921 = vmatprep.subr.bf16.mxu0 0
    %3922 = vmatpush1.bf16.msra.mxu0 %v3711
    %3923 = vmatprep.subr.bf16.mxu0 0
    %3924 = vmatpush1.bf16.msra.mxu0 %v3712
    %3925 = vmatprep.subr.bf16.mxu0 0
    %3926 = vmatpush1.bf16.msra.mxu0 %v3713
    %3927 = vmatprep.subr.bf16.mxu0 0
    %3928 = vmatpush1.bf16.msra.mxu0 %v3714
    %3929 = vmatprep.subr.bf16.mxu0 0
    %3930 = vmatpush1.bf16.msra.mxu0 %v3715
    %3931 = vmatprep.subr.bf16.mxu0 0
    %3932 = vmatpush1.bf16.msra.mxu0 %v3716
    %3933 = vmatprep.mubr.bf16.mxu0 %v3261
    %3934 = vmatmul.mubr.bf16.gmra.mrb[0].mxu0 %v3260
    %v3935 = vpop.f32.mrb[0].mxu0
    %v3936 = vadd.f32 %v3896, %v3935
    %v3937 = vpop.f32.mrb[0].mxu0
    %v3938 = vpop.f32.mrb[0].mxu0
    %v3939 = vpop.f32.mrb[0].mxu0
    %3940 = vdwg.mxu0
    %v3941 = vmax.f32 %v3936, 0.0
    %v3942 = vpack.c.bf16 %v3941, %v3941
    %v3943 = vld [vmem:[#allocation10] sm:$0xf]
    %v3944 = vld [vmem:[#allocation10 + $0x4] sm:$0xf]
    %v3945 = vld [vmem:[#allocation10 + $0x8] sm:$0x3]
    %v3946 = vld [vmem:[#allocation11] sm:$0x1]
    %v3948 = vlaneseq
    %v3949 = vshrl.u32 %v3948, 7
    %v3950 = vsub.s32 0, %v3949
    %v3951 = vrot.slane %v3946, %v3950
    %v3956 = vunpack.c.l.b16 %v3943
    %v3957 = vunpack.c.l.b16 %v3944
    %v3958 = vunpack.c.l.b16 %v3945
    %v3959 = vpack.c.b16 %v3957, %v3956
    %v3960 = vpack.c.b16 %v3958, %v3958
    %vm3962 = vcmask 162816
    %v3964 = vsel %vm3962, %v3942, 0
    %vm3966 = vcmask 1041408
    %v3968 = vsel %vm3966, %v3960, 0
    %3970 = vmatprep.subr.bf16.mxu0 0
    %3971 = vmatpush1.bf16.msra.mxu0 %v3959
    %3972 = vmatprep.subr.bf16.mxu0 0
    %3973 = vmatpush1.bf16.msra.mxu0 %v3968
    %3974 = vmatprep.subr.bf16.mxu0 0
    %3975 = vmatpush1.bf16.msra.mxu0 0
    %3976 = vmatprep.subr.bf16.mxu0 0
    %3977 = vmatpush1.bf16.msra.mxu0 0
    %3978 = vmatprep.subr.bf16.mxu0 0
    %3979 = vmatpush1.bf16.msra.mxu0 0
    %3980 = vmatprep.subr.bf16.mxu0 0
    %3981 = vmatpush1.bf16.msra.mxu0 0
    %3982 = vmatprep.subr.bf16.mxu0 0
    %3983 = vmatpush1.bf16.msra.mxu0 0
    %3984 = vmatprep.subr.bf16.mxu0 0
    %3985 = vmatpush1.bf16.msra.mxu0 0
    %3986 = vmatprep.subr.bf16.mxu0 0
    %3987 = vmatpush1.bf16.msra.mxu0 0
    %3988 = vmatprep.subr.bf16.mxu0 0
    %3989 = vmatpush1.bf16.msra.mxu0 0
    %3990 = vmatprep.subr.bf16.mxu0 0
    %3991 = vmatpush1.bf16.msra.mxu0 0
    %3992 = vmatprep.subr.bf16.mxu0 0
    %3993 = vmatpush1.bf16.msra.mxu0 0
    %3994 = vmatprep.subr.bf16.mxu0 0
    %3995 = vmatpush1.bf16.msra.mxu0 0
    %3996 = vmatprep.subr.bf16.mxu0 0
    %3997 = vmatpush1.bf16.msra.mxu0 0
    %3998 = vmatprep.subr.bf16.mxu0 0
    %3999 = vmatpush1.bf16.msra.mxu0 0
    %4000 = vmatprep.subr.bf16.mxu0 0
    %4001 = vmatpush1.bf16.msra.mxu0 0
    %4002 = vmatprep.mubr.bf16.mxu0 0
    %4003 = vmatmul.mubr.bf16.gmra.mrb[0].mxu0 %v3964
    %v4004 = vpop.f32.mrb[0].mxu0
    %v4005 = vadd.f32 %v3951, %v4004
    %v4006 = vpop.f32.mrb[0].mxu0
    %v4007 = vpop.f32.mrb[0].mxu0
    %v4008 = vpop.f32.mrb[0].mxu0
    %4009 = vdwg.mxu0
    %v4010 = vmax.f32 %v4005, 0.0
    %v4011 = vpack.c.bf16 %v4010, %v4010
    %v4012 = vld [vmem:[#allocation13] sm:$0xf]
    %v4013 = vld [vmem:[#allocation13 + $0x4] sm:$0xf]
    %v4014 = vld [vmem:[#allocation13 + $0x8] sm:$0x3]
    %v4015 = vld [vmem:[#allocation14] sm:$0x1]
    %v4017 = vlaneseq
    %v4018 = vshrl.u32 %v4017, 7
    %v4019 = vsub.s32 0, %v4018
    %v4020 = vrot.slane %v4015, %v4019
    %v4025 = vunpack.c.l.b16 %v4012
    %v4026 = vunpack.c.l.b16 %v4013
    %v4027 = vunpack.c.l.b16 %v4014
    %v4028 = vpack.c.b16 %v4026, %v4025
    %v4029 = vpack.c.b16 %v4027, %v4027
    %v4032 = vsel %vm3962, %v4011, 0
    %v4035 = vsel %vm3966, %v4029, 0
    %4037 = vmatprep.subr.bf16.mxu0 0
    %4038 = vmatpush1.bf16.msra.mxu0 %v4028
    %4039 = vmatprep.subr.bf16.mxu0 0
    %4040 = vmatpush1.bf16.msra.mxu0 %v4035
    %4041 = vmatprep.subr.bf16.mxu0 0
    %4042 = vmatpush1.bf16.msra.mxu0 0
    %4043 = vmatprep.subr.bf16.mxu0 0
    %4044 = vmatpush1.bf16.msra.mxu0 0
    %4045 = vmatprep.subr.bf16.mxu0 0
    %4046 = vmatpush1.bf16.msra.mxu0 0
    %4047 = vmatprep.subr.bf16.mxu0 0
    %4048 = vmatpush1.bf16.msra.mxu0 0
    %4049 = vmatprep.subr.bf16.mxu0 0
    %4050 = vmatpush1.bf16.msra.mxu0 0
    %4051 = vmatprep.subr.bf16.mxu0 0
    %4052 = vmatpush1.bf16.msra.mxu0 0
    %4053 = vmatprep.subr.bf16.mxu0 0
    %4054 = vmatpush1.bf16.msra.mxu0 0
    %4055 = vmatprep.subr.bf16.mxu0 0
    %4056 = vmatpush1.bf16.msra.mxu0 0
    %4057 = vmatprep.subr.bf16.mxu0 0
    %4058 = vmatpush1.bf16.msra.mxu0 0
    %4059 = vmatprep.subr.bf16.mxu0 0
    %4060 = vmatpush1.bf16.msra.mxu0 0
    %4061 = vmatprep.subr.bf16.mxu0 0
    %4062 = vmatpush1.bf16.msra.mxu0 0
    %4063 = vmatprep.subr.bf16.mxu0 0
    %4064 = vmatpush1.bf16.msra.mxu0 0
    %4065 = vmatprep.subr.bf16.mxu0 0
    %4066 = vmatpush1.bf16.msra.mxu0 0
    %4067 = vmatprep.subr.bf16.mxu0 0
    %4068 = vmatpush1.bf16.msra.mxu0 0
    %4069 = vmatprep.mubr.bf16.mxu0 0
    %4070 = vmatmul.mubr.bf16.gmra.mrb[0].mxu0 %v4032
    %v4071 = vpop.f32.mrb[0].mxu0
    %v4072 = vadd.f32 %v4020, %v4071
    %v4073 = vpop.f32.mrb[0].mxu0
    %v4074 = vpop.f32.mrb[0].mxu0
    %v4075 = vpop.f32.mrb[0].mxu0
    %4076 = vdwg.mxu0
    %v4077 = vmax.f32 %v4072, 0.0
    %v4078 = vpack.c.bf16 %v4077, %v4077
    %v4079 = vld [vmem:[#allocation16] sm:$0xf]
    %v4080 = vld [vmem:[#allocation16 + $0x4] sm:$0xf]
    %v4081 = vld [vmem:[#allocation16 + $0x8] sm:$0x3]
    %v4082 = vld [vmem:[#allocation17] sm:$0x1]
    %v4084 = vlaneseq
    %v4085 = vshrl.u32 %v4084, 7
    %v4086 = vsub.s32 0, %v4085
    %v4087 = vrot.slane %v4082, %v4086
    %v4092 = vunpack.c.l.b16 %v4079
    %v4093 = vunpack.c.l.b16 %v4080
    %v4094 = vunpack.c.l.b16 %v4081
    %v4095 = vpack.c.b16 %v4093, %v4092
    %v4096 = vpack.c.b16 %v4094, %v4094
    %v4099 = vsel %vm3962, %v4078, 0
    %v4102 = vsel %vm3966, %v4096, 0
    %4104 = vmatprep.subr.bf16.mxu0 0
    %4105 = vmatpush1.bf16.msra.mxu0 %v4095
    %4106 = vmatprep.subr.bf16.mxu0 0
    %4107 = vmatpush1.bf16.msra.mxu0 %v4102
    %4108 = vmatprep.subr.bf16.mxu0 0
    %4109 = vmatpush1.bf16.msra.mxu0 0
    %4110 = vmatprep.subr.bf16.mxu0 0
    %4111 = vmatpush1.bf16.msra.mxu0 0
    %4112 = vmatprep.subr.bf16.mxu0 0
    %4113 = vmatpush1.bf16.msra.mxu0 0
    %4114 = vmatprep.subr.bf16.mxu0 0
    %4115 = vmatpush1.bf16.msra.mxu0 0
    %4116 = vmatprep.subr.bf16.mxu0 0
    %4117 = vmatpush1.bf16.msra.mxu0 0
    %4118 = vmatprep.subr.bf16.mxu0 0
    %4119 = vmatpush1.bf16.msra.mxu0 0
    %4120 = vmatprep.subr.bf16.mxu0 0
    %4121 = vmatpush1.bf16.msra.mxu0 0
    %4122 = vmatprep.subr.bf16.mxu0 0
    %4123 = vmatpush1.bf16.msra.mxu0 0
    %4124 = vmatprep.subr.bf16.mxu0 0
    %4125 = vmatpush1.bf16.msra.mxu0 0
    %4126 = vmatprep.subr.bf16.mxu0 0
    %4127 = vmatpush1.bf16.msra.mxu0 0
    %4128 = vmatprep.subr.bf16.mxu0 0
    %4129 = vmatpush1.bf16.msra.mxu0 0
    %4130 = vmatprep.subr.bf16.mxu0 0
    %4131 = vmatpush1.bf16.msra.mxu0 0
    %4132 = vmatprep.subr.bf16.mxu0 0
    %4133 = vmatpush1.bf16.msra.mxu0 0
    %4134 = vmatprep.subr.bf16.mxu0 0
    %4135 = vmatpush1.bf16.msra.mxu0 0
    %4136 = vmatprep.mubr.bf16.mxu0 0
    %4137 = vmatmul.mubr.bf16.gmra.mrb[0].mxu0 %v4099
    %v4138 = vpop.f32.mrb[0].mxu0
    %v4139 = vadd.f32 %v4087, %v4138
    %v4140 = vpop.f32.mrb[0].mxu0
    %v4141 = vpop.f32.mrb[0].mxu0
    %v4142 = vpop.f32.mrb[0].mxu0
    %4143 = vdwg.mxu0
    %4144 = vst [vmem:[#allocation19] sm:$0xff] %v4139
    // Predicated region
    $region86: #{tpu_custom_call.1} parent=1 // pred_check
      _
    $region87: #{tpu_custom_call.1} parent=1 // pred_check_branch
      %4146 = sbr.rel (0) target = $region89
    $region88: #{tpu_custom_call.1} parent=1 // pred_region
      %s4148 = ssub.s32 128, 128
      %4149 = vsyncadd [#allocation4], %s4148
      %s4151 = sshll.u32 [#allocation19], 4
      %s4152 = int_to_ptr.vmem [resolvable:$true] %s4151
      %4154 = dma.vmem_to_hbm [thread:$0]  %s4152, 128, %s11, [#allocation4]
    $region89: #{tpu_custom_call.1} parent=1 // pred_fallthru
      _
    // Predicated region
    $region90: #{tpu_custom_call.1} parent=1 // pred_check
      _
    $region91: #{tpu_custom_call.1} parent=1 // pred_check_branch
      %4156 = sbr.rel (0) target = $region93
    $region92: #{tpu_custom_call.1} parent=1 // pred_region
      %4157 = dma.done [#allocation4], 128
    $region93: #{tpu_custom_call.1} parent=1 // pred_fallthru
      _
    %4158 = vsyncpa [#allocation3], 1
    %4159 = vsyncpa [#allocation6], 1
    %4160 = vsyncpa [#allocation9], 1
    %4161 = vsyncpa [#allocation12], 1
    %4162 = vsyncpa [#allocation15], 1
    %4163 = vsyncpa [#allocation18], 1
    %4164 = vsyncpa [#allocation4], 1

</llo_original>
